<compile_context>
chip_gen: v7x
topology: tpu7x:2x2x1
jax: 0.10.0
libtpu: 0.0.40
codegen_flags: <defaults>
</compile_context>

<pallas_src>
import functools

import numpy as np
import jax
import jax.numpy as jnp
from jax import lax
from jax.experimental import pallas as pl
from jax.experimental.pallas import tpu as pltpu


def _round_up(x, m):
    return (x + m - 1) // m * m


# ------------------------- fused Pallas kernel -------------------------

def _mnist_fused_kernel(x_ref, g1w_ref, b1_ref, s1_ref, g2w_ref, b2_ref,
                        s2_ref, fc1_ref, fb1_ref, fc2_ref, fb2_ref,
                        o_ref, *, num_groups, num_classes):
    f32 = jnp.float32

    def mm(a, b_ref):
        return jnp.dot(a, b_ref[...], preferred_element_type=f32)

    def pool2x2_relu(u):
        # u columns: [tap0 | tap1 | tap2 | tap3], each block identically laid
        # out as (channel, pooled_position).
        q = u.shape[1] // 4
        m = jnp.maximum(jnp.maximum(u[:, 0 * q:1 * q], u[:, 1 * q:2 * q]),
                        jnp.maximum(u[:, 2 * q:3 * q], u[:, 3 * q:4 * q]))
        return jnp.maximum(m, 0.0)

    x = x_ref[...]                                       # (NB, 144) f32
    y1 = mm(x, g1w_ref) + b1_ref[...]                    # conv1              -> (NB, 10*121)
    p1 = pool2x2_relu(mm(y1, s1_ref))                    # maxpool2x2 + ReLU  -> (NB, 10*25)
    y2 = mm(p1, g2w_ref) + b2_ref[...]                   # conv2 (+eval Dropout2d) -> (NB, 20*16)
    p2 = pool2x2_relu(mm(y2, s2_ref))                    # maxpool2x2 + ReLU  -> (NB, 20*4)
    # p2 row n, col c*4 + (h*2+w): exactly the per-sample row-major x.view(-1,20) order.
    h = jnp.maximum(mm(p2, fc1_ref) + fb1_ref[...], 0.0)  # fc1 + ReLU (+eval dropout) -> (NB, 4*50)
    z = mm(h, fc2_ref) + fb2_ref[...]                    # fc2                -> (NB, 4*10)

    # log_softmax over each of the num_groups blocks of num_classes logits.
    outs = []
    for g in range(num_groups):
        zc = z[:, g * num_classes:(g + 1) * num_classes]
        zm = jnp.max(zc, axis=-1, keepdims=True)
        zs = zc - zm
        lse = jnp.log(jnp.sum(jnp.exp(zs), axis=-1, keepdims=True))
        outs.append(zs - lse)
    o_ref[...] = jnp.concatenate(outs, axis=1).astype(o_ref.dtype)


# ------------------------- one-time parameter / constant prep -------------------------

def prepare_inputs(params, height=12, width=12):
    """Fold conv weights into batch-independent im2col matrices; build 0/1
    pooling-tap selection and block-diagonal fc matrices (numpy, once)."""
    w1, b1, w2, b2, fw1, fb1, fw2, fb2 = [np.asarray(p, np.float32) for p in params]
    H, W = height, width
    OH1, OW1 = H - 1, W - 1              # conv1 (k=2, VALID)
    PH1, PW1 = OH1 // 2, OW1 // 2        # maxpool 2x2 stride 2 (floor)
    OH2, OW2 = PH1 - 1, PW1 - 1          # conv2
    PH2, PW2 = OH2 // 2, OW2 // 2        # maxpool 2x2
    C1, C2 = w1.shape[0], w2.shape[0]    # 10, 20
    S0, A1, P1 = H * W, OH1 * OW1, PH1 * PW1
    A2, P2 = OH2 * OW2, PH2 * PW2
    F = C2 * P2                          # flattened features per sample (80)
    NFLAT = fw1.shape[1]                 # 20
    H1, NC = fw1.shape[0], fw2.shape[0]  # 50, 10
    assert F % NFLAT == 0, "x.view(-1,20) must tile the per-sample feature map"
    NGRP = F // NFLAT                    # flatten rows per sample (4)

    # conv1 folded into a single (S0, C1*A1) matrix.
    g1w = np.zeros((S0, C1 * A1), np.float32)
    for o in range(C1):
        for oh in range(OH1):
            for ow in range(OW1):
                col = o * A1 + oh * OW1 + ow
                for i in range(2):
                    for j in range(2):
                        g1w[(oh + i) * W + (ow + j), col] += w1[o, 0, i, j]
    b1row = np.repeat(b1, A1)[None, :]

    # pool1 tap selection (0/1): col = k*C1*P1 + o*P1 + ph*PW1 + pw, k = i*2+j.
    s1 = np.zeros((C1 * A1, 4 * C1 * P1), np.float32)
    for o in range(C1):
        for ph in range(PH1):
            for pw in range(PW1):
                for i in range(2):
                    for j in range(2):
                        k = i * 2 + j
                        s1[o * A1 + (2 * ph + i) * OW1 + (2 * pw + j),
                           k * C1 * P1 + o * P1 + ph * PW1 + pw] = 1.0

    # conv2 folded into a single (C1*P1, C2*A2) matrix.
    g2w = np.zeros((C1 * P1, C2 * A2), np.float32)
    for o in range(C2):
        for oh in range(OH2):
            for ow in range(OW2):
                col = o * A2 + oh * OW2 + ow
                for c in range(C1):
                    for i in range(2):
                        for j in range(2):
                            g2w[c * P1 + (oh + i) * PW1 + (ow + j), col] += w2[o, c, i, j]
    b2row = np.repeat(b2, A2)[None, :]

    # pool2 tap selection (0/1): col = k*C2*P2 + o*P2 + ph*PW2 + pw.
    s2 = np.zeros((C2 * A2, 4 * C2 * P2), np.float32)
    for o in range(C2):
        for ph in range(PH2):
            for pw in range(PW2):
                for i in range(2):
                    for j in range(2):
                        k = i * 2 + j
                        s2[o * A2 + (2 * ph + i) * OW2 + (2 * pw + j),
                           k * C2 * P2 + o * P2 + ph * PW2 + pw] = 1.0

    # fc1 / fc2 block-diagonal over the NGRP flatten groups: x.view(-1,20) row
    # n*NGRP + g takes per-sample feature columns [g*NFLAT, (g+1)*NFLAT).
    fc1b = np.zeros((F, NGRP * H1), np.float32)
    fc2b = np.zeros((NGRP * H1, NGRP * NC), np.float32)
    for g in range(NGRP):
        fc1b[g * NFLAT:(g + 1) * NFLAT, g * H1:(g + 1) * H1] = fw1.T
        fc2b[g * H1:(g + 1) * H1, g * NC:(g + 1) * NC] = fw2.T
    fb1row = np.tile(fb1, NGRP)[None, :]
    fb2row = np.tile(fb2, NGRP)[None, :]

    prep = dict(
        g1w=jnp.asarray(g1w), b1=jnp.asarray(b1row),
        s1=jnp.asarray(s1), g2w=jnp.asarray(g2w), b2=jnp.asarray(b2row),
        s2=jnp.asarray(s2), fc1=jnp.asarray(fc1b), fb1=jnp.asarray(fb1row),
        fc2=jnp.asarray(fc2b), fb2=jnp.asarray(fb2row),
    )
    meta = dict(groups=NGRP, classes=NC)
    return prep, meta


# ------------------------- forward (single batch-tiled pallas_call) -------------------------

def mnist_forward(x_nchw, prep, *, num_groups, num_classes, block_n=128):
    N = x_nchw.shape[0]
    S0 = prep["g1w"].shape[0]
    x2 = x_nchw.astype(jnp.float32).reshape(N, S0)       # (N, 144), batch on rows

    NB = min(block_n, _round_up(N, 8))                   # batch tile (sublane multiple)
    Np = _round_up(N, NB)
    if Np != N:
        x2 = jnp.pad(x2, ((0, Np - N), (0, 0)))

    names = ("g1w", "b1", "s1", "g2w", "b2", "s2", "fc1", "fb1", "fc2", "fb2")
    consts = [prep[k] for k in names]
    zout = num_groups * num_classes

    kernel = functools.partial(_mnist_fused_kernel,
                               num_groups=num_groups, num_classes=num_classes)
    out2d = pl.pallas_call(
        kernel,
        out_shape=jax.ShapeDtypeStruct((Np, zout), jnp.float32),
        grid=(Np // NB,),
        in_specs=[pl.BlockSpec((NB, S0), lambda i: (i, 0))]
                 + [pl.BlockSpec(c.shape, lambda i: (0, 0)) for c in consts],
        out_specs=pl.BlockSpec((NB, zout), lambda i: (i, 0)),
        compiler_params=pltpu.CompilerParams(
            dimension_semantics=("parallel",)),
    )(x2, *consts)

    # PyTorch x.view(-1,20) row order is n*num_groups + g; per-sample columns are
    # already ordered (g, class), so a free wrapper-side reshape finishes it.
    return out2d[:N].reshape(N * num_groups, num_classes)


# ------------------------- params & pure-JAX reference -------------------------

def init_params(key):
    ks = jax.random.split(key, 8)

    def u(k, shape, fan_in):
        bound = 1.0 / jnp.sqrt(jnp.float32(fan_in))
        return jax.random.uniform(k, shape, jnp.float32, -bound, bound)

    w1 = u(ks[0], (10, 1, 2, 2), 1 * 2 * 2)     # conv1.weight
    b1 = u(ks[1], (10,), 1 * 2 * 2)             # conv1.bias
    w2 = u(ks[2], (20, 10, 2, 2), 10 * 2 * 2)   # conv2.weight
    b2 = u(ks[3], (20,), 10 * 2 * 2)            # conv2.bias
    fw1 = u(ks[4], (50, 20), 20)                # fc1.weight
    fb1 = u(ks[5], (50,), 20)                   # fc1.bias
    fw2 = u(ks[6], (10, 50), 50)                # fc2.weight
    fb2 = u(ks[7], (10,), 50)                   # fc2.bias
    return (w1, b1, w2, b2, fw1, fb1, fw2, fb2)


def reference_forward(x, params):
    """Pure-JAX/XLA reference reproducing the PyTorch forward (eval mode)."""
    w1, b1, w2, b2, fw1, fb1, fw2, fb2 = params
    dn = ('NCHW', 'OIHW', 'NCHW')

    def conv(x, w, b):
        y = lax.conv_general_dilated(x, w, (1, 1), 'VALID', dimension_numbers=dn)
        return y + b.reshape(1, -1, 1, 1)

    def pool(x):
        return lax.reduce_window(x, -jnp.inf, lax.max,
                                 (1, 1, 2, 2), (1, 1, 2, 2), 'VALID')

    y = jax.nn.relu(pool(conv(x, w1, b1)))
    y = jax.nn.relu(pool(conv(y, w2, b2)))
    y = y.reshape(-1, 20)
    y = jax.nn.relu(y @ fw1.T + fb1)
    y = y @ fw2.T + fb2
    return jax.nn.log_softmax(y, axis=-1)


# ------------------------- main -------------------------

if __name__ == "__main__":
    key = jax.random.PRNGKey(0)
    pkey, xkey = jax.random.split(key)
    params = init_params(pkey)

    # NCHW input (PyTorch convention): batch=2, 1 channel, 12x12 spatial.
    N, H, W = 2, 12, 12
    x = jax.random.normal(xkey, (N, 1, H, W), jnp.float32)

    prep, meta = prepare_inputs(params, H, W)            # constants, built once
    fwd = jax.jit(functools.partial(mnist_forward,
                                    num_groups=meta["groups"],
                                    num_classes=meta["classes"]))

    out = jax.block_until_ready(fwd(x, prep))
    ref = jax.block_until_ready(reference_forward(x, params))

    # (2, 20, 2, 2).view(-1, 20) -> 8 rows of 20 features -> (8, 10) log-probs
    assert out.shape == (N * meta["groups"], meta["classes"]), out.shape
    if not bool(jnp.allclose(out, ref, atol=2e-2, rtol=2e-2)):
        raise AssertionError("Pallas output does not match JAX reference")

    print("KERNEL_OK")
</pallas_src>

<mosaic_0001>
module attributes {stable_mosaic.version = 11 : i64} {
  func.func @_mnist_fused_kernel(%arg0: i32, %arg1: memref<8x144xf32, #tpu.memory_space<vmem>>, %arg2: memref<144x1210xf32, #tpu.memory_space<vmem>>, %arg3: memref<1x1210xf32, #tpu.memory_space<vmem>>, %arg4: memref<1210x1000xf32, #tpu.memory_space<vmem>>, %arg5: memref<250x320xf32, #tpu.memory_space<vmem>>, %arg6: memref<1x320xf32, #tpu.memory_space<vmem>>, %arg7: memref<320x320xf32, #tpu.memory_space<vmem>>, %arg8: memref<80x200xf32, #tpu.memory_space<vmem>>, %arg9: memref<1x200xf32, #tpu.memory_space<vmem>>, %arg10: memref<200x40xf32, #tpu.memory_space<vmem>>, %arg11: memref<1x40xf32, #tpu.memory_space<vmem>>, %arg12: memref<8x40xf32, #tpu.memory_space<vmem>>) attributes {dimension_semantics = [#tpu.dimension_semantics<parallel>], iteration_bounds = array<i64: 1>, scalar_prefetch = 0 : i64, scratch_operands = 0 : i64, tpu.core_type = #tpu.core_type<tc>, window_params = [{transform_indices = @transform_0, window_bounds = array<i64: 8, 144>}, {pipeline_mode = #tpu.pipeline_mode<synchronous>, transform_indices = @transform_1, window_bounds = array<i64: 144, 1210>}, {pipeline_mode = #tpu.pipeline_mode<synchronous>, transform_indices = @transform_2, window_bounds = array<i64: 1, 1210>}, {pipeline_mode = #tpu.pipeline_mode<synchronous>, transform_indices = @transform_3, window_bounds = array<i64: 1210, 1000>}, {pipeline_mode = #tpu.pipeline_mode<synchronous>, transform_indices = @transform_4, window_bounds = array<i64: 250, 320>}, {pipeline_mode = #tpu.pipeline_mode<synchronous>, transform_indices = @transform_5, window_bounds = array<i64: 1, 320>}, {pipeline_mode = #tpu.pipeline_mode<synchronous>, transform_indices = @transform_6, window_bounds = array<i64: 320, 320>}, {pipeline_mode = #tpu.pipeline_mode<synchronous>, transform_indices = @transform_7, window_bounds = array<i64: 80, 200>}, {pipeline_mode = #tpu.pipeline_mode<synchronous>, transform_indices = @transform_8, window_bounds = array<i64: 1, 200>}, {pipeline_mode = #tpu.pipeline_mode<synchronous>, transform_indices = @transform_9, window_bounds = array<i64: 200, 40>}, {pipeline_mode = #tpu.pipeline_mode<synchronous>, transform_indices = @transform_10, window_bounds = array<i64: 1, 40>}, {transform_indices = @transform_11, window_bounds = array<i64: 8, 40>}]} {
    %c0 = arith.constant 0 : index
    %c0_0 = arith.constant 0 : index
    %0 = vector.load %arg1[%c0, %c0_0] : memref<8x144xf32, #tpu.memory_space<vmem>>, vector<8x144xf32>
    %c0_1 = arith.constant 0 : index
    %c0_2 = arith.constant 0 : index
    %1 = vector.load %arg2[%c0_1, %c0_2] : memref<144x1210xf32, #tpu.memory_space<vmem>>, vector<144x1210xf32>
    %cst = arith.constant dense<0.000000e+00> : vector<8x1210xf32>
    %2 = tpu.matmul %0, %1, %cst {dimension_numbers = #tpu.dot_dimension_numbers<[1], [0], [0], [1], [0, 0, 1, 1], [], []>} : vector<8x144xf32>, vector<144x1210xf32>, vector<8x1210xf32> -> vector<8x1210xf32>
    %c0_3 = arith.constant 0 : index
    %c0_4 = arith.constant 0 : index
    %3 = vector.load %arg3[%c0_3, %c0_4] : memref<1x1210xf32, #tpu.memory_space<vmem>>, vector<1x1210xf32>
    %4 = vector.broadcast %3 : vector<1x1210xf32> to vector<8x1210xf32>
    %5 = arith.addf %2, %4 : vector<8x1210xf32>
    %c0_5 = arith.constant 0 : index
    %c0_6 = arith.constant 0 : index
    %6 = vector.load %arg4[%c0_5, %c0_6] : memref<1210x1000xf32, #tpu.memory_space<vmem>>, vector<1210x1000xf32>
    %cst_7 = arith.constant dense<0.000000e+00> : vector<8x1000xf32>
    %7 = tpu.matmul %5, %6, %cst_7 {dimension_numbers = #tpu.dot_dimension_numbers<[1], [0], [0], [1], [0, 0, 1, 1], [], []>} : vector<8x1210xf32>, vector<1210x1000xf32>, vector<8x1000xf32> -> vector<8x1000xf32>
    %8 = vector.extract_strided_slice %7 {offsets = [0, 0], sizes = [8, 250], strides = [1, 1]} : vector<8x1000xf32> to vector<8x250xf32>
    %9 = vector.extract_strided_slice %7 {offsets = [0, 250], sizes = [8, 250], strides = [1, 1]} : vector<8x1000xf32> to vector<8x250xf32>
    %10 = arith.maximumf %8, %9 : vector<8x250xf32>
    %11 = vector.extract_strided_slice %7 {offsets = [0, 500], sizes = [8, 250], strides = [1, 1]} : vector<8x1000xf32> to vector<8x250xf32>
    %12 = vector.extract_strided_slice %7 {offsets = [0, 750], sizes = [8, 250], strides = [1, 1]} : vector<8x1000xf32> to vector<8x250xf32>
    %13 = arith.maximumf %11, %12 : vector<8x250xf32>
    %14 = arith.maximumf %10, %13 : vector<8x250xf32>
    %cst_8 = arith.constant 0.000000e+00 : f32
    %15 = vector.broadcast %cst_8 : f32 to vector<8x250xf32>
    %16 = arith.maximumf %14, %15 : vector<8x250xf32>
    %c0_9 = arith.constant 0 : index
    %c0_10 = arith.constant 0 : index
    %17 = vector.load %arg5[%c0_9, %c0_10] : memref<250x320xf32, #tpu.memory_space<vmem>>, vector<250x320xf32>
    %cst_11 = arith.constant dense<0.000000e+00> : vector<8x320xf32>
    %18 = tpu.matmul %16, %17, %cst_11 {dimension_numbers = #tpu.dot_dimension_numbers<[1], [0], [0], [1], [0, 0, 1, 1], [], []>} : vector<8x250xf32>, vector<250x320xf32>, vector<8x320xf32> -> vector<8x320xf32>
    %c0_12 = arith.constant 0 : index
    %c0_13 = arith.constant 0 : index
    %19 = vector.load %arg6[%c0_12, %c0_13] : memref<1x320xf32, #tpu.memory_space<vmem>>, vector<1x320xf32>
    %20 = vector.broadcast %19 : vector<1x320xf32> to vector<8x320xf32>
    %21 = arith.addf %18, %20 : vector<8x320xf32>
    %c0_14 = arith.constant 0 : index
    %c0_15 = arith.constant 0 : index
    %22 = vector.load %arg7[%c0_14, %c0_15] : memref<320x320xf32, #tpu.memory_space<vmem>>, vector<320x320xf32>
    %cst_16 = arith.constant dense<0.000000e+00> : vector<8x320xf32>
    %23 = tpu.matmul %21, %22, %cst_16 {dimension_numbers = #tpu.dot_dimension_numbers<[1], [0], [0], [1], [0, 0, 1, 1], [], []>} : vector<8x320xf32>, vector<320x320xf32>, vector<8x320xf32> -> vector<8x320xf32>
    %24 = vector.extract_strided_slice %23 {offsets = [0, 0], sizes = [8, 80], strides = [1, 1]} : vector<8x320xf32> to vector<8x80xf32>
    %25 = vector.extract_strided_slice %23 {offsets = [0, 80], sizes = [8, 80], strides = [1, 1]} : vector<8x320xf32> to vector<8x80xf32>
    %26 = arith.maximumf %24, %25 : vector<8x80xf32>
    %27 = vector.extract_strided_slice %23 {offsets = [0, 160], sizes = [8, 80], strides = [1, 1]} : vector<8x320xf32> to vector<8x80xf32>
    %28 = vector.extract_strided_slice %23 {offsets = [0, 240], sizes = [8, 80], strides = [1, 1]} : vector<8x320xf32> to vector<8x80xf32>
    %29 = arith.maximumf %27, %28 : vector<8x80xf32>
    %30 = arith.maximumf %26, %29 : vector<8x80xf32>
    %cst_17 = arith.constant 0.000000e+00 : f32
    %31 = vector.broadcast %cst_17 : f32 to vector<8x80xf32>
    %32 = arith.maximumf %30, %31 : vector<8x80xf32>
    %c0_18 = arith.constant 0 : index
    %c0_19 = arith.constant 0 : index
    %33 = vector.load %arg8[%c0_18, %c0_19] : memref<80x200xf32, #tpu.memory_space<vmem>>, vector<80x200xf32>
    %cst_20 = arith.constant dense<0.000000e+00> : vector<8x200xf32>
    %34 = tpu.matmul %32, %33, %cst_20 {dimension_numbers = #tpu.dot_dimension_numbers<[1], [0], [0], [1], [0, 0, 1, 1], [], []>} : vector<8x80xf32>, vector<80x200xf32>, vector<8x200xf32> -> vector<8x200xf32>
    %c0_21 = arith.constant 0 : index
    %c0_22 = arith.constant 0 : index
    %35 = vector.load %arg9[%c0_21, %c0_22] : memref<1x200xf32, #tpu.memory_space<vmem>>, vector<1x200xf32>
    %36 = vector.broadcast %35 : vector<1x200xf32> to vector<8x200xf32>
    %37 = arith.addf %34, %36 : vector<8x200xf32>
    %cst_23 = arith.constant 0.000000e+00 : f32
    %38 = vector.broadcast %cst_23 : f32 to vector<8x200xf32>
    %39 = arith.maximumf %37, %38 : vector<8x200xf32>
    %c0_24 = arith.constant 0 : index
    %c0_25 = arith.constant 0 : index
    %40 = vector.load %arg10[%c0_24, %c0_25] : memref<200x40xf32, #tpu.memory_space<vmem>>, vector<200x40xf32>
    %cst_26 = arith.constant dense<0.000000e+00> : vector<8x40xf32>
    %41 = tpu.matmul %39, %40, %cst_26 {dimension_numbers = #tpu.dot_dimension_numbers<[1], [0], [0], [1], [0, 0, 1, 1], [], []>} : vector<8x200xf32>, vector<200x40xf32>, vector<8x40xf32> -> vector<8x40xf32>
    %c0_27 = arith.constant 0 : index
    %c0_28 = arith.constant 0 : index
    %42 = vector.load %arg11[%c0_27, %c0_28] : memref<1x40xf32, #tpu.memory_space<vmem>>, vector<1x40xf32>
    %43 = vector.broadcast %42 : vector<1x40xf32> to vector<8x40xf32>
    %44 = arith.addf %41, %43 : vector<8x40xf32>
    %45 = vector.extract_strided_slice %44 {offsets = [0, 0], sizes = [8, 10], strides = [1, 1]} : vector<8x40xf32> to vector<8x10xf32>
    %cst_29 = arith.constant dense<0xFF800000> : vector<8xf32>
    %46 = vector.multi_reduction <maximumf>, %45, %cst_29 [1] : vector<8x10xf32> to vector<8xf32>
    %47 = vector.shape_cast %46 : vector<8xf32> to vector<8x1xf32>
    %48 = vector.broadcast %47 : vector<8x1xf32> to vector<8x10xf32>
    %49 = arith.subf %45, %48 : vector<8x10xf32>
    %50 = math.exp %49 : vector<8x10xf32>
    %cst_30 = arith.constant dense<0.000000e+00> : vector<8xf32>
    %51 = vector.multi_reduction <add>, %50, %cst_30 [1] : vector<8x10xf32> to vector<8xf32>
    %52 = vector.shape_cast %51 : vector<8xf32> to vector<8x1xf32>
    %53 = math.log %52 : vector<8x1xf32>
    %54 = vector.broadcast %53 : vector<8x1xf32> to vector<8x10xf32>
    %55 = arith.subf %49, %54 : vector<8x10xf32>
    %56 = vector.extract_strided_slice %44 {offsets = [0, 10], sizes = [8, 10], strides = [1, 1]} : vector<8x40xf32> to vector<8x10xf32>
    %cst_31 = arith.constant dense<0xFF800000> : vector<8xf32>
    %57 = vector.multi_reduction <maximumf>, %56, %cst_31 [1] : vector<8x10xf32> to vector<8xf32>
    %58 = vector.shape_cast %57 : vector<8xf32> to vector<8x1xf32>
    %59 = vector.broadcast %58 : vector<8x1xf32> to vector<8x10xf32>
    %60 = arith.subf %56, %59 : vector<8x10xf32>
    %61 = math.exp %60 : vector<8x10xf32>
    %cst_32 = arith.constant dense<0.000000e+00> : vector<8xf32>
    %62 = vector.multi_reduction <add>, %61, %cst_32 [1] : vector<8x10xf32> to vector<8xf32>
    %63 = vector.shape_cast %62 : vector<8xf32> to vector<8x1xf32>
    %64 = math.log %63 : vector<8x1xf32>
    %65 = vector.broadcast %64 : vector<8x1xf32> to vector<8x10xf32>
    %66 = arith.subf %60, %65 : vector<8x10xf32>
    %67 = vector.extract_strided_slice %44 {offsets = [0, 20], sizes = [8, 10], strides = [1, 1]} : vector<8x40xf32> to vector<8x10xf32>
    %cst_33 = arith.constant dense<0xFF800000> : vector<8xf32>
    %68 = vector.multi_reduction <maximumf>, %67, %cst_33 [1] : vector<8x10xf32> to vector<8xf32>
    %69 = vector.shape_cast %68 : vector<8xf32> to vector<8x1xf32>
    %70 = vector.broadcast %69 : vector<8x1xf32> to vector<8x10xf32>
    %71 = arith.subf %67, %70 : vector<8x10xf32>
    %72 = math.exp %71 : vector<8x10xf32>
    %cst_34 = arith.constant dense<0.000000e+00> : vector<8xf32>
    %73 = vector.multi_reduction <add>, %72, %cst_34 [1] : vector<8x10xf32> to vector<8xf32>
    %74 = vector.shape_cast %73 : vector<8xf32> to vector<8x1xf32>
    %75 = math.log %74 : vector<8x1xf32>
    %76 = vector.broadcast %75 : vector<8x1xf32> to vector<8x10xf32>
    %77 = arith.subf %71, %76 : vector<8x10xf32>
    %78 = vector.extract_strided_slice %44 {offsets = [0, 30], sizes = [8, 10], strides = [1, 1]} : vector<8x40xf32> to vector<8x10xf32>
    %cst_35 = arith.constant dense<0xFF800000> : vector<8xf32>
    %79 = vector.multi_reduction <maximumf>, %78, %cst_35 [1] : vector<8x10xf32> to vector<8xf32>
    %80 = vector.shape_cast %79 : vector<8xf32> to vector<8x1xf32>
    %81 = vector.broadcast %80 : vector<8x1xf32> to vector<8x10xf32>
    %82 = arith.subf %78, %81 : vector<8x10xf32>
    %83 = math.exp %82 : vector<8x10xf32>
    %cst_36 = arith.constant dense<0.000000e+00> : vector<8xf32>
    %84 = vector.multi_reduction <add>, %83, %cst_36 [1] : vector<8x10xf32> to vector<8xf32>
    %85 = vector.shape_cast %84 : vector<8xf32> to vector<8x1xf32>
    %86 = math.log %85 : vector<8x1xf32>
    %87 = vector.broadcast %86 : vector<8x1xf32> to vector<8x10xf32>
    %88 = arith.subf %82, %87 : vector<8x10xf32>
    %89 = tpu.concatenate %55, %66, %77, %88 in 1 : vector<8x10xf32>, vector<8x10xf32>, vector<8x10xf32>, vector<8x10xf32> -> vector<8x40xf32>
    %c0_37 = arith.constant 0 : index
    %c0_38 = arith.constant 0 : index
    %90 = vector.load %arg12[%c0_37, %c0_38] : memref<8x40xf32, #tpu.memory_space<vmem>>, vector<8x40xf32>
    tpu.vector_store %arg12[%c0_37, %c0_38], %89 {strides = array<i32>} : memref<8x40xf32, #tpu.memory_space<vmem>>, vector<8x40xf32>,
    return
  }
  func.func @transform_0(%arg0: i32) -> (i32, i32) {
    %c0_i32 = arith.constant 0 : i32
    %c0_i32_0 = arith.constant 0 : i32
    return %arg0, %c0_i32 : i32, i32
  }
  func.func @transform_1(%arg0: i32) -> (i32, i32) {
    %c0_i32 = arith.constant 0 : i32
    %c0_i32_0 = arith.constant 0 : i32
    %c0_i32_1 = arith.constant 0 : i32
    return %c0_i32, %c0_i32_0 : i32, i32
  }
  func.func @transform_2(%arg0: i32) -> (i32, i32) {
    %c0_i32 = arith.constant 0 : i32
    %c0_i32_0 = arith.constant 0 : i32
    %c0_i32_1 = arith.constant 0 : i32
    return %c0_i32, %c0_i32_0 : i32, i32
  }
  func.func @transform_3(%arg0: i32) -> (i32, i32) {
    %c0_i32 = arith.constant 0 : i32
    %c0_i32_0 = arith.constant 0 : i32
    %c0_i32_1 = arith.constant 0 : i32
    return %c0_i32, %c0_i32_0 : i32, i32
  }
  func.func @transform_4(%arg0: i32) -> (i32, i32) {
    %c0_i32 = arith.constant 0 : i32
    %c0_i32_0 = arith.constant 0 : i32
    %c0_i32_1 = arith.constant 0 : i32
    return %c0_i32, %c0_i32_0 : i32, i32
  }
  func.func @transform_5(%arg0: i32) -> (i32, i32) {
    %c0_i32 = arith.constant 0 : i32
    %c0_i32_0 = arith.constant 0 : i32
    %c0_i32_1 = arith.constant 0 : i32
    return %c0_i32, %c0_i32_0 : i32, i32
  }
  func.func @transform_6(%arg0: i32) -> (i32, i32) {
    %c0_i32 = arith.constant 0 : i32
    %c0_i32_0 = arith.constant 0 : i32
    %c0_i32_1 = arith.constant 0 : i32
    return %c0_i32, %c0_i32_0 : i32, i32
  }
  func.func @transform_7(%arg0: i32) -> (i32, i32) {
    %c0_i32 = arith.constant 0 : i32
    %c0_i32_0 = arith.constant 0 : i32
    %c0_i32_1 = arith.constant 0 : i32
    return %c0_i32, %c0_i32_0 : i32, i32
  }
  func.func @transform_8(%arg0: i32) -> (i32, i32) {
    %c0_i32 = arith.constant 0 : i32
    %c0_i32_0 = arith.constant 0 : i32
    %c0_i32_1 = arith.constant 0 : i32
    return %c0_i32, %c0_i32_0 : i32, i32
  }
  func.func @transform_9(%arg0: i32) -> (i32, i32) {
    %c0_i32 = arith.constant 0 : i32
    %c0_i32_0 = arith.constant 0 : i32
    %c0_i32_1 = arith.constant 0 : i32
    return %c0_i32, %c0_i32_0 : i32, i32
  }
  func.func @transform_10(%arg0: i32) -> (i32, i32) {
    %c0_i32 = arith.constant 0 : i32
    %c0_i32_0 = arith.constant 0 : i32
    %c0_i32_1 = arith.constant 0 : i32
    return %c0_i32, %c0_i32_0 : i32, i32
  }
  func.func @transform_11(%arg0: i32) -> (i32, i32) {
    %c0_i32 = arith.constant 0 : i32
    %c0_i32_0 = arith.constant 0 : i32
    return %arg0, %c0_i32 : i32, i32
  }
}

</mosaic_0001>

<llo_original>
// kernel: mnist_forward.1
$region0: #{mnist_forward.1}
  #allocation0 [shape = 'u32[]', space=smem, size = 0x4, offset = 0x4, fixed_abs, tag = 'smem constant byte address 0x4 - core index']
  #allocation1 [shape = 'u32[144,128]{1,0:T(1,128)}', space=vmem, size = 0x12000, scoped, tag = 'internal scratch']
  %s0 = inlined_call_operand.vmem [shape: f32[8,144], index: 0, kind: input, shape index: {}]
  %s1 = inlined_call_operand.hbm [shape: f32[144,1210], index: 1, kind: input, shape index: {}]
  %s2 = inlined_call_operand.hbm [shape: f32[1,1210], index: 2, kind: input, shape index: {}]
  %s3 = inlined_call_operand.hbm [shape: f32[1210,1000], index: 3, kind: input, shape index: {}]
  %s4 = inlined_call_operand.vmem [shape: f32[250,320], index: 4, kind: input, shape index: {}]
  %s5 = inlined_call_operand.hbm [shape: f32[1,320], index: 5, kind: input, shape index: {}]
  %s6 = inlined_call_operand.hbm [shape: f32[320,320], index: 6, kind: input, shape index: {}]
  %s7 = inlined_call_operand.hbm [shape: f32[80,200], index: 7, kind: input, shape index: {}]
  %s8 = inlined_call_operand.hbm [shape: f32[1,200], index: 8, kind: input, shape index: {}]
  %s9 = inlined_call_operand.vmem [shape: f32[200,40], index: 9, kind: input, shape index: {}]
  %s10 = inlined_call_operand.hbm [shape: f32[1,40], index: 10, kind: input, shape index: {}]
  %s11 = inlined_call_operand.vmem [shape: f32[8,40], index: 11, kind: output, shape index: {}]
  %s12 = sld [smem:[#allocation0]]
  $region86: #{mnist_forward.1} parent=0
    _
  %s14 = ssub.s32 1, %s12
  %s15 = scalar_select 0, %s14, %s12
  $region1: #{mnist_forward.1} parent=0
    #allocation2 [shape = 'u8[737280]{0}', space=vmem, size = 0xb4000, scoped, tag = 'input window, operand 1, single buffered']
    #allocation3 [shape = 's32[1]{0}', space=sflag, size = 0x4, scoped, tag = 'scoped memory for mnist_forward.1']
    #allocation4 [shape = 'u8[5120]{0}', space=vmem, size = 0x1400, scoped, tag = 'input window, operand 2, single buffered']
    #allocation5 [shape = 's32[1]{0}', space=sflag, size = 0x4, scoped, tag = 'scoped memory for mnist_forward.1']
    #allocation6 [shape = 'u8[4980736]{0}', space=vmem, size = 0x4c0000, scoped, tag = 'input window, operand 3, single buffered']
    #allocation7 [shape = 'u8[1536]{0}', space=vmem, size = 0x800, scoped, tag = 'input window, operand 5, single buffered']
    #allocation8 [shape = 's32[1]{0}', space=sflag, size = 0x4, scoped, tag = 'scoped memory for mnist_forward.1']
    #allocation9 [shape = 'u8[491520]{0}', space=vmem, size = 0x78000, scoped, tag = 'input window, operand 6, single buffered']
    #allocation10 [shape = 'u8[81920]{0}', space=vmem, size = 0x14000, scoped, tag = 'input window, operand 7, single buffered']
    #allocation11 [shape = 's32[1]{0}', space=sflag, size = 0x4, scoped, tag = 'scoped memory for mnist_forward.1']
    #allocation12 [shape = 'u8[1024]{0}', space=vmem, size = 0x400, scoped, tag = 'input window, operand 8, single buffered']
    #allocation13 [shape = 'u8[512]{0}', space=vmem, size = 0x400, scoped, tag = 'input window, operand 10, single buffered']
    #allocation14 [shape = 's32[1]{0}', space=sflag, size = 0x4, scoped, tag = 'scoped memory for mnist_forward.1']
    %16 = vsyncpa [#allocation3], 0
    %17 = vsyncpa [#allocation5], 0
    %18 = vsyncpa [#allocation8], 0
    %19 = vsyncpa [#allocation11], 0
    %20 = vsyncpa [#allocation14], 0
    // Predicated region
    $region2: #{mnist_forward.1} parent=1 // pred_check
      _
    $region3: #{mnist_forward.1} parent=1 // pred_check_branch
      %22 = sbr.rel (0) target = $region5
    $region4: #{mnist_forward.1} parent=1 // pred_region
      _
    $region5: #{mnist_forward.1} parent=1 // pred_fallthru
      _
    // Predicated region
    $region6: #{mnist_forward.1} parent=1 // pred_check
      _
    $region7: #{mnist_forward.1} parent=1 // pred_check_branch
      %24 = sbr.rel (0) target = $region9
    $region8: #{mnist_forward.1} parent=1 // pred_region
      %s26 = ssub.s32 23040, 23040
      %27 = vsyncadd [#allocation3], %s26
      %s28 = sshll.u32 [#allocation2], 4
      %s29 = int_to_ptr.vmem [resolvable:$true] %s28
      %34 = dma.hbm_to_vmem [thread:$0]  %s1, 23040, %s29, [#allocation3], 1280, 1280, 80
    $region9: #{mnist_forward.1} parent=1 // pred_fallthru
      _
    // Predicated region
    $region10: #{mnist_forward.1} parent=1 // pred_check
      _
    $region11: #{mnist_forward.1} parent=1 // pred_check_branch
      %36 = sbr.rel (0) target = $region13
    $region12: #{mnist_forward.1} parent=1 // pred_region
      %s38 = ssub.s32 160, 160
      %39 = vsyncadd [#allocation5], %s38
      %s41 = sshll.u32 [#allocation4], 4
      %s42 = int_to_ptr.vmem [resolvable:$true] %s41
      %44 = dma.hbm_to_vmem [thread:$0]  %s2, 160, %s42, [#allocation5]
    $region13: #{mnist_forward.1} parent=1 // pred_fallthru
      _
    // Predicated region
    $region14: #{mnist_forward.1} parent=1 // pred_check
      _
    $region15: #{mnist_forward.1} parent=1 // pred_check_branch
      %46 = sbr.rel (0) target = $region17
    $region16: #{mnist_forward.1} parent=1 // pred_region
      %s48 = ssub.s32 155648, 155648
      %49 = vsyncadd [#allocation5], %s48
      %s50 = sshll.u32 [#allocation6], 4
      %s51 = int_to_ptr.vmem [resolvable:$true] %s50
      %56 = dma.hbm_to_vmem [thread:$0]  %s3, 155648, %s51, [#allocation5], 1024, 1024, 64
    $region17: #{mnist_forward.1} parent=1 // pred_fallthru
      _
    // Predicated region
    $region18: #{mnist_forward.1} parent=1 // pred_check
      _
    $region19: #{mnist_forward.1} parent=1 // pred_check_branch
      %58 = sbr.rel (0) target = $region21
    $region20: #{mnist_forward.1} parent=1 // pred_region
      _
    $region21: #{mnist_forward.1} parent=1 // pred_fallthru
      _
    // Predicated region
    $region22: #{mnist_forward.1} parent=1 // pred_check
      _
    $region23: #{mnist_forward.1} parent=1 // pred_check_branch
      %60 = sbr.rel (0) target = $region25
    $region24: #{mnist_forward.1} parent=1 // pred_region
      %s62 = ssub.s32 48, 48
      %63 = vsyncadd [#allocation8], %s62
      %s65 = sshll.u32 [#allocation7], 4
      %s66 = int_to_ptr.vmem [resolvable:$true] %s65
      %68 = dma.hbm_to_vmem [thread:$0]  %s5, 48, %s66, [#allocation8]
    $region25: #{mnist_forward.1} parent=1 // pred_fallthru
      _
    // Predicated region
    $region26: #{mnist_forward.1} parent=1 // pred_check
      _
    $region27: #{mnist_forward.1} parent=1 // pred_check_branch
      %70 = sbr.rel (0) target = $region29
    $region28: #{mnist_forward.1} parent=1 // pred_region
      %s72 = ssub.s32 15360, 15360
      %73 = vsyncadd [#allocation8], %s72
      %s74 = sshll.u32 [#allocation9], 4
      %s75 = int_to_ptr.vmem [resolvable:$true] %s74
      %80 = dma.hbm_to_vmem [thread:$0]  %s6, 15360, %s75, [#allocation8], 384, 384, 24
    $region29: #{mnist_forward.1} parent=1 // pred_fallthru
      _
    // Predicated region
    $region30: #{mnist_forward.1} parent=1 // pred_check
      _
    $region31: #{mnist_forward.1} parent=1 // pred_check_branch
      %82 = sbr.rel (0) target = $region33
    $region32: #{mnist_forward.1} parent=1 // pred_region
      %s84 = ssub.s32 2560, 2560
      %85 = vsyncadd [#allocation11], %s84
      %s86 = sshll.u32 [#allocation10], 4
      %s87 = int_to_ptr.vmem [resolvable:$true] %s86
      %92 = dma.hbm_to_vmem [thread:$0]  %s7, 2560, %s87, [#allocation11], 256, 256, 16
    $region33: #{mnist_forward.1} parent=1 // pred_fallthru
      _
    // Predicated region
    $region34: #{mnist_forward.1} parent=1 // pred_check
      _
    $region35: #{mnist_forward.1} parent=1 // pred_check_branch
      %94 = sbr.rel (0) target = $region37
    $region36: #{mnist_forward.1} parent=1 // pred_region
      %s96 = ssub.s32 32, 32
      %97 = vsyncadd [#allocation11], %s96
      %s99 = sshll.u32 [#allocation12], 4
      %s100 = int_to_ptr.vmem [resolvable:$true] %s99
      %102 = dma.hbm_to_vmem [thread:$0]  %s8, 32, %s100, [#allocation11]
    $region37: #{mnist_forward.1} parent=1 // pred_fallthru
      _
    // Predicated region
    $region38: #{mnist_forward.1} parent=1 // pred_check
      _
    $region39: #{mnist_forward.1} parent=1 // pred_check_branch
      %104 = sbr.rel (0) target = $region41
    $region40: #{mnist_forward.1} parent=1 // pred_region
      _
    $region41: #{mnist_forward.1} parent=1 // pred_fallthru
      _
    // Predicated region
    $region42: #{mnist_forward.1} parent=1 // pred_check
      _
    $region43: #{mnist_forward.1} parent=1 // pred_check_branch
      %106 = sbr.rel (0) target = $region45
    $region44: #{mnist_forward.1} parent=1 // pred_region
      %s108 = ssub.s32 16, 16
      %109 = vsyncadd [#allocation14], %s108
      %s111 = sshll.u32 [#allocation13], 4
      %s112 = int_to_ptr.vmem [resolvable:$true] %s111
      %114 = dma.hbm_to_vmem [thread:$0]  %s10, 16, %s112, [#allocation14]
    $region45: #{mnist_forward.1} parent=1 // pred_fallthru
      _
    // Predicated region
    $region46: #{mnist_forward.1} parent=1 // pred_check
      _
    $region47: #{mnist_forward.1} parent=1 // pred_check_branch
      %116 = sbr.rel (0) target = $region49
    $region48: #{mnist_forward.1} parent=1 // pred_region
      %117 = dma.done [#allocation3], 23040
    $region49: #{mnist_forward.1} parent=1 // pred_fallthru
      _
    // Predicated region
    $region50: #{mnist_forward.1} parent=1 // pred_check
      _
    $region51: #{mnist_forward.1} parent=1 // pred_check_branch
      %119 = sbr.rel (0) target = $region53
    $region52: #{mnist_forward.1} parent=1 // pred_region
      %120 = dma.done [#allocation5], 160
    $region53: #{mnist_forward.1} parent=1 // pred_fallthru
      _
    // Predicated region
    $region54: #{mnist_forward.1} parent=1 // pred_check
      _
    $region55: #{mnist_forward.1} parent=1 // pred_check_branch
      %122 = sbr.rel (0) target = $region57
    $region56: #{mnist_forward.1} parent=1 // pred_region
      %123 = dma.done [#allocation5], 155648
    $region57: #{mnist_forward.1} parent=1 // pred_fallthru
      _
    // Predicated region
    $region58: #{mnist_forward.1} parent=1 // pred_check
      _
    $region59: #{mnist_forward.1} parent=1 // pred_check_branch
      %125 = sbr.rel (0) target = $region61
    $region60: #{mnist_forward.1} parent=1 // pred_region
      %126 = dma.done [#allocation8], 48
    $region61: #{mnist_forward.1} parent=1 // pred_fallthru
      _
    // Predicated region
    $region62: #{mnist_forward.1} parent=1 // pred_check
      _
    $region63: #{mnist_forward.1} parent=1 // pred_check_branch
      %128 = sbr.rel (0) target = $region65
    $region64: #{mnist_forward.1} parent=1 // pred_region
      %129 = dma.done [#allocation8], 15360
    $region65: #{mnist_forward.1} parent=1 // pred_fallthru
      _
    // Predicated region
    $region66: #{mnist_forward.1} parent=1 // pred_check
      _
    $region67: #{mnist_forward.1} parent=1 // pred_check_branch
      %131 = sbr.rel (0) target = $region69
    $region68: #{mnist_forward.1} parent=1 // pred_region
      %132 = dma.done [#allocation11], 2560
    $region69: #{mnist_forward.1} parent=1 // pred_fallthru
      _
    // Predicated region
    $region70: #{mnist_forward.1} parent=1 // pred_check
      _
    $region71: #{mnist_forward.1} parent=1 // pred_check_branch
      %134 = sbr.rel (0) target = $region73
    $region72: #{mnist_forward.1} parent=1 // pred_region
      %135 = dma.done [#allocation11], 32
    $region73: #{mnist_forward.1} parent=1 // pred_fallthru
      _
    // Predicated region
    $region74: #{mnist_forward.1} parent=1 // pred_check
      _
    $region75: #{mnist_forward.1} parent=1 // pred_check_branch
      %137 = sbr.rel (0) target = $region77
    $region76: #{mnist_forward.1} parent=1 // pred_region
      %138 = dma.done [#allocation14], 16
    $region77: #{mnist_forward.1} parent=1 // pred_fallthru
      _
    %v139 = vld [vmem:[%s0] sm:$0xff]
    %v140 = vld [vmem:[%s0 + $0x8] sm:$0xff]
    %v141 = vld [vmem:[#allocation2] sm:$0xff]
    %v142 = vld [vmem:[#allocation2 + $0x8] sm:$0xff]
    %v143 = vld [vmem:[#allocation2 + $0x10] sm:$0xff]
    %v144 = vld [vmem:[#allocation2 + $0x18] sm:$0xff]
    %v145 = vld [vmem:[#allocation2 + $0x20] sm:$0xff]
    %v146 = vld [vmem:[#allocation2 + $0x28] sm:$0xff]
    %v147 = vld [vmem:[#allocation2 + $0x30] sm:$0xff]
    %v148 = vld [vmem:[#allocation2 + $0x38] sm:$0xff]
    %v149 = vld [vmem:[#allocation2 + $0x40] sm:$0xff]
    %v150 = vld [vmem:[#allocation2 + $0x48] sm:$0xff]
    %v151 = vld [vmem:[#allocation2 + $0x50] sm:$0xff]
    %v152 = vld [vmem:[#allocation2 + $0x58] sm:$0xff]
    %v153 = vld [vmem:[#allocation2 + $0x60] sm:$0xff]
    %v154 = vld [vmem:[#allocation2 + $0x68] sm:$0xff]
    %v155 = vld [vmem:[#allocation2 + $0x70] sm:$0xff]
    %v156 = vld [vmem:[#allocation2 + $0x78] sm:$0xff]
    %v157 = vld [vmem:[#allocation2 + $0x80] sm:$0xff]
    %v158 = vld [vmem:[#allocation2 + $0x88] sm:$0xff]
    %v159 = vld [vmem:[#allocation2 + $0x90] sm:$0xff]
    %v160 = vld [vmem:[#allocation2 + $0x98] sm:$0xff]
    %v161 = vld [vmem:[#allocation2 + $0xa0] sm:$0xff]
    %v162 = vld [vmem:[#allocation2 + $0xa8] sm:$0xff]
    %v163 = vld [vmem:[#allocation2 + $0xb0] sm:$0xff]
    %v164 = vld [vmem:[#allocation2 + $0xb8] sm:$0xff]
    %v165 = vld [vmem:[#allocation2 + $0xc0] sm:$0xff]
    %v166 = vld [vmem:[#allocation2 + $0xc8] sm:$0xff]
    %v167 = vld [vmem:[#allocation2 + $0xd0] sm:$0xff]
    %v168 = vld [vmem:[#allocation2 + $0xd8] sm:$0xff]
    %v169 = vld [vmem:[#allocation2 + $0xe0] sm:$0xff]
    %v170 = vld [vmem:[#allocation2 + $0xe8] sm:$0xff]
    %v171 = vld [vmem:[#allocation2 + $0xf0] sm:$0xff]
    %v172 = vld [vmem:[#allocation2 + $0xf8] sm:$0xff]
    %v173 = vld [vmem:[#allocation2 + $0x100] sm:$0xff]
    %v174 = vld [vmem:[#allocation2 + $0x108] sm:$0xff]
    %v175 = vld [vmem:[#allocation2 + $0x110] sm:$0xff]
    %v176 = vld [vmem:[#allocation2 + $0x118] sm:$0xff]
    %v177 = vld [vmem:[#allocation2 + $0x120] sm:$0xff]
    %v178 = vld [vmem:[#allocation2 + $0x128] sm:$0xff]
    %v179 = vld [vmem:[#allocation2 + $0x130] sm:$0xff]
    %v180 = vld [vmem:[#allocation2 + $0x138] sm:$0xff]
    %v181 = vld [vmem:[#allocation2 + $0x140] sm:$0xff]
    %v182 = vld [vmem:[#allocation2 + $0x148] sm:$0xff]
    %v183 = vld [vmem:[#allocation2 + $0x150] sm:$0xff]
    %v184 = vld [vmem:[#allocation2 + $0x158] sm:$0xff]
    %v185 = vld [vmem:[#allocation2 + $0x160] sm:$0xff]
    %v186 = vld [vmem:[#allocation2 + $0x168] sm:$0xff]
    %v187 = vld [vmem:[#allocation2 + $0x170] sm:$0xff]
    %v188 = vld [vmem:[#allocation2 + $0x178] sm:$0xff]
    %v189 = vld [vmem:[#allocation2 + $0x180] sm:$0xff]
    %v190 = vld [vmem:[#allocation2 + $0x188] sm:$0xff]
    %v191 = vld [vmem:[#allocation2 + $0x190] sm:$0xff]
    %v192 = vld [vmem:[#allocation2 + $0x198] sm:$0xff]
    %v193 = vld [vmem:[#allocation2 + $0x1a0] sm:$0xff]
    %v194 = vld [vmem:[#allocation2 + $0x1a8] sm:$0xff]
    %v195 = vld [vmem:[#allocation2 + $0x1b0] sm:$0xff]
    %v196 = vld [vmem:[#allocation2 + $0x1b8] sm:$0xff]
    %v197 = vld [vmem:[#allocation2 + $0x1c0] sm:$0xff]
    %v198 = vld [vmem:[#allocation2 + $0x1c8] sm:$0xff]
    %v199 = vld [vmem:[#allocation2 + $0x1d0] sm:$0xff]
    %v200 = vld [vmem:[#allocation2 + $0x1d8] sm:$0xff]
    %v201 = vld [vmem:[#allocation2 + $0x1e0] sm:$0xff]
    %v202 = vld [vmem:[#allocation2 + $0x1e8] sm:$0xff]
    %v203 = vld [vmem:[#allocation2 + $0x1f0] sm:$0xff]
    %v204 = vld [vmem:[#allocation2 + $0x1f8] sm:$0xff]
    %v205 = vld [vmem:[#allocation2 + $0x200] sm:$0xff]
    %v206 = vld [vmem:[#allocation2 + $0x208] sm:$0xff]
    %v207 = vld [vmem:[#allocation2 + $0x210] sm:$0xff]
    %v208 = vld [vmem:[#allocation2 + $0x218] sm:$0xff]
    %v209 = vld [vmem:[#allocation2 + $0x220] sm:$0xff]
    %v210 = vld [vmem:[#allocation2 + $0x228] sm:$0xff]
    %v211 = vld [vmem:[#allocation2 + $0x230] sm:$0xff]
    %v212 = vld [vmem:[#allocation2 + $0x238] sm:$0xff]
    %v213 = vld [vmem:[#allocation2 + $0x240] sm:$0xff]
    %v214 = vld [vmem:[#allocation2 + $0x248] sm:$0xff]
    %v215 = vld [vmem:[#allocation2 + $0x250] sm:$0xff]
    %v216 = vld [vmem:[#allocation2 + $0x258] sm:$0xff]
    %v217 = vld [vmem:[#allocation2 + $0x260] sm:$0xff]
    %v218 = vld [vmem:[#allocation2 + $0x268] sm:$0xff]
    %v219 = vld [vmem:[#allocation2 + $0x270] sm:$0xff]
    %v220 = vld [vmem:[#allocation2 + $0x278] sm:$0xff]
    %v221 = vld [vmem:[#allocation2 + $0x280] sm:$0xff]
    %v222 = vld [vmem:[#allocation2 + $0x288] sm:$0xff]
    %v223 = vld [vmem:[#allocation2 + $0x290] sm:$0xff]
    %v224 = vld [vmem:[#allocation2 + $0x298] sm:$0xff]
    %v225 = vld [vmem:[#allocation2 + $0x2a0] sm:$0xff]
    %v226 = vld [vmem:[#allocation2 + $0x2a8] sm:$0xff]
    %v227 = vld [vmem:[#allocation2 + $0x2b0] sm:$0xff]
    %v228 = vld [vmem:[#allocation2 + $0x2b8] sm:$0xff]
    %v229 = vld [vmem:[#allocation2 + $0x2c0] sm:$0xff]
    %v230 = vld [vmem:[#allocation2 + $0x2c8] sm:$0xff]
    %v231 = vld [vmem:[#allocation2 + $0x2d0] sm:$0xff]
    %v232 = vld [vmem:[#allocation2 + $0x2d8] sm:$0xff]
    %v233 = vld [vmem:[#allocation2 + $0x2e0] sm:$0xff]
    %v234 = vld [vmem:[#allocation2 + $0x2e8] sm:$0xff]
    %v235 = vld [vmem:[#allocation2 + $0x2f0] sm:$0xff]
    %v236 = vld [vmem:[#allocation2 + $0x2f8] sm:$0xff]
    %v237 = vld [vmem:[#allocation2 + $0x300] sm:$0xff]
    %v238 = vld [vmem:[#allocation2 + $0x308] sm:$0xff]
    %v239 = vld [vmem:[#allocation2 + $0x310] sm:$0xff]
    %v240 = vld [vmem:[#allocation2 + $0x318] sm:$0xff]
    %v241 = vld [vmem:[#allocation2 + $0x320] sm:$0xff]
    %v242 = vld [vmem:[#allocation2 + $0x328] sm:$0xff]
    %v243 = vld [vmem:[#allocation2 + $0x330] sm:$0xff]
    %v244 = vld [vmem:[#allocation2 + $0x338] sm:$0xff]
    %v245 = vld [vmem:[#allocation2 + $0x340] sm:$0xff]
    %v246 = vld [vmem:[#allocation2 + $0x348] sm:$0xff]
    %v247 = vld [vmem:[#allocation2 + $0x350] sm:$0xff]
    %v248 = vld [vmem:[#allocation2 + $0x358] sm:$0xff]
    %v249 = vld [vmem:[#allocation2 + $0x360] sm:$0xff]
    %v250 = vld [vmem:[#allocation2 + $0x368] sm:$0xff]
    %v251 = vld [vmem:[#allocation2 + $0x370] sm:$0xff]
    %v252 = vld [vmem:[#allocation2 + $0x378] sm:$0xff]
    %v253 = vld [vmem:[#allocation2 + $0x380] sm:$0xff]
    %v254 = vld [vmem:[#allocation2 + $0x388] sm:$0xff]
    %v255 = vld [vmem:[#allocation2 + $0x390] sm:$0xff]
    %v256 = vld [vmem:[#allocation2 + $0x398] sm:$0xff]
    %v257 = vld [vmem:[#allocation2 + $0x3a0] sm:$0xff]
    %v258 = vld [vmem:[#allocation2 + $0x3a8] sm:$0xff]
    %v259 = vld [vmem:[#allocation2 + $0x3b0] sm:$0xff]
    %v260 = vld [vmem:[#allocation2 + $0x3b8] sm:$0xff]
    %v261 = vld [vmem:[#allocation2 + $0x3c0] sm:$0xff]
    %v262 = vld [vmem:[#allocation2 + $0x3c8] sm:$0xff]
    %v263 = vld [vmem:[#allocation2 + $0x3d0] sm:$0xff]
    %v264 = vld [vmem:[#allocation2 + $0x3d8] sm:$0xff]
    %v265 = vld [vmem:[#allocation2 + $0x3e0] sm:$0xff]
    %v266 = vld [vmem:[#allocation2 + $0x3e8] sm:$0xff]
    %v267 = vld [vmem:[#allocation2 + $0x3f0] sm:$0xff]
    %v268 = vld [vmem:[#allocation2 + $0x3f8] sm:$0xff]
    %v269 = vld [vmem:[#allocation2 + $0x400] sm:$0xff]
    %v270 = vld [vmem:[#allocation2 + $0x408] sm:$0xff]
    %v271 = vld [vmem:[#allocation2 + $0x410] sm:$0xff]
    %v272 = vld [vmem:[#allocation2 + $0x418] sm:$0xff]
    %v273 = vld [vmem:[#allocation2 + $0x420] sm:$0xff]
    %v274 = vld [vmem:[#allocation2 + $0x428] sm:$0xff]
    %v275 = vld [vmem:[#allocation2 + $0x430] sm:$0xff]
    %v276 = vld [vmem:[#allocation2 + $0x438] sm:$0xff]
    %v277 = vld [vmem:[#allocation2 + $0x440] sm:$0xff]
    %v278 = vld [vmem:[#allocation2 + $0x448] sm:$0xff]
    %v279 = vld [vmem:[#allocation2 + $0x450] sm:$0xff]
    %v280 = vld [vmem:[#allocation2 + $0x458] sm:$0xff]
    %v281 = vld [vmem:[#allocation2 + $0x460] sm:$0xff]
    %v282 = vld [vmem:[#allocation2 + $0x468] sm:$0xff]
    %v283 = vld [vmem:[#allocation2 + $0x470] sm:$0xff]
    %v284 = vld [vmem:[#allocation2 + $0x478] sm:$0xff]
    %v285 = vld [vmem:[#allocation2 + $0x480] sm:$0xff]
    %v286 = vld [vmem:[#allocation2 + $0x488] sm:$0xff]
    %v287 = vld [vmem:[#allocation2 + $0x490] sm:$0xff]
    %v288 = vld [vmem:[#allocation2 + $0x498] sm:$0xff]
    %v289 = vld [vmem:[#allocation2 + $0x4a0] sm:$0xff]
    %v290 = vld [vmem:[#allocation2 + $0x4a8] sm:$0xff]
    %v291 = vld [vmem:[#allocation2 + $0x4b0] sm:$0xff]
    %v292 = vld [vmem:[#allocation2 + $0x4b8] sm:$0xff]
    %v293 = vld [vmem:[#allocation2 + $0x4c0] sm:$0xff]
    %v294 = vld [vmem:[#allocation2 + $0x4c8] sm:$0xff]
    %v295 = vld [vmem:[#allocation2 + $0x4d0] sm:$0xff]
    %v296 = vld [vmem:[#allocation2 + $0x4d8] sm:$0xff]
    %v297 = vld [vmem:[#allocation2 + $0x4e0] sm:$0xff]
    %v298 = vld [vmem:[#allocation2 + $0x4e8] sm:$0xff]
    %v299 = vld [vmem:[#allocation2 + $0x4f0] sm:$0xff]
    %v300 = vld [vmem:[#allocation2 + $0x4f8] sm:$0xff]
    %v301 = vld [vmem:[#allocation2 + $0x500] sm:$0xff]
    %v302 = vld [vmem:[#allocation2 + $0x508] sm:$0xff]
    %v303 = vld [vmem:[#allocation2 + $0x510] sm:$0xff]
    %v304 = vld [vmem:[#allocation2 + $0x518] sm:$0xff]
    %v305 = vld [vmem:[#allocation2 + $0x520] sm:$0xff]
    %v306 = vld [vmem:[#allocation2 + $0x528] sm:$0xff]
    %v307 = vld [vmem:[#allocation2 + $0x530] sm:$0xff]
    %v308 = vld [vmem:[#allocation2 + $0x538] sm:$0xff]
    %v309 = vld [vmem:[#allocation2 + $0x540] sm:$0xff]
    %v310 = vld [vmem:[#allocation2 + $0x548] sm:$0xff]
    %v311 = vld [vmem:[#allocation2 + $0x550] sm:$0xff]
    %v312 = vld [vmem:[#allocation2 + $0x558] sm:$0xff]
    %v313 = vld [vmem:[#allocation2 + $0x560] sm:$0xff]
    %v314 = vld [vmem:[#allocation2 + $0x568] sm:$0xff]
    %v315 = vld [vmem:[#allocation2 + $0x570] sm:$0xff]
    %v316 = vld [vmem:[#allocation2 + $0x578] sm:$0xff]
    %v317 = vld [vmem:[#allocation2 + $0x580] sm:$0xff]
    %v318 = vld [vmem:[#allocation2 + $0x588] sm:$0xff]
    %v319 = vld [vmem:[#allocation2 + $0x590] sm:$0xff]
    %v320 = vld [vmem:[#allocation2 + $0x598] sm:$0xff]
    %v321 = vld [vmem:[#allocation4] sm:$0xff]
    %v322 = vld [vmem:[#allocation4 + $0x8] sm:$0x3]
    %v325 = vlaneseq
    %v326 = vshrl.u32 %v325, 7
    %v327 = vsub.s32 0, %v326
    %v328 = vrot.slane %v321, %v327
    %v329 = vlaneseq
    %v330 = vshrl.u32 %v329, 7
    %v331 = vsub.s32 1, %v330
    %v332 = vrot.slane %v321, %v331
    %v333 = vlaneseq
    %v334 = vshrl.u32 %v333, 7
    %v335 = vsub.s32 2, %v334
    %v336 = vrot.slane %v321, %v335
    %v337 = vlaneseq
    %v338 = vshrl.u32 %v337, 7
    %v339 = vsub.s32 3, %v338
    %v340 = vrot.slane %v321, %v339
    %v341 = vlaneseq
    %v342 = vshrl.u32 %v341, 7
    %v343 = vsub.s32 4, %v342
    %v344 = vrot.slane %v321, %v343
    %v345 = vlaneseq
    %v346 = vshrl.u32 %v345, 7
    %v347 = vsub.s32 5, %v346
    %v348 = vrot.slane %v321, %v347
    %v349 = vlaneseq
    %v350 = vshrl.u32 %v349, 7
    %v351 = vsub.s32 6, %v350
    %v352 = vrot.slane %v321, %v351
    %v353 = vlaneseq
    %v354 = vshrl.u32 %v353, 7
    %v355 = vsub.s32 7, %v354
    %v356 = vrot.slane %v321, %v355
    %v357 = vlaneseq
    %v358 = vshrl.u32 %v357, 7
    %v359 = vsub.s32 0, %v358
    %v360 = vrot.slane %v322, %v359
    %v361 = vlaneseq
    %v362 = vshrl.u32 %v361, 7
    %v363 = vsub.s32 1, %v362
    %v364 = vrot.slane %v322, %v363
    %vm375 = vcmask 130048
    %v377 = vsel %vm375, %v140, 0
    %379 = vmatprep.subr.mxu0 %v142
    %380 = vmatpush1.msra.mxu0 %v141
    %381 = vmatprep.subr.mxu0 %v152
    %382 = vmatpush1.msra.mxu0 %v151
    %383 = vmatprep.subr.mxu0 %v162
    %384 = vmatpush1.msra.mxu0 %v161
    %385 = vmatprep.subr.mxu0 %v172
    %386 = vmatpush1.msra.mxu0 %v171
    %387 = vmatprep.subr.mxu0 %v182
    %388 = vmatpush1.msra.mxu0 %v181
    %389 = vmatprep.subr.mxu0 %v192
    %390 = vmatpush1.msra.mxu0 %v191
    %391 = vmatprep.subr.mxu0 %v202
    %392 = vmatpush1.msra.mxu0 %v201
    %393 = vmatprep.subr.mxu0 %v212
    %394 = vmatpush1.msra.mxu0 %v211
    %395 = vmatprep.subr.mxu0 %v222
    %396 = vmatpush1.msra.mxu0 %v221
    %397 = vmatprep.subr.mxu0 %v232
    %398 = vmatpush1.msra.mxu0 %v231
    %399 = vmatprep.subr.mxu0 %v242
    %400 = vmatpush1.msra.mxu0 %v241
    %401 = vmatprep.subr.mxu0 %v252
    %402 = vmatpush1.msra.mxu0 %v251
    %403 = vmatprep.subr.mxu0 %v262
    %404 = vmatpush1.msra.mxu0 %v261
    %405 = vmatprep.subr.mxu0 %v272
    %406 = vmatpush1.msra.mxu0 %v271
    %407 = vmatprep.subr.mxu0 %v282
    %408 = vmatpush1.msra.mxu0 %v281
    %409 = vmatprep.subr.mxu0 %v292
    %410 = vmatpush1.msra.mxu0 %v291
    %411 = vmatprep.subr.mxu0 %v302
    %412 = vmatpush1.msra.mxu0 %v301
    %413 = vmatprep.subr.mxu0 %v312
    %414 = vmatpush1.msra.mxu0 %v311
    %415 = vmatprep.subr.mxu0 0.0
    %416 = vmatpush1.msra.mxu0 0.0
    %417 = vmatprep.subr.mxu0 0.0
    %418 = vmatpush1.msra.mxu0 0.0
    %419 = vmatprep.subr.mxu0 0.0
    %420 = vmatpush1.msra.mxu0 0.0
    %421 = vmatprep.subr.mxu0 0.0
    %422 = vmatpush1.msra.mxu0 0.0
    %423 = vmatprep.subr.mxu0 0.0
    %424 = vmatpush1.msra.mxu0 0.0
    %425 = vmatprep.subr.mxu0 0.0
    %426 = vmatpush1.msra.mxu0 0.0
    %427 = vmatprep.subr.mxu0 0.0
    %428 = vmatpush1.msra.mxu0 0.0
    %429 = vmatprep.subr.mxu0 0.0
    %430 = vmatpush1.msra.mxu0 0.0
    %431 = vmatprep.subr.mxu0 0.0
    %432 = vmatpush1.msra.mxu0 0.0
    %433 = vmatprep.subr.mxu0 0.0
    %434 = vmatpush1.msra.mxu0 0.0
    %435 = vmatprep.subr.mxu0 0.0
    %436 = vmatpush1.msra.mxu0 0.0
    %437 = vmatprep.subr.mxu0 0.0
    %438 = vmatpush1.msra.mxu0 0.0
    %439 = vmatprep.subr.mxu0 0.0
    %440 = vmatpush1.msra.mxu0 0.0
    %441 = vmatprep.subr.mxu0 0.0
    %442 = vmatpush1.msra.mxu0 0.0
    %443 = vmatprep.mubr.f32.mxu0 %v377
    %444 = vmatmul.mubr.f32.gmra.mrb[0].mxu0 %v139
    %v445 = vpop.f32.mrb[0].mxu0
    %v446 = vadd.f32 %v328, %v445
    %v447 = vpop.f32.mrb[0].mxu0
    %v448 = vadd.f32 %v332, %v447
    %449 = vdwg.mxu0
    %450 = vmatprep.subr.mxu0 %v144
    %451 = vmatpush1.msra.mxu0 %v143
    %452 = vmatprep.subr.mxu0 %v154
    %453 = vmatpush1.msra.mxu0 %v153
    %454 = vmatprep.subr.mxu0 %v164
    %455 = vmatpush1.msra.mxu0 %v163
    %456 = vmatprep.subr.mxu0 %v174
    %457 = vmatpush1.msra.mxu0 %v173
    %458 = vmatprep.subr.mxu0 %v184
    %459 = vmatpush1.msra.mxu0 %v183
    %460 = vmatprep.subr.mxu0 %v194
    %461 = vmatpush1.msra.mxu0 %v193
    %462 = vmatprep.subr.mxu0 %v204
    %463 = vmatpush1.msra.mxu0 %v203
    %464 = vmatprep.subr.mxu0 %v214
    %465 = vmatpush1.msra.mxu0 %v213
    %466 = vmatprep.subr.mxu0 %v224
    %467 = vmatpush1.msra.mxu0 %v223
    %468 = vmatprep.subr.mxu0 %v234
    %469 = vmatpush1.msra.mxu0 %v233
    %470 = vmatprep.subr.mxu0 %v244
    %471 = vmatpush1.msra.mxu0 %v243
    %472 = vmatprep.subr.mxu0 %v254
    %473 = vmatpush1.msra.mxu0 %v253
    %474 = vmatprep.subr.mxu0 %v264
    %475 = vmatpush1.msra.mxu0 %v263
    %476 = vmatprep.subr.mxu0 %v274
    %477 = vmatpush1.msra.mxu0 %v273
    %478 = vmatprep.subr.mxu0 %v284
    %479 = vmatpush1.msra.mxu0 %v283
    %480 = vmatprep.subr.mxu0 %v294
    %481 = vmatpush1.msra.mxu0 %v293
    %482 = vmatprep.subr.mxu0 %v304
    %483 = vmatpush1.msra.mxu0 %v303
    %484 = vmatprep.subr.mxu0 %v314
    %485 = vmatpush1.msra.mxu0 %v313
    %486 = vmatprep.subr.mxu0 0.0
    %487 = vmatpush1.msra.mxu0 0.0
    %488 = vmatprep.subr.mxu0 0.0
    %489 = vmatpush1.msra.mxu0 0.0
    %490 = vmatprep.subr.mxu0 0.0
    %491 = vmatpush1.msra.mxu0 0.0
    %492 = vmatprep.subr.mxu0 0.0
    %493 = vmatpush1.msra.mxu0 0.0
    %494 = vmatprep.subr.mxu0 0.0
    %495 = vmatpush1.msra.mxu0 0.0
    %496 = vmatprep.subr.mxu0 0.0
    %497 = vmatpush1.msra.mxu0 0.0
    %498 = vmatprep.subr.mxu0 0.0
    %499 = vmatpush1.msra.mxu0 0.0
    %500 = vmatprep.subr.mxu0 0.0
    %501 = vmatpush1.msra.mxu0 0.0
    %502 = vmatprep.subr.mxu0 0.0
    %503 = vmatpush1.msra.mxu0 0.0
    %504 = vmatprep.subr.mxu0 0.0
    %505 = vmatpush1.msra.mxu0 0.0
    %506 = vmatprep.subr.mxu0 0.0
    %507 = vmatpush1.msra.mxu0 0.0
    %508 = vmatprep.subr.mxu0 0.0
    %509 = vmatpush1.msra.mxu0 0.0
    %510 = vmatprep.subr.mxu0 0.0
    %511 = vmatpush1.msra.mxu0 0.0
    %512 = vmatprep.subr.mxu0 0.0
    %513 = vmatpush1.msra.mxu0 0.0
    %514 = vmatprep.mubr.f32.mxu0 %v377
    %515 = vmatmul.mubr.f32.gmra.mrb[0].mxu0 %v139
    %v516 = vpop.f32.mrb[0].mxu0
    %v517 = vadd.f32 %v336, %v516
    %v518 = vpop.f32.mrb[0].mxu0
    %v519 = vadd.f32 %v340, %v518
    %520 = vdwg.mxu0
    %521 = vmatprep.subr.mxu0 %v146
    %522 = vmatpush1.msra.mxu0 %v145
    %523 = vmatprep.subr.mxu0 %v156
    %524 = vmatpush1.msra.mxu0 %v155
    %525 = vmatprep.subr.mxu0 %v166
    %526 = vmatpush1.msra.mxu0 %v165
    %527 = vmatprep.subr.mxu0 %v176
    %528 = vmatpush1.msra.mxu0 %v175
    %529 = vmatprep.subr.mxu0 %v186
    %530 = vmatpush1.msra.mxu0 %v185
    %531 = vmatprep.subr.mxu0 %v196
    %532 = vmatpush1.msra.mxu0 %v195
    %533 = vmatprep.subr.mxu0 %v206
    %534 = vmatpush1.msra.mxu0 %v205
    %535 = vmatprep.subr.mxu0 %v216
    %536 = vmatpush1.msra.mxu0 %v215
    %537 = vmatprep.subr.mxu0 %v226
    %538 = vmatpush1.msra.mxu0 %v225
    %539 = vmatprep.subr.mxu0 %v236
    %540 = vmatpush1.msra.mxu0 %v235
    %541 = vmatprep.subr.mxu0 %v246
    %542 = vmatpush1.msra.mxu0 %v245
    %543 = vmatprep.subr.mxu0 %v256
    %544 = vmatpush1.msra.mxu0 %v255
    %545 = vmatprep.subr.mxu0 %v266
    %546 = vmatpush1.msra.mxu0 %v265
    %547 = vmatprep.subr.mxu0 %v276
    %548 = vmatpush1.msra.mxu0 %v275
    %549 = vmatprep.subr.mxu0 %v286
    %550 = vmatpush1.msra.mxu0 %v285
    %551 = vmatprep.subr.mxu0 %v296
    %552 = vmatpush1.msra.mxu0 %v295
    %553 = vmatprep.subr.mxu0 %v306
    %554 = vmatpush1.msra.mxu0 %v305
    %555 = vmatprep.subr.mxu0 %v316
    %556 = vmatpush1.msra.mxu0 %v315
    %557 = vmatprep.subr.mxu0 0.0
    %558 = vmatpush1.msra.mxu0 0.0
    %559 = vmatprep.subr.mxu0 0.0
    %560 = vmatpush1.msra.mxu0 0.0
    %561 = vmatprep.subr.mxu0 0.0
    %562 = vmatpush1.msra.mxu0 0.0
    %563 = vmatprep.subr.mxu0 0.0
    %564 = vmatpush1.msra.mxu0 0.0
    %565 = vmatprep.subr.mxu0 0.0
    %566 = vmatpush1.msra.mxu0 0.0
    %567 = vmatprep.subr.mxu0 0.0
    %568 = vmatpush1.msra.mxu0 0.0
    %569 = vmatprep.subr.mxu0 0.0
    %570 = vmatpush1.msra.mxu0 0.0
    %571 = vmatprep.subr.mxu0 0.0
    %572 = vmatpush1.msra.mxu0 0.0
    %573 = vmatprep.subr.mxu0 0.0
    %574 = vmatpush1.msra.mxu0 0.0
    %575 = vmatprep.subr.mxu0 0.0
    %576 = vmatpush1.msra.mxu0 0.0
    %577 = vmatprep.subr.mxu0 0.0
    %578 = vmatpush1.msra.mxu0 0.0
    %579 = vmatprep.subr.mxu0 0.0
    %580 = vmatpush1.msra.mxu0 0.0
    %581 = vmatprep.subr.mxu0 0.0
    %582 = vmatpush1.msra.mxu0 0.0
    %583 = vmatprep.subr.mxu0 0.0
    %584 = vmatpush1.msra.mxu0 0.0
    %585 = vmatprep.mubr.f32.mxu0 %v377
    %586 = vmatmul.mubr.f32.gmra.mrb[0].mxu0 %v139
    %v587 = vpop.f32.mrb[0].mxu0
    %v588 = vadd.f32 %v344, %v587
    %v589 = vpop.f32.mrb[0].mxu0
    %v590 = vadd.f32 %v348, %v589
    %591 = vdwg.mxu0
    %592 = vmatprep.subr.mxu0 %v148
    %593 = vmatpush1.msra.mxu0 %v147
    %594 = vmatprep.subr.mxu0 %v158
    %595 = vmatpush1.msra.mxu0 %v157
    %596 = vmatprep.subr.mxu0 %v168
    %597 = vmatpush1.msra.mxu0 %v167
    %598 = vmatprep.subr.mxu0 %v178
    %599 = vmatpush1.msra.mxu0 %v177
    %600 = vmatprep.subr.mxu0 %v188
    %601 = vmatpush1.msra.mxu0 %v187
    %602 = vmatprep.subr.mxu0 %v198
    %603 = vmatpush1.msra.mxu0 %v197
    %604 = vmatprep.subr.mxu0 %v208
    %605 = vmatpush1.msra.mxu0 %v207
    %606 = vmatprep.subr.mxu0 %v218
    %607 = vmatpush1.msra.mxu0 %v217
    %608 = vmatprep.subr.mxu0 %v228
    %609 = vmatpush1.msra.mxu0 %v227
    %610 = vmatprep.subr.mxu0 %v238
    %611 = vmatpush1.msra.mxu0 %v237
    %612 = vmatprep.subr.mxu0 %v248
    %613 = vmatpush1.msra.mxu0 %v247
    %614 = vmatprep.subr.mxu0 %v258
    %615 = vmatpush1.msra.mxu0 %v257
    %616 = vmatprep.subr.mxu0 %v268
    %617 = vmatpush1.msra.mxu0 %v267
    %618 = vmatprep.subr.mxu0 %v278
    %619 = vmatpush1.msra.mxu0 %v277
    %620 = vmatprep.subr.mxu0 %v288
    %621 = vmatpush1.msra.mxu0 %v287
    %622 = vmatprep.subr.mxu0 %v298
    %623 = vmatpush1.msra.mxu0 %v297
    %624 = vmatprep.subr.mxu0 %v308
    %625 = vmatpush1.msra.mxu0 %v307
    %626 = vmatprep.subr.mxu0 %v318
    %627 = vmatpush1.msra.mxu0 %v317
    %628 = vmatprep.subr.mxu0 0.0
    %629 = vmatpush1.msra.mxu0 0.0
    %630 = vmatprep.subr.mxu0 0.0
    %631 = vmatpush1.msra.mxu0 0.0
    %632 = vmatprep.subr.mxu0 0.0
    %633 = vmatpush1.msra.mxu0 0.0
    %634 = vmatprep.subr.mxu0 0.0
    %635 = vmatpush1.msra.mxu0 0.0
    %636 = vmatprep.subr.mxu0 0.0
    %637 = vmatpush1.msra.mxu0 0.0
    %638 = vmatprep.subr.mxu0 0.0
    %639 = vmatpush1.msra.mxu0 0.0
    %640 = vmatprep.subr.mxu0 0.0
    %641 = vmatpush1.msra.mxu0 0.0
    %642 = vmatprep.subr.mxu0 0.0
    %643 = vmatpush1.msra.mxu0 0.0
    %644 = vmatprep.subr.mxu0 0.0
    %645 = vmatpush1.msra.mxu0 0.0
    %646 = vmatprep.subr.mxu0 0.0
    %647 = vmatpush1.msra.mxu0 0.0
    %648 = vmatprep.subr.mxu0 0.0
    %649 = vmatpush1.msra.mxu0 0.0
    %650 = vmatprep.subr.mxu0 0.0
    %651 = vmatpush1.msra.mxu0 0.0
    %652 = vmatprep.subr.mxu0 0.0
    %653 = vmatpush1.msra.mxu0 0.0
    %654 = vmatprep.subr.mxu0 0.0
    %655 = vmatpush1.msra.mxu0 0.0
    %656 = vmatprep.mubr.f32.mxu0 %v377
    %657 = vmatmul.mubr.f32.gmra.mrb[0].mxu0 %v139
    %v658 = vpop.f32.mrb[0].mxu0
    %v659 = vadd.f32 %v352, %v658
    %v660 = vpop.f32.mrb[0].mxu0
    %v661 = vadd.f32 %v356, %v660
    %662 = vdwg.mxu0
    %663 = vmatprep.subr.mxu0 %v150
    %664 = vmatpush1.msra.mxu0 %v149
    %665 = vmatprep.subr.mxu0 %v160
    %666 = vmatpush1.msra.mxu0 %v159
    %667 = vmatprep.subr.mxu0 %v170
    %668 = vmatpush1.msra.mxu0 %v169
    %669 = vmatprep.subr.mxu0 %v180
    %670 = vmatpush1.msra.mxu0 %v179
    %671 = vmatprep.subr.mxu0 %v190
    %672 = vmatpush1.msra.mxu0 %v189
    %673 = vmatprep.subr.mxu0 %v200
    %674 = vmatpush1.msra.mxu0 %v199
    %675 = vmatprep.subr.mxu0 %v210
    %676 = vmatpush1.msra.mxu0 %v209
    %677 = vmatprep.subr.mxu0 %v220
    %678 = vmatpush1.msra.mxu0 %v219
    %679 = vmatprep.subr.mxu0 %v230
    %680 = vmatpush1.msra.mxu0 %v229
    %681 = vmatprep.subr.mxu0 %v240
    %682 = vmatpush1.msra.mxu0 %v239
    %683 = vmatprep.subr.mxu0 %v250
    %684 = vmatpush1.msra.mxu0 %v249
    %685 = vmatprep.subr.mxu0 %v260
    %686 = vmatpush1.msra.mxu0 %v259
    %687 = vmatprep.subr.mxu0 %v270
    %688 = vmatpush1.msra.mxu0 %v269
    %689 = vmatprep.subr.mxu0 %v280
    %690 = vmatpush1.msra.mxu0 %v279
    %691 = vmatprep.subr.mxu0 %v290
    %692 = vmatpush1.msra.mxu0 %v289
    %693 = vmatprep.subr.mxu0 %v300
    %694 = vmatpush1.msra.mxu0 %v299
    %695 = vmatprep.subr.mxu0 %v310
    %696 = vmatpush1.msra.mxu0 %v309
    %697 = vmatprep.subr.mxu0 %v320
    %698 = vmatpush1.msra.mxu0 %v319
    %699 = vmatprep.subr.mxu0 0.0
    %700 = vmatpush1.msra.mxu0 0.0
    %701 = vmatprep.subr.mxu0 0.0
    %702 = vmatpush1.msra.mxu0 0.0
    %703 = vmatprep.subr.mxu0 0.0
    %704 = vmatpush1.msra.mxu0 0.0
    %705 = vmatprep.subr.mxu0 0.0
    %706 = vmatpush1.msra.mxu0 0.0
    %707 = vmatprep.subr.mxu0 0.0
    %708 = vmatpush1.msra.mxu0 0.0
    %709 = vmatprep.subr.mxu0 0.0
    %710 = vmatpush1.msra.mxu0 0.0
    %711 = vmatprep.subr.mxu0 0.0
    %712 = vmatpush1.msra.mxu0 0.0
    %713 = vmatprep.subr.mxu0 0.0
    %714 = vmatpush1.msra.mxu0 0.0
    %715 = vmatprep.subr.mxu0 0.0
    %716 = vmatpush1.msra.mxu0 0.0
    %717 = vmatprep.subr.mxu0 0.0
    %718 = vmatpush1.msra.mxu0 0.0
    %719 = vmatprep.subr.mxu0 0.0
    %720 = vmatpush1.msra.mxu0 0.0
    %721 = vmatprep.subr.mxu0 0.0
    %722 = vmatpush1.msra.mxu0 0.0
    %723 = vmatprep.subr.mxu0 0.0
    %724 = vmatpush1.msra.mxu0 0.0
    %725 = vmatprep.subr.mxu0 0.0
    %726 = vmatpush1.msra.mxu0 0.0
    %727 = vmatprep.mubr.f32.mxu0 %v377
    %728 = vmatmul.mubr.f32.gmra.mrb[0].mxu0 %v139
    %v729 = vpop.f32.mrb[0].mxu0
    %v730 = vadd.f32 %v360, %v729
    %v731 = vpop.f32.mrb[0].mxu0
    %v732 = vadd.f32 %v364, %v731
    %733 = vdwg.mxu0
    %v734 = vld [vmem:[#allocation6] sm:$0xff]
    %v735 = vld [vmem:[#allocation6 + $0x8] sm:$0xff]
    %v736 = vld [vmem:[#allocation6 + $0x10] sm:$0xff]
    %v737 = vld [vmem:[#allocation6 + $0x18] sm:$0xff]
    %v738 = vld [vmem:[#allocation6 + $0x20] sm:$0xff]
    %v739 = vld [vmem:[#allocation6 + $0x28] sm:$0xff]
    %v740 = vld [vmem:[#allocation6 + $0x30] sm:$0xff]
    %v741 = vld [vmem:[#allocation6 + $0x38] sm:$0xff]
    %v742 = vld [vmem:[#allocation6 + $0x40] sm:$0xff]
    %v743 = vld [vmem:[#allocation6 + $0x48] sm:$0xff]
    %v744 = vld [vmem:[#allocation6 + $0x50] sm:$0xff]
    %v745 = vld [vmem:[#allocation6 + $0x58] sm:$0xff]
    %v746 = vld [vmem:[#allocation6 + $0x60] sm:$0xff]
    %v747 = vld [vmem:[#allocation6 + $0x68] sm:$0xff]
    %v748 = vld [vmem:[#allocation6 + $0x70] sm:$0xff]
    %v749 = vld [vmem:[#allocation6 + $0x78] sm:$0xff]
    %v750 = vld [vmem:[#allocation6 + $0x80] sm:$0xff]
    %v751 = vld [vmem:[#allocation6 + $0x88] sm:$0xff]
    %v752 = vld [vmem:[#allocation6 + $0x90] sm:$0xff]
    %v753 = vld [vmem:[#allocation6 + $0x98] sm:$0xff]
    %v754 = vld [vmem:[#allocation6 + $0xa0] sm:$0xff]
    %v755 = vld [vmem:[#allocation6 + $0xa8] sm:$0xff]
    %v756 = vld [vmem:[#allocation6 + $0xb0] sm:$0xff]
    %v757 = vld [vmem:[#allocation6 + $0xb8] sm:$0xff]
    %v758 = vld [vmem:[#allocation6 + $0xc0] sm:$0xff]
    %v759 = vld [vmem:[#allocation6 + $0xc8] sm:$0xff]
    %v760 = vld [vmem:[#allocation6 + $0xd0] sm:$0xff]
    %v761 = vld [vmem:[#allocation6 + $0xd8] sm:$0xff]
    %v762 = vld [vmem:[#allocation6 + $0xe0] sm:$0xff]
    %v763 = vld [vmem:[#allocation6 + $0xe8] sm:$0xff]
    %v764 = vld [vmem:[#allocation6 + $0xf0] sm:$0xff]
    %v765 = vld [vmem:[#allocation6 + $0xf8] sm:$0xff]
    %v766 = vld [vmem:[#allocation6 + $0x100] sm:$0xff]
    %v767 = vld [vmem:[#allocation6 + $0x108] sm:$0xff]
    %v768 = vld [vmem:[#allocation6 + $0x110] sm:$0xff]
    %v769 = vld [vmem:[#allocation6 + $0x118] sm:$0xff]
    %v770 = vld [vmem:[#allocation6 + $0x120] sm:$0xff]
    %v771 = vld [vmem:[#allocation6 + $0x128] sm:$0xff]
    %v772 = vld [vmem:[#allocation6 + $0x130] sm:$0xff]
    %v773 = vld [vmem:[#allocation6 + $0x138] sm:$0xff]
    %v774 = vld [vmem:[#allocation6 + $0x140] sm:$0xff]
    %v775 = vld [vmem:[#allocation6 + $0x148] sm:$0xff]
    %v776 = vld [vmem:[#allocation6 + $0x150] sm:$0xff]
    %v777 = vld [vmem:[#allocation6 + $0x158] sm:$0xff]
    %v778 = vld [vmem:[#allocation6 + $0x160] sm:$0xff]
    %v779 = vld [vmem:[#allocation6 + $0x168] sm:$0xff]
    %v780 = vld [vmem:[#allocation6 + $0x170] sm:$0xff]
    %v781 = vld [vmem:[#allocation6 + $0x178] sm:$0xff]
    %v782 = vld [vmem:[#allocation6 + $0x180] sm:$0xff]
    %v783 = vld [vmem:[#allocation6 + $0x188] sm:$0xff]
    %v784 = vld [vmem:[#allocation6 + $0x190] sm:$0xff]
    %v785 = vld [vmem:[#allocation6 + $0x198] sm:$0xff]
    %v786 = vld [vmem:[#allocation6 + $0x1a0] sm:$0xff]
    %v787 = vld [vmem:[#allocation6 + $0x1a8] sm:$0xff]
    %v788 = vld [vmem:[#allocation6 + $0x1b0] sm:$0xff]
    %v789 = vld [vmem:[#allocation6 + $0x1b8] sm:$0xff]
    %v790 = vld [vmem:[#allocation6 + $0x1c0] sm:$0xff]
    %v791 = vld [vmem:[#allocation6 + $0x1c8] sm:$0xff]
    %v792 = vld [vmem:[#allocation6 + $0x1d0] sm:$0xff]
    %v793 = vld [vmem:[#allocation6 + $0x1d8] sm:$0xff]
    %v794 = vld [vmem:[#allocation6 + $0x1e0] sm:$0xff]
    %v795 = vld [vmem:[#allocation6 + $0x1e8] sm:$0xff]
    %v796 = vld [vmem:[#allocation6 + $0x1f0] sm:$0xff]
    %v797 = vld [vmem:[#allocation6 + $0x1f8] sm:$0xff]
    %v798 = vld [vmem:[#allocation6 + $0x200] sm:$0xff]
    %v799 = vld [vmem:[#allocation6 + $0x208] sm:$0xff]
    %v800 = vld [vmem:[#allocation6 + $0x210] sm:$0xff]
    %v801 = vld [vmem:[#allocation6 + $0x218] sm:$0xff]
    %v802 = vld [vmem:[#allocation6 + $0x220] sm:$0xff]
    %v803 = vld [vmem:[#allocation6 + $0x228] sm:$0xff]
    %v804 = vld [vmem:[#allocation6 + $0x230] sm:$0xff]
    %v805 = vld [vmem:[#allocation6 + $0x238] sm:$0xff]
    %v806 = vld [vmem:[#allocation6 + $0x240] sm:$0xff]
    %v807 = vld [vmem:[#allocation6 + $0x248] sm:$0xff]
    %v808 = vld [vmem:[#allocation6 + $0x250] sm:$0xff]
    %v809 = vld [vmem:[#allocation6 + $0x258] sm:$0xff]
    %v810 = vld [vmem:[#allocation6 + $0x260] sm:$0xff]
    %v811 = vld [vmem:[#allocation6 + $0x268] sm:$0xff]
    %v812 = vld [vmem:[#allocation6 + $0x270] sm:$0xff]
    %v813 = vld [vmem:[#allocation6 + $0x278] sm:$0xff]
    %v814 = vld [vmem:[#allocation6 + $0x280] sm:$0xff]
    %v815 = vld [vmem:[#allocation6 + $0x288] sm:$0xff]
    %v816 = vld [vmem:[#allocation6 + $0x290] sm:$0xff]
    %v817 = vld [vmem:[#allocation6 + $0x298] sm:$0xff]
    %v818 = vld [vmem:[#allocation6 + $0x2a0] sm:$0xff]
    %v819 = vld [vmem:[#allocation6 + $0x2a8] sm:$0xff]
    %v820 = vld [vmem:[#allocation6 + $0x2b0] sm:$0xff]
    %v821 = vld [vmem:[#allocation6 + $0x2b8] sm:$0xff]
    %v822 = vld [vmem:[#allocation6 + $0x2c0] sm:$0xff]
    %v823 = vld [vmem:[#allocation6 + $0x2c8] sm:$0xff]
    %v824 = vld [vmem:[#allocation6 + $0x2d0] sm:$0xff]
    %v825 = vld [vmem:[#allocation6 + $0x2d8] sm:$0xff]
    %v826 = vld [vmem:[#allocation6 + $0x2e0] sm:$0xff]
    %v827 = vld [vmem:[#allocation6 + $0x2e8] sm:$0xff]
    %v828 = vld [vmem:[#allocation6 + $0x2f0] sm:$0xff]
    %v829 = vld [vmem:[#allocation6 + $0x2f8] sm:$0xff]
    %v830 = vld [vmem:[#allocation6 + $0x300] sm:$0xff]
    %v831 = vld [vmem:[#allocation6 + $0x308] sm:$0xff]
    %v832 = vld [vmem:[#allocation6 + $0x310] sm:$0xff]
    %v833 = vld [vmem:[#allocation6 + $0x318] sm:$0xff]
    %v834 = vld [vmem:[#allocation6 + $0x320] sm:$0xff]
    %v835 = vld [vmem:[#allocation6 + $0x328] sm:$0xff]
    %v836 = vld [vmem:[#allocation6 + $0x330] sm:$0xff]
    %v837 = vld [vmem:[#allocation6 + $0x338] sm:$0xff]
    %v838 = vld [vmem:[#allocation6 + $0x340] sm:$0xff]
    %v839 = vld [vmem:[#allocation6 + $0x348] sm:$0xff]
    %v840 = vld [vmem:[#allocation6 + $0x350] sm:$0xff]
    %v841 = vld [vmem:[#allocation6 + $0x358] sm:$0xff]
    %v842 = vld [vmem:[#allocation6 + $0x360] sm:$0xff]
    %v843 = vld [vmem:[#allocation6 + $0x368] sm:$0xff]
    %v844 = vld [vmem:[#allocation6 + $0x370] sm:$0xff]
    %v845 = vld [vmem:[#allocation6 + $0x378] sm:$0xff]
    %v846 = vld [vmem:[#allocation6 + $0x380] sm:$0xff]
    %v847 = vld [vmem:[#allocation6 + $0x388] sm:$0xff]
    %v848 = vld [vmem:[#allocation6 + $0x390] sm:$0xff]
    %v849 = vld [vmem:[#allocation6 + $0x398] sm:$0xff]
    %v850 = vld [vmem:[#allocation6 + $0x3a0] sm:$0xff]
    %v851 = vld [vmem:[#allocation6 + $0x3a8] sm:$0xff]
    %v852 = vld [vmem:[#allocation6 + $0x3b0] sm:$0xff]
    %v853 = vld [vmem:[#allocation6 + $0x3b8] sm:$0xff]
    %v854 = vld [vmem:[#allocation6 + $0x3c0] sm:$0xff]
    %v855 = vld [vmem:[#allocation6 + $0x3c8] sm:$0xff]
    %v856 = vld [vmem:[#allocation6 + $0x3d0] sm:$0xff]
    %v857 = vld [vmem:[#allocation6 + $0x3d8] sm:$0xff]
    %v858 = vld [vmem:[#allocation6 + $0x3e0] sm:$0xff]
    %v859 = vld [vmem:[#allocation6 + $0x3e8] sm:$0xff]
    %v860 = vld [vmem:[#allocation6 + $0x3f0] sm:$0xff]
    %v861 = vld [vmem:[#allocation6 + $0x3f8] sm:$0xff]
    %v862 = vld [vmem:[#allocation6 + $0x400] sm:$0xff]
    %v863 = vld [vmem:[#allocation6 + $0x408] sm:$0xff]
    %v864 = vld [vmem:[#allocation6 + $0x410] sm:$0xff]
    %v865 = vld [vmem:[#allocation6 + $0x418] sm:$0xff]
    %v866 = vld [vmem:[#allocation6 + $0x420] sm:$0xff]
    %v867 = vld [vmem:[#allocation6 + $0x428] sm:$0xff]
    %v868 = vld [vmem:[#allocation6 + $0x430] sm:$0xff]
    %v869 = vld [vmem:[#allocation6 + $0x438] sm:$0xff]
    %v870 = vld [vmem:[#allocation6 + $0x440] sm:$0xff]
    %v871 = vld [vmem:[#allocation6 + $0x448] sm:$0xff]
    %v872 = vld [vmem:[#allocation6 + $0x450] sm:$0xff]
    %v873 = vld [vmem:[#allocation6 + $0x458] sm:$0xff]
    %v874 = vld [vmem:[#allocation6 + $0x460] sm:$0xff]
    %v875 = vld [vmem:[#allocation6 + $0x468] sm:$0xff]
    %v876 = vld [vmem:[#allocation6 + $0x470] sm:$0xff]
    %v877 = vld [vmem:[#allocation6 + $0x478] sm:$0xff]
    %v878 = vld [vmem:[#allocation6 + $0x480] sm:$0xff]
    %v879 = vld [vmem:[#allocation6 + $0x488] sm:$0xff]
    %v880 = vld [vmem:[#allocation6 + $0x490] sm:$0xff]
    %v881 = vld [vmem:[#allocation6 + $0x498] sm:$0xff]
    %v882 = vld [vmem:[#allocation6 + $0x4a0] sm:$0xff]
    %v883 = vld [vmem:[#allocation6 + $0x4a8] sm:$0xff]
    %v884 = vld [vmem:[#allocation6 + $0x4b0] sm:$0xff]
    %v885 = vld [vmem:[#allocation6 + $0x4b8] sm:$0xff]
    %v886 = vld [vmem:[#allocation6 + $0x4c0] sm:$0xff]
    %v887 = vld [vmem:[#allocation6 + $0x4c8] sm:$0xff]
    %v888 = vld [vmem:[#allocation6 + $0x4d0] sm:$0xff]
    %v889 = vld [vmem:[#allocation6 + $0x4d8] sm:$0xff]
    %v890 = vld [vmem:[#allocation6 + $0x4e0] sm:$0xff]
    %v891 = vld [vmem:[#allocation6 + $0x4e8] sm:$0xff]
    %v892 = vld [vmem:[#allocation6 + $0x4f0] sm:$0xff]
    %v893 = vld [vmem:[#allocation6 + $0x4f8] sm:$0xff]
    %v894 = vld [vmem:[#allocation6 + $0x500] sm:$0xff]
    %v895 = vld [vmem:[#allocation6 + $0x508] sm:$0xff]
    %v896 = vld [vmem:[#allocation6 + $0x510] sm:$0xff]
    %v897 = vld [vmem:[#allocation6 + $0x518] sm:$0xff]
    %v898 = vld [vmem:[#allocation6 + $0x520] sm:$0xff]
    %v899 = vld [vmem:[#allocation6 + $0x528] sm:$0xff]
    %v900 = vld [vmem:[#allocation6 + $0x530] sm:$0xff]
    %v901 = vld [vmem:[#allocation6 + $0x538] sm:$0xff]
    %v902 = vld [vmem:[#allocation6 + $0x540] sm:$0xff]
    %v903 = vld [vmem:[#allocation6 + $0x548] sm:$0xff]
    %v904 = vld [vmem:[#allocation6 + $0x550] sm:$0xff]
    %v905 = vld [vmem:[#allocation6 + $0x558] sm:$0xff]
    %v906 = vld [vmem:[#allocation6 + $0x560] sm:$0xff]
    %v907 = vld [vmem:[#allocation6 + $0x568] sm:$0xff]
    %v908 = vld [vmem:[#allocation6 + $0x570] sm:$0xff]
    %v909 = vld [vmem:[#allocation6 + $0x578] sm:$0xff]
    %v910 = vld [vmem:[#allocation6 + $0x580] sm:$0xff]
    %v911 = vld [vmem:[#allocation6 + $0x588] sm:$0xff]
    %v912 = vld [vmem:[#allocation6 + $0x590] sm:$0xff]
    %v913 = vld [vmem:[#allocation6 + $0x598] sm:$0xff]
    %v914 = vld [vmem:[#allocation6 + $0x5a0] sm:$0xff]
    %v915 = vld [vmem:[#allocation6 + $0x5a8] sm:$0xff]
    %v916 = vld [vmem:[#allocation6 + $0x5b0] sm:$0xff]
    %v917 = vld [vmem:[#allocation6 + $0x5b8] sm:$0xff]
    %v918 = vld [vmem:[#allocation6 + $0x5c0] sm:$0xff]
    %v919 = vld [vmem:[#allocation6 + $0x5c8] sm:$0xff]
    %v920 = vld [vmem:[#allocation6 + $0x5d0] sm:$0xff]
    %v921 = vld [vmem:[#allocation6 + $0x5d8] sm:$0xff]
    %v922 = vld [vmem:[#allocation6 + $0x5e0] sm:$0xff]
    %v923 = vld [vmem:[#allocation6 + $0x5e8] sm:$0xff]
    %v924 = vld [vmem:[#allocation6 + $0x5f0] sm:$0xff]
    %v925 = vld [vmem:[#allocation6 + $0x5f8] sm:$0xff]
    %v926 = vld [vmem:[#allocation6 + $0x600] sm:$0xff]
    %v927 = vld [vmem:[#allocation6 + $0x608] sm:$0xff]
    %v928 = vld [vmem:[#allocation6 + $0x610] sm:$0xff]
    %v929 = vld [vmem:[#allocation6 + $0x618] sm:$0xff]
    %v930 = vld [vmem:[#allocation6 + $0x620] sm:$0xff]
    %v931 = vld [vmem:[#allocation6 + $0x628] sm:$0xff]
    %v932 = vld [vmem:[#allocation6 + $0x630] sm:$0xff]
    %v933 = vld [vmem:[#allocation6 + $0x638] sm:$0xff]
    %v934 = vld [vmem:[#allocation6 + $0x640] sm:$0xff]
    %v935 = vld [vmem:[#allocation6 + $0x648] sm:$0xff]
    %v936 = vld [vmem:[#allocation6 + $0x650] sm:$0xff]
    %v937 = vld [vmem:[#allocation6 + $0x658] sm:$0xff]
    %v938 = vld [vmem:[#allocation6 + $0x660] sm:$0xff]
    %v939 = vld [vmem:[#allocation6 + $0x668] sm:$0xff]
    %v940 = vld [vmem:[#allocation6 + $0x670] sm:$0xff]
    %v941 = vld [vmem:[#allocation6 + $0x678] sm:$0xff]
    %v942 = vld [vmem:[#allocation6 + $0x680] sm:$0xff]
    %v943 = vld [vmem:[#allocation6 + $0x688] sm:$0xff]
    %v944 = vld [vmem:[#allocation6 + $0x690] sm:$0xff]
    %v945 = vld [vmem:[#allocation6 + $0x698] sm:$0xff]
    %v946 = vld [vmem:[#allocation6 + $0x6a0] sm:$0xff]
    %v947 = vld [vmem:[#allocation6 + $0x6a8] sm:$0xff]
    %v948 = vld [vmem:[#allocation6 + $0x6b0] sm:$0xff]
    %v949 = vld [vmem:[#allocation6 + $0x6b8] sm:$0xff]
    %v950 = vld [vmem:[#allocation6 + $0x6c0] sm:$0xff]
    %v951 = vld [vmem:[#allocation6 + $0x6c8] sm:$0xff]
    %v952 = vld [vmem:[#allocation6 + $0x6d0] sm:$0xff]
    %v953 = vld [vmem:[#allocation6 + $0x6d8] sm:$0xff]
    %v954 = vld [vmem:[#allocation6 + $0x6e0] sm:$0xff]
    %v955 = vld [vmem:[#allocation6 + $0x6e8] sm:$0xff]
    %v956 = vld [vmem:[#allocation6 + $0x6f0] sm:$0xff]
    %v957 = vld [vmem:[#allocation6 + $0x6f8] sm:$0xff]
    %v958 = vld [vmem:[#allocation6 + $0x700] sm:$0xff]
    %v959 = vld [vmem:[#allocation6 + $0x708] sm:$0xff]
    %v960 = vld [vmem:[#allocation6 + $0x710] sm:$0xff]
    %v961 = vld [vmem:[#allocation6 + $0x718] sm:$0xff]
    %v962 = vld [vmem:[#allocation6 + $0x720] sm:$0xff]
    %v963 = vld [vmem:[#allocation6 + $0x728] sm:$0xff]
    %v964 = vld [vmem:[#allocation6 + $0x730] sm:$0xff]
    %v965 = vld [vmem:[#allocation6 + $0x738] sm:$0xff]
    %v966 = vld [vmem:[#allocation6 + $0x740] sm:$0xff]
    %v967 = vld [vmem:[#allocation6 + $0x748] sm:$0xff]
    %v968 = vld [vmem:[#allocation6 + $0x750] sm:$0xff]
    %v969 = vld [vmem:[#allocation6 + $0x758] sm:$0xff]
    %v970 = vld [vmem:[#allocation6 + $0x760] sm:$0xff]
    %v971 = vld [vmem:[#allocation6 + $0x768] sm:$0xff]
    %v972 = vld [vmem:[#allocation6 + $0x770] sm:$0xff]
    %v973 = vld [vmem:[#allocation6 + $0x778] sm:$0xff]
    %v974 = vld [vmem:[#allocation6 + $0x780] sm:$0xff]
    %v975 = vld [vmem:[#allocation6 + $0x788] sm:$0xff]
    %v976 = vld [vmem:[#allocation6 + $0x790] sm:$0xff]
    %v977 = vld [vmem:[#allocation6 + $0x798] sm:$0xff]
    %v978 = vld [vmem:[#allocation6 + $0x7a0] sm:$0xff]
    %v979 = vld [vmem:[#allocation6 + $0x7a8] sm:$0xff]
    %v980 = vld [vmem:[#allocation6 + $0x7b0] sm:$0xff]
    %v981 = vld [vmem:[#allocation6 + $0x7b8] sm:$0xff]
    %v982 = vld [vmem:[#allocation6 + $0x7c0] sm:$0xff]
    %v983 = vld [vmem:[#allocation6 + $0x7c8] sm:$0xff]
    %v984 = vld [vmem:[#allocation6 + $0x7d0] sm:$0xff]
    %v985 = vld [vmem:[#allocation6 + $0x7d8] sm:$0xff]
    %v986 = vld [vmem:[#allocation6 + $0x7e0] sm:$0xff]
    %v987 = vld [vmem:[#allocation6 + $0x7e8] sm:$0xff]
    %v988 = vld [vmem:[#allocation6 + $0x7f0] sm:$0xff]
    %v989 = vld [vmem:[#allocation6 + $0x7f8] sm:$0xff]
    %v990 = vld [vmem:[#allocation6 + $0x800] sm:$0xff]
    %v991 = vld [vmem:[#allocation6 + $0x808] sm:$0xff]
    %v992 = vld [vmem:[#allocation6 + $0x810] sm:$0xff]
    %v993 = vld [vmem:[#allocation6 + $0x818] sm:$0xff]
    %v994 = vld [vmem:[#allocation6 + $0x820] sm:$0xff]
    %v995 = vld [vmem:[#allocation6 + $0x828] sm:$0xff]
    %v996 = vld [vmem:[#allocation6 + $0x830] sm:$0xff]
    %v997 = vld [vmem:[#allocation6 + $0x838] sm:$0xff]
    %v998 = vld [vmem:[#allocation6 + $0x840] sm:$0xff]
    %v999 = vld [vmem:[#allocation6 + $0x848] sm:$0xff]
    %v1000 = vld [vmem:[#allocation6 + $0x850] sm:$0xff]
    %v1001 = vld [vmem:[#allocation6 + $0x858] sm:$0xff]
    %v1002 = vld [vmem:[#allocation6 + $0x860] sm:$0xff]
    %v1003 = vld [vmem:[#allocation6 + $0x868] sm:$0xff]
    %v1004 = vld [vmem:[#allocation6 + $0x870] sm:$0xff]
    %v1005 = vld [vmem:[#allocation6 + $0x878] sm:$0xff]
    %v1006 = vld [vmem:[#allocation6 + $0x880] sm:$0xff]
    %v1007 = vld [vmem:[#allocation6 + $0x888] sm:$0xff]
    %v1008 = vld [vmem:[#allocation6 + $0x890] sm:$0xff]
    %v1009 = vld [vmem:[#allocation6 + $0x898] sm:$0xff]
    %v1010 = vld [vmem:[#allocation6 + $0x8a0] sm:$0xff]
    %v1011 = vld [vmem:[#allocation6 + $0x8a8] sm:$0xff]
    %v1012 = vld [vmem:[#allocation6 + $0x8b0] sm:$0xff]
    %v1013 = vld [vmem:[#allocation6 + $0x8b8] sm:$0xff]
    %v1014 = vld [vmem:[#allocation6 + $0x8c0] sm:$0xff]
    %v1015 = vld [vmem:[#allocation6 + $0x8c8] sm:$0xff]
    %v1016 = vld [vmem:[#allocation6 + $0x8d0] sm:$0xff]
    %v1017 = vld [vmem:[#allocation6 + $0x8d8] sm:$0xff]
    %v1018 = vld [vmem:[#allocation6 + $0x8e0] sm:$0xff]
    %v1019 = vld [vmem:[#allocation6 + $0x8e8] sm:$0xff]
    %v1020 = vld [vmem:[#allocation6 + $0x8f0] sm:$0xff]
    %v1021 = vld [vmem:[#allocation6 + $0x8f8] sm:$0xff]
    %v1022 = vld [vmem:[#allocation6 + $0x900] sm:$0xff]
    %v1023 = vld [vmem:[#allocation6 + $0x908] sm:$0xff]
    %v1024 = vld [vmem:[#allocation6 + $0x910] sm:$0xff]
    %v1025 = vld [vmem:[#allocation6 + $0x918] sm:$0xff]
    %v1026 = vld [vmem:[#allocation6 + $0x920] sm:$0xff]
    %v1027 = vld [vmem:[#allocation6 + $0x928] sm:$0xff]
    %v1028 = vld [vmem:[#allocation6 + $0x930] sm:$0xff]
    %v1029 = vld [vmem:[#allocation6 + $0x938] sm:$0xff]
    %v1030 = vld [vmem:[#allocation6 + $0x940] sm:$0xff]
    %v1031 = vld [vmem:[#allocation6 + $0x948] sm:$0xff]
    %v1032 = vld [vmem:[#allocation6 + $0x950] sm:$0xff]
    %v1033 = vld [vmem:[#allocation6 + $0x958] sm:$0xff]
    %v1034 = vld [vmem:[#allocation6 + $0x960] sm:$0xff]
    %v1035 = vld [vmem:[#allocation6 + $0x968] sm:$0xff]
    %v1036 = vld [vmem:[#allocation6 + $0x970] sm:$0xff]
    %v1037 = vld [vmem:[#allocation6 + $0x978] sm:$0xff]
    %v1038 = vld [vmem:[#allocation6 + $0x980] sm:$0xff]
    %v1039 = vld [vmem:[#allocation6 + $0x988] sm:$0xff]
    %v1040 = vld [vmem:[#allocation6 + $0x990] sm:$0xff]
    %v1041 = vld [vmem:[#allocation6 + $0x998] sm:$0xff]
    %v1042 = vld [vmem:[#allocation6 + $0x9a0] sm:$0xff]
    %v1043 = vld [vmem:[#allocation6 + $0x9a8] sm:$0xff]
    %v1044 = vld [vmem:[#allocation6 + $0x9b0] sm:$0xff]
    %v1045 = vld [vmem:[#allocation6 + $0x9b8] sm:$0xff]
    %v1046 = vld [vmem:[#allocation6 + $0x9c0] sm:$0xff]
    %v1047 = vld [vmem:[#allocation6 + $0x9c8] sm:$0xff]
    %v1048 = vld [vmem:[#allocation6 + $0x9d0] sm:$0xff]
    %v1049 = vld [vmem:[#allocation6 + $0x9d8] sm:$0xff]
    %v1050 = vld [vmem:[#allocation6 + $0x9e0] sm:$0xff]
    %v1051 = vld [vmem:[#allocation6 + $0x9e8] sm:$0xff]
    %v1052 = vld [vmem:[#allocation6 + $0x9f0] sm:$0xff]
    %v1053 = vld [vmem:[#allocation6 + $0x9f8] sm:$0xff]
    %v1054 = vld [vmem:[#allocation6 + $0xa00] sm:$0xff]
    %v1055 = vld [vmem:[#allocation6 + $0xa08] sm:$0xff]
    %v1056 = vld [vmem:[#allocation6 + $0xa10] sm:$0xff]
    %v1057 = vld [vmem:[#allocation6 + $0xa18] sm:$0xff]
    %v1058 = vld [vmem:[#allocation6 + $0xa20] sm:$0xff]
    %v1059 = vld [vmem:[#allocation6 + $0xa28] sm:$0xff]
    %v1060 = vld [vmem:[#allocation6 + $0xa30] sm:$0xff]
    %v1061 = vld [vmem:[#allocation6 + $0xa38] sm:$0xff]
    %v1062 = vld [vmem:[#allocation6 + $0xa40] sm:$0xff]
    %v1063 = vld [vmem:[#allocation6 + $0xa48] sm:$0xff]
    %v1064 = vld [vmem:[#allocation6 + $0xa50] sm:$0xff]
    %v1065 = vld [vmem:[#allocation6 + $0xa58] sm:$0xff]
    %v1066 = vld [vmem:[#allocation6 + $0xa60] sm:$0xff]
    %v1067 = vld [vmem:[#allocation6 + $0xa68] sm:$0xff]
    %v1068 = vld [vmem:[#allocation6 + $0xa70] sm:$0xff]
    %v1069 = vld [vmem:[#allocation6 + $0xa78] sm:$0xff]
    %v1070 = vld [vmem:[#allocation6 + $0xa80] sm:$0xff]
    %v1071 = vld [vmem:[#allocation6 + $0xa88] sm:$0xff]
    %v1072 = vld [vmem:[#allocation6 + $0xa90] sm:$0xff]
    %v1073 = vld [vmem:[#allocation6 + $0xa98] sm:$0xff]
    %v1074 = vld [vmem:[#allocation6 + $0xaa0] sm:$0xff]
    %v1075 = vld [vmem:[#allocation6 + $0xaa8] sm:$0xff]
    %v1076 = vld [vmem:[#allocation6 + $0xab0] sm:$0xff]
    %v1077 = vld [vmem:[#allocation6 + $0xab8] sm:$0xff]
    %v1078 = vld [vmem:[#allocation6 + $0xac0] sm:$0xff]
    %v1079 = vld [vmem:[#allocation6 + $0xac8] sm:$0xff]
    %v1080 = vld [vmem:[#allocation6 + $0xad0] sm:$0xff]
    %v1081 = vld [vmem:[#allocation6 + $0xad8] sm:$0xff]
    %v1082 = vld [vmem:[#allocation6 + $0xae0] sm:$0xff]
    %v1083 = vld [vmem:[#allocation6 + $0xae8] sm:$0xff]
    %v1084 = vld [vmem:[#allocation6 + $0xaf0] sm:$0xff]
    %v1085 = vld [vmem:[#allocation6 + $0xaf8] sm:$0xff]
    %v1086 = vld [vmem:[#allocation6 + $0xb00] sm:$0xff]
    %v1087 = vld [vmem:[#allocation6 + $0xb08] sm:$0xff]
    %v1088 = vld [vmem:[#allocation6 + $0xb10] sm:$0xff]
    %v1089 = vld [vmem:[#allocation6 + $0xb18] sm:$0xff]
    %v1090 = vld [vmem:[#allocation6 + $0xb20] sm:$0xff]
    %v1091 = vld [vmem:[#allocation6 + $0xb28] sm:$0xff]
    %v1092 = vld [vmem:[#allocation6 + $0xb30] sm:$0xff]
    %v1093 = vld [vmem:[#allocation6 + $0xb38] sm:$0xff]
    %v1094 = vld [vmem:[#allocation6 + $0xb40] sm:$0xff]
    %v1095 = vld [vmem:[#allocation6 + $0xb48] sm:$0xff]
    %v1096 = vld [vmem:[#allocation6 + $0xb50] sm:$0xff]
    %v1097 = vld [vmem:[#allocation6 + $0xb58] sm:$0xff]
    %v1098 = vld [vmem:[#allocation6 + $0xb60] sm:$0xff]
    %v1099 = vld [vmem:[#allocation6 + $0xb68] sm:$0xff]
    %v1100 = vld [vmem:[#allocation6 + $0xb70] sm:$0xff]
    %v1101 = vld [vmem:[#allocation6 + $0xb78] sm:$0xff]
    %v1102 = vld [vmem:[#allocation6 + $0xb80] sm:$0xff]
    %v1103 = vld [vmem:[#allocation6 + $0xb88] sm:$0xff]
    %v1104 = vld [vmem:[#allocation6 + $0xb90] sm:$0xff]
    %v1105 = vld [vmem:[#allocation6 + $0xb98] sm:$0xff]
    %v1106 = vld [vmem:[#allocation6 + $0xba0] sm:$0xff]
    %v1107 = vld [vmem:[#allocation6 + $0xba8] sm:$0xff]
    %v1108 = vld [vmem:[#allocation6 + $0xbb0] sm:$0xff]
    %v1109 = vld [vmem:[#allocation6 + $0xbb8] sm:$0xff]
    %v1110 = vld [vmem:[#allocation6 + $0xbc0] sm:$0xff]
    %v1111 = vld [vmem:[#allocation6 + $0xbc8] sm:$0xff]
    %v1112 = vld [vmem:[#allocation6 + $0xbd0] sm:$0xff]
    %v1113 = vld [vmem:[#allocation6 + $0xbd8] sm:$0xff]
    %v1114 = vld [vmem:[#allocation6 + $0xbe0] sm:$0xff]
    %v1115 = vld [vmem:[#allocation6 + $0xbe8] sm:$0xff]
    %v1116 = vld [vmem:[#allocation6 + $0xbf0] sm:$0xff]
    %v1117 = vld [vmem:[#allocation6 + $0xbf8] sm:$0xff]
    %v1118 = vld [vmem:[#allocation6 + $0xc00] sm:$0xff]
    %v1119 = vld [vmem:[#allocation6 + $0xc08] sm:$0xff]
    %v1120 = vld [vmem:[#allocation6 + $0xc10] sm:$0xff]
    %v1121 = vld [vmem:[#allocation6 + $0xc18] sm:$0xff]
    %v1122 = vld [vmem:[#allocation6 + $0xc20] sm:$0xff]
    %v1123 = vld [vmem:[#allocation6 + $0xc28] sm:$0xff]
    %v1124 = vld [vmem:[#allocation6 + $0xc30] sm:$0xff]
    %v1125 = vld [vmem:[#allocation6 + $0xc38] sm:$0xff]
    %v1126 = vld [vmem:[#allocation6 + $0xc40] sm:$0xff]
    %v1127 = vld [vmem:[#allocation6 + $0xc48] sm:$0xff]
    %v1128 = vld [vmem:[#allocation6 + $0xc50] sm:$0xff]
    %v1129 = vld [vmem:[#allocation6 + $0xc58] sm:$0xff]
    %v1130 = vld [vmem:[#allocation6 + $0xc60] sm:$0xff]
    %v1131 = vld [vmem:[#allocation6 + $0xc68] sm:$0xff]
    %v1132 = vld [vmem:[#allocation6 + $0xc70] sm:$0xff]
    %v1133 = vld [vmem:[#allocation6 + $0xc78] sm:$0xff]
    %v1134 = vld [vmem:[#allocation6 + $0xc80] sm:$0xff]
    %v1135 = vld [vmem:[#allocation6 + $0xc88] sm:$0xff]
    %v1136 = vld [vmem:[#allocation6 + $0xc90] sm:$0xff]
    %v1137 = vld [vmem:[#allocation6 + $0xc98] sm:$0xff]
    %v1138 = vld [vmem:[#allocation6 + $0xca0] sm:$0xff]
    %v1139 = vld [vmem:[#allocation6 + $0xca8] sm:$0xff]
    %v1140 = vld [vmem:[#allocation6 + $0xcb0] sm:$0xff]
    %v1141 = vld [vmem:[#allocation6 + $0xcb8] sm:$0xff]
    %v1142 = vld [vmem:[#allocation6 + $0xcc0] sm:$0xff]
    %v1143 = vld [vmem:[#allocation6 + $0xcc8] sm:$0xff]
    %v1144 = vld [vmem:[#allocation6 + $0xcd0] sm:$0xff]
    %v1145 = vld [vmem:[#allocation6 + $0xcd8] sm:$0xff]
    %v1146 = vld [vmem:[#allocation6 + $0xce0] sm:$0xff]
    %v1147 = vld [vmem:[#allocation6 + $0xce8] sm:$0xff]
    %v1148 = vld [vmem:[#allocation6 + $0xcf0] sm:$0xff]
    %v1149 = vld [vmem:[#allocation6 + $0xcf8] sm:$0xff]
    %v1150 = vld [vmem:[#allocation6 + $0xd00] sm:$0xff]
    %v1151 = vld [vmem:[#allocation6 + $0xd08] sm:$0xff]
    %v1152 = vld [vmem:[#allocation6 + $0xd10] sm:$0xff]
    %v1153 = vld [vmem:[#allocation6 + $0xd18] sm:$0xff]
    %v1154 = vld [vmem:[#allocation6 + $0xd20] sm:$0xff]
    %v1155 = vld [vmem:[#allocation6 + $0xd28] sm:$0xff]
    %v1156 = vld [vmem:[#allocation6 + $0xd30] sm:$0xff]
    %v1157 = vld [vmem:[#allocation6 + $0xd38] sm:$0xff]
    %v1158 = vld [vmem:[#allocation6 + $0xd40] sm:$0xff]
    %v1159 = vld [vmem:[#allocation6 + $0xd48] sm:$0xff]
    %v1160 = vld [vmem:[#allocation6 + $0xd50] sm:$0xff]
    %v1161 = vld [vmem:[#allocation6 + $0xd58] sm:$0xff]
    %v1162 = vld [vmem:[#allocation6 + $0xd60] sm:$0xff]
    %v1163 = vld [vmem:[#allocation6 + $0xd68] sm:$0xff]
    %v1164 = vld [vmem:[#allocation6 + $0xd70] sm:$0xff]
    %v1165 = vld [vmem:[#allocation6 + $0xd78] sm:$0xff]
    %v1166 = vld [vmem:[#allocation6 + $0xd80] sm:$0xff]
    %v1167 = vld [vmem:[#allocation6 + $0xd88] sm:$0xff]
    %v1168 = vld [vmem:[#allocation6 + $0xd90] sm:$0xff]
    %v1169 = vld [vmem:[#allocation6 + $0xd98] sm:$0xff]
    %v1170 = vld [vmem:[#allocation6 + $0xda0] sm:$0xff]
    %v1171 = vld [vmem:[#allocation6 + $0xda8] sm:$0xff]
    %v1172 = vld [vmem:[#allocation6 + $0xdb0] sm:$0xff]
    %v1173 = vld [vmem:[#allocation6 + $0xdb8] sm:$0xff]
    %v1174 = vld [vmem:[#allocation6 + $0xdc0] sm:$0xff]
    %v1175 = vld [vmem:[#allocation6 + $0xdc8] sm:$0xff]
    %v1176 = vld [vmem:[#allocation6 + $0xdd0] sm:$0xff]
    %v1177 = vld [vmem:[#allocation6 + $0xdd8] sm:$0xff]
    %v1178 = vld [vmem:[#allocation6 + $0xde0] sm:$0xff]
    %v1179 = vld [vmem:[#allocation6 + $0xde8] sm:$0xff]
    %v1180 = vld [vmem:[#allocation6 + $0xdf0] sm:$0xff]
    %v1181 = vld [vmem:[#allocation6 + $0xdf8] sm:$0xff]
    %v1182 = vld [vmem:[#allocation6 + $0xe00] sm:$0xff]
    %v1183 = vld [vmem:[#allocation6 + $0xe08] sm:$0xff]
    %v1184 = vld [vmem:[#allocation6 + $0xe10] sm:$0xff]
    %v1185 = vld [vmem:[#allocation6 + $0xe18] sm:$0xff]
    %v1186 = vld [vmem:[#allocation6 + $0xe20] sm:$0xff]
    %v1187 = vld [vmem:[#allocation6 + $0xe28] sm:$0xff]
    %v1188 = vld [vmem:[#allocation6 + $0xe30] sm:$0xff]
    %v1189 = vld [vmem:[#allocation6 + $0xe38] sm:$0xff]
    %v1190 = vld [vmem:[#allocation6 + $0xe40] sm:$0xff]
    %v1191 = vld [vmem:[#allocation6 + $0xe48] sm:$0xff]
    %v1192 = vld [vmem:[#allocation6 + $0xe50] sm:$0xff]
    %v1193 = vld [vmem:[#allocation6 + $0xe58] sm:$0xff]
    %v1194 = vld [vmem:[#allocation6 + $0xe60] sm:$0xff]
    %v1195 = vld [vmem:[#allocation6 + $0xe68] sm:$0xff]
    %v1196 = vld [vmem:[#allocation6 + $0xe70] sm:$0xff]
    %v1197 = vld [vmem:[#allocation6 + $0xe78] sm:$0xff]
    %v1198 = vld [vmem:[#allocation6 + $0xe80] sm:$0xff]
    %v1199 = vld [vmem:[#allocation6 + $0xe88] sm:$0xff]
    %v1200 = vld [vmem:[#allocation6 + $0xe90] sm:$0xff]
    %v1201 = vld [vmem:[#allocation6 + $0xe98] sm:$0xff]
    %v1202 = vld [vmem:[#allocation6 + $0xea0] sm:$0xff]
    %v1203 = vld [vmem:[#allocation6 + $0xea8] sm:$0xff]
    %v1204 = vld [vmem:[#allocation6 + $0xeb0] sm:$0xff]
    %v1205 = vld [vmem:[#allocation6 + $0xeb8] sm:$0xff]
    %v1206 = vld [vmem:[#allocation6 + $0xec0] sm:$0xff]
    %v1207 = vld [vmem:[#allocation6 + $0xec8] sm:$0xff]
    %v1208 = vld [vmem:[#allocation6 + $0xed0] sm:$0xff]
    %v1209 = vld [vmem:[#allocation6 + $0xed8] sm:$0xff]
    %v1210 = vld [vmem:[#allocation6 + $0xee0] sm:$0xff]
    %v1211 = vld [vmem:[#allocation6 + $0xee8] sm:$0xff]
    %v1212 = vld [vmem:[#allocation6 + $0xef0] sm:$0xff]
    %v1213 = vld [vmem:[#allocation6 + $0xef8] sm:$0xff]
    %v1214 = vld [vmem:[#allocation6 + $0xf00] sm:$0xff]
    %v1215 = vld [vmem:[#allocation6 + $0xf08] sm:$0xff]
    %v1216 = vld [vmem:[#allocation6 + $0xf10] sm:$0xff]
    %v1217 = vld [vmem:[#allocation6 + $0xf18] sm:$0xff]
    %v1218 = vld [vmem:[#allocation6 + $0xf20] sm:$0xff]
    %v1219 = vld [vmem:[#allocation6 + $0xf28] sm:$0xff]
    %v1220 = vld [vmem:[#allocation6 + $0xf30] sm:$0xff]
    %v1221 = vld [vmem:[#allocation6 + $0xf38] sm:$0xff]
    %v1222 = vld [vmem:[#allocation6 + $0xf40] sm:$0xff]
    %v1223 = vld [vmem:[#allocation6 + $0xf48] sm:$0xff]
    %v1224 = vld [vmem:[#allocation6 + $0xf50] sm:$0xff]
    %v1225 = vld [vmem:[#allocation6 + $0xf58] sm:$0xff]
    %v1226 = vld [vmem:[#allocation6 + $0xf60] sm:$0xff]
    %v1227 = vld [vmem:[#allocation6 + $0xf68] sm:$0xff]
    %v1228 = vld [vmem:[#allocation6 + $0xf70] sm:$0xff]
    %v1229 = vld [vmem:[#allocation6 + $0xf78] sm:$0xff]
    %v1230 = vld [vmem:[#allocation6 + $0xf80] sm:$0xff]
    %v1231 = vld [vmem:[#allocation6 + $0xf88] sm:$0xff]
    %v1232 = vld [vmem:[#allocation6 + $0xf90] sm:$0xff]
    %v1233 = vld [vmem:[#allocation6 + $0xf98] sm:$0xff]
    %v1234 = vld [vmem:[#allocation6 + $0xfa0] sm:$0xff]
    %v1235 = vld [vmem:[#allocation6 + $0xfa8] sm:$0xff]
    %v1236 = vld [vmem:[#allocation6 + $0xfb0] sm:$0xff]
    %v1237 = vld [vmem:[#allocation6 + $0xfb8] sm:$0xff]
    %v1238 = vld [vmem:[#allocation6 + $0xfc0] sm:$0xff]
    %v1239 = vld [vmem:[#allocation6 + $0xfc8] sm:$0xff]
    %v1240 = vld [vmem:[#allocation6 + $0xfd0] sm:$0xff]
    %v1241 = vld [vmem:[#allocation6 + $0xfd8] sm:$0xff]
    %v1242 = vld [vmem:[#allocation6 + $0xfe0] sm:$0xff]
    %v1243 = vld [vmem:[#allocation6 + $0xfe8] sm:$0xff]
    %v1244 = vld [vmem:[#allocation6 + $0xff0] sm:$0xff]
    %v1245 = vld [vmem:[#allocation6 + $0xff8] sm:$0xff]
    %v1246 = vld [vmem:[#allocation6 + $0x1000] sm:$0xff]
    %v1247 = vld [vmem:[#allocation6 + $0x1008] sm:$0xff]
    %v1248 = vld [vmem:[#allocation6 + $0x1010] sm:$0xff]
    %v1249 = vld [vmem:[#allocation6 + $0x1018] sm:$0xff]
    %v1250 = vld [vmem:[#allocation6 + $0x1020] sm:$0xff]
    %v1251 = vld [vmem:[#allocation6 + $0x1028] sm:$0xff]
    %v1252 = vld [vmem:[#allocation6 + $0x1030] sm:$0xff]
    %v1253 = vld [vmem:[#allocation6 + $0x1038] sm:$0xff]
    %v1254 = vld [vmem:[#allocation6 + $0x1040] sm:$0xff]
    %v1255 = vld [vmem:[#allocation6 + $0x1048] sm:$0xff]
    %v1256 = vld [vmem:[#allocation6 + $0x1050] sm:$0xff]
    %v1257 = vld [vmem:[#allocation6 + $0x1058] sm:$0xff]
    %v1258 = vld [vmem:[#allocation6 + $0x1060] sm:$0xff]
    %v1259 = vld [vmem:[#allocation6 + $0x1068] sm:$0xff]
    %v1260 = vld [vmem:[#allocation6 + $0x1070] sm:$0xff]
    %v1261 = vld [vmem:[#allocation6 + $0x1078] sm:$0xff]
    %v1262 = vld [vmem:[#allocation6 + $0x1080] sm:$0xff]
    %v1263 = vld [vmem:[#allocation6 + $0x1088] sm:$0xff]
    %v1264 = vld [vmem:[#allocation6 + $0x1090] sm:$0xff]
    %v1265 = vld [vmem:[#allocation6 + $0x1098] sm:$0xff]
    %v1266 = vld [vmem:[#allocation6 + $0x10a0] sm:$0xff]
    %v1267 = vld [vmem:[#allocation6 + $0x10a8] sm:$0xff]
    %v1268 = vld [vmem:[#allocation6 + $0x10b0] sm:$0xff]
    %v1269 = vld [vmem:[#allocation6 + $0x10b8] sm:$0xff]
    %v1270 = vld [vmem:[#allocation6 + $0x10c0] sm:$0xff]
    %v1271 = vld [vmem:[#allocation6 + $0x10c8] sm:$0xff]
    %v1272 = vld [vmem:[#allocation6 + $0x10d0] sm:$0xff]
    %v1273 = vld [vmem:[#allocation6 + $0x10d8] sm:$0xff]
    %v1274 = vld [vmem:[#allocation6 + $0x10e0] sm:$0xff]
    %v1275 = vld [vmem:[#allocation6 + $0x10e8] sm:$0xff]
    %v1276 = vld [vmem:[#allocation6 + $0x10f0] sm:$0xff]
    %v1277 = vld [vmem:[#allocation6 + $0x10f8] sm:$0xff]
    %v1278 = vld [vmem:[#allocation6 + $0x1100] sm:$0xff]
    %v1279 = vld [vmem:[#allocation6 + $0x1108] sm:$0xff]
    %v1280 = vld [vmem:[#allocation6 + $0x1110] sm:$0xff]
    %v1281 = vld [vmem:[#allocation6 + $0x1118] sm:$0xff]
    %v1282 = vld [vmem:[#allocation6 + $0x1120] sm:$0xff]
    %v1283 = vld [vmem:[#allocation6 + $0x1128] sm:$0xff]
    %v1284 = vld [vmem:[#allocation6 + $0x1130] sm:$0xff]
    %v1285 = vld [vmem:[#allocation6 + $0x1138] sm:$0xff]
    %v1286 = vld [vmem:[#allocation6 + $0x1140] sm:$0xff]
    %v1287 = vld [vmem:[#allocation6 + $0x1148] sm:$0xff]
    %v1288 = vld [vmem:[#allocation6 + $0x1150] sm:$0xff]
    %v1289 = vld [vmem:[#allocation6 + $0x1158] sm:$0xff]
    %v1290 = vld [vmem:[#allocation6 + $0x1160] sm:$0xff]
    %v1291 = vld [vmem:[#allocation6 + $0x1168] sm:$0xff]
    %v1292 = vld [vmem:[#allocation6 + $0x1170] sm:$0xff]
    %v1293 = vld [vmem:[#allocation6 + $0x1178] sm:$0xff]
    %v1294 = vld [vmem:[#allocation6 + $0x1180] sm:$0xff]
    %v1295 = vld [vmem:[#allocation6 + $0x1188] sm:$0xff]
    %v1296 = vld [vmem:[#allocation6 + $0x1190] sm:$0xff]
    %v1297 = vld [vmem:[#allocation6 + $0x1198] sm:$0xff]
    %v1298 = vld [vmem:[#allocation6 + $0x11a0] sm:$0xff]
    %v1299 = vld [vmem:[#allocation6 + $0x11a8] sm:$0xff]
    %v1300 = vld [vmem:[#allocation6 + $0x11b0] sm:$0xff]
    %v1301 = vld [vmem:[#allocation6 + $0x11b8] sm:$0xff]
    %v1302 = vld [vmem:[#allocation6 + $0x11c0] sm:$0xff]
    %v1303 = vld [vmem:[#allocation6 + $0x11c8] sm:$0xff]
    %v1304 = vld [vmem:[#allocation6 + $0x11d0] sm:$0xff]
    %v1305 = vld [vmem:[#allocation6 + $0x11d8] sm:$0xff]
    %v1306 = vld [vmem:[#allocation6 + $0x11e0] sm:$0xff]
    %v1307 = vld [vmem:[#allocation6 + $0x11e8] sm:$0xff]
    %v1308 = vld [vmem:[#allocation6 + $0x11f0] sm:$0xff]
    %v1309 = vld [vmem:[#allocation6 + $0x11f8] sm:$0xff]
    %v1310 = vld [vmem:[#allocation6 + $0x1200] sm:$0xff]
    %v1311 = vld [vmem:[#allocation6 + $0x1208] sm:$0xff]
    %v1312 = vld [vmem:[#allocation6 + $0x1210] sm:$0xff]
    %v1313 = vld [vmem:[#allocation6 + $0x1218] sm:$0xff]
    %v1314 = vld [vmem:[#allocation6 + $0x1220] sm:$0xff]
    %v1315 = vld [vmem:[#allocation6 + $0x1228] sm:$0xff]
    %v1316 = vld [vmem:[#allocation6 + $0x1230] sm:$0xff]
    %v1317 = vld [vmem:[#allocation6 + $0x1238] sm:$0xff]
    %v1318 = vld [vmem:[#allocation6 + $0x1240] sm:$0xff]
    %v1319 = vld [vmem:[#allocation6 + $0x1248] sm:$0xff]
    %v1320 = vld [vmem:[#allocation6 + $0x1250] sm:$0xff]
    %v1321 = vld [vmem:[#allocation6 + $0x1258] sm:$0xff]
    %v1322 = vld [vmem:[#allocation6 + $0x1260] sm:$0xff]
    %v1323 = vld [vmem:[#allocation6 + $0x1268] sm:$0xff]
    %v1324 = vld [vmem:[#allocation6 + $0x1270] sm:$0xff]
    %v1325 = vld [vmem:[#allocation6 + $0x1278] sm:$0xff]
    %v1326 = vld [vmem:[#allocation6 + $0x1280] sm:$0xff]
    %v1327 = vld [vmem:[#allocation6 + $0x1288] sm:$0xff]
    %v1328 = vld [vmem:[#allocation6 + $0x1290] sm:$0xff]
    %v1329 = vld [vmem:[#allocation6 + $0x1298] sm:$0xff]
    %v1330 = vld [vmem:[#allocation6 + $0x12a0] sm:$0xff]
    %v1331 = vld [vmem:[#allocation6 + $0x12a8] sm:$0xff]
    %v1332 = vld [vmem:[#allocation6 + $0x12b0] sm:$0xff]
    %v1333 = vld [vmem:[#allocation6 + $0x12b8] sm:$0xff]
    %v1334 = vld [vmem:[#allocation6 + $0x12c0] sm:$0xff]
    %v1335 = vld [vmem:[#allocation6 + $0x12c8] sm:$0xff]
    %v1336 = vld [vmem:[#allocation6 + $0x12d0] sm:$0xff]
    %v1337 = vld [vmem:[#allocation6 + $0x12d8] sm:$0xff]
    %v1338 = vld [vmem:[#allocation6 + $0x12e0] sm:$0xff]
    %v1339 = vld [vmem:[#allocation6 + $0x12e8] sm:$0xff]
    %v1340 = vld [vmem:[#allocation6 + $0x12f0] sm:$0xff]
    %v1341 = vld [vmem:[#allocation6 + $0x12f8] sm:$0xff]
    %v1342 = vld [vmem:[#allocation6 + $0x1300] sm:$0xff]
    %v1343 = vld [vmem:[#allocation6 + $0x1308] sm:$0xff]
    %v1344 = vld [vmem:[#allocation6 + $0x1310] sm:$0xff]
    %v1345 = vld [vmem:[#allocation6 + $0x1318] sm:$0xff]
    %v1346 = vld [vmem:[#allocation6 + $0x1320] sm:$0xff]
    %v1347 = vld [vmem:[#allocation6 + $0x1328] sm:$0xff]
    %v1348 = vld [vmem:[#allocation6 + $0x1330] sm:$0xff]
    %v1349 = vld [vmem:[#allocation6 + $0x1338] sm:$0xff]
    %v1350 = vld [vmem:[#allocation6 + $0x1340] sm:$0xff]
    %v1351 = vld [vmem:[#allocation6 + $0x1348] sm:$0xff]
    %v1352 = vld [vmem:[#allocation6 + $0x1350] sm:$0xff]
    %v1353 = vld [vmem:[#allocation6 + $0x1358] sm:$0xff]
    %v1354 = vld [vmem:[#allocation6 + $0x1360] sm:$0xff]
    %v1355 = vld [vmem:[#allocation6 + $0x1368] sm:$0xff]
    %v1356 = vld [vmem:[#allocation6 + $0x1370] sm:$0xff]
    %v1357 = vld [vmem:[#allocation6 + $0x1378] sm:$0xff]
    %v1358 = vld [vmem:[#allocation6 + $0x1380] sm:$0xff]
    %v1359 = vld [vmem:[#allocation6 + $0x1388] sm:$0xff]
    %v1360 = vld [vmem:[#allocation6 + $0x1390] sm:$0xff]
    %v1361 = vld [vmem:[#allocation6 + $0x1398] sm:$0xff]
    %v1362 = vld [vmem:[#allocation6 + $0x13a0] sm:$0xff]
    %v1363 = vld [vmem:[#allocation6 + $0x13a8] sm:$0xff]
    %v1364 = vld [vmem:[#allocation6 + $0x13b0] sm:$0xff]
    %v1365 = vld [vmem:[#allocation6 + $0x13b8] sm:$0xff]
    %v1366 = vld [vmem:[#allocation6 + $0x13c0] sm:$0xff]
    %v1367 = vld [vmem:[#allocation6 + $0x13c8] sm:$0xff]
    %v1368 = vld [vmem:[#allocation6 + $0x13d0] sm:$0xff]
    %v1369 = vld [vmem:[#allocation6 + $0x13d8] sm:$0xff]
    %v1370 = vld [vmem:[#allocation6 + $0x13e0] sm:$0xff]
    %v1371 = vld [vmem:[#allocation6 + $0x13e8] sm:$0xff]
    %v1372 = vld [vmem:[#allocation6 + $0x13f0] sm:$0xff]
    %v1373 = vld [vmem:[#allocation6 + $0x13f8] sm:$0xff]
    %v1374 = vld [vmem:[#allocation6 + $0x1400] sm:$0xff]
    %v1375 = vld [vmem:[#allocation6 + $0x1408] sm:$0xff]
    %v1376 = vld [vmem:[#allocation6 + $0x1410] sm:$0xff]
    %v1377 = vld [vmem:[#allocation6 + $0x1418] sm:$0xff]
    %v1378 = vld [vmem:[#allocation6 + $0x1420] sm:$0xff]
    %v1379 = vld [vmem:[#allocation6 + $0x1428] sm:$0xff]
    %v1380 = vld [vmem:[#allocation6 + $0x1430] sm:$0xff]
    %v1381 = vld [vmem:[#allocation6 + $0x1438] sm:$0xff]
    %v1382 = vld [vmem:[#allocation6 + $0x1440] sm:$0xff]
    %v1383 = vld [vmem:[#allocation6 + $0x1448] sm:$0xff]
    %v1384 = vld [vmem:[#allocation6 + $0x1450] sm:$0xff]
    %v1385 = vld [vmem:[#allocation6 + $0x1458] sm:$0xff]
    %v1386 = vld [vmem:[#allocation6 + $0x1460] sm:$0xff]
    %v1387 = vld [vmem:[#allocation6 + $0x1468] sm:$0xff]
    %v1388 = vld [vmem:[#allocation6 + $0x1470] sm:$0xff]
    %v1389 = vld [vmem:[#allocation6 + $0x1478] sm:$0xff]
    %v1390 = vld [vmem:[#allocation6 + $0x1480] sm:$0xff]
    %v1391 = vld [vmem:[#allocation6 + $0x1488] sm:$0xff]
    %v1392 = vld [vmem:[#allocation6 + $0x1490] sm:$0xff]
    %v1393 = vld [vmem:[#allocation6 + $0x1498] sm:$0xff]
    %v1394 = vld [vmem:[#allocation6 + $0x14a0] sm:$0xff]
    %v1395 = vld [vmem:[#allocation6 + $0x14a8] sm:$0xff]
    %v1396 = vld [vmem:[#allocation6 + $0x14b0] sm:$0xff]
    %v1397 = vld [vmem:[#allocation6 + $0x14b8] sm:$0xff]
    %v1398 = vld [vmem:[#allocation6 + $0x14c0] sm:$0xff]
    %v1399 = vld [vmem:[#allocation6 + $0x14c8] sm:$0xff]
    %v1400 = vld [vmem:[#allocation6 + $0x14d0] sm:$0xff]
    %v1401 = vld [vmem:[#allocation6 + $0x14d8] sm:$0xff]
    %v1402 = vld [vmem:[#allocation6 + $0x14e0] sm:$0xff]
    %v1403 = vld [vmem:[#allocation6 + $0x14e8] sm:$0xff]
    %v1404 = vld [vmem:[#allocation6 + $0x14f0] sm:$0xff]
    %v1405 = vld [vmem:[#allocation6 + $0x14f8] sm:$0xff]
    %v1406 = vld [vmem:[#allocation6 + $0x1500] sm:$0xff]
    %v1407 = vld [vmem:[#allocation6 + $0x1508] sm:$0xff]
    %v1408 = vld [vmem:[#allocation6 + $0x1510] sm:$0xff]
    %v1409 = vld [vmem:[#allocation6 + $0x1518] sm:$0xff]
    %v1410 = vld [vmem:[#allocation6 + $0x1520] sm:$0xff]
    %v1411 = vld [vmem:[#allocation6 + $0x1528] sm:$0xff]
    %v1412 = vld [vmem:[#allocation6 + $0x1530] sm:$0xff]
    %v1413 = vld [vmem:[#allocation6 + $0x1538] sm:$0xff]
    %v1414 = vld [vmem:[#allocation6 + $0x1540] sm:$0xff]
    %v1415 = vld [vmem:[#allocation6 + $0x1548] sm:$0xff]
    %v1416 = vld [vmem:[#allocation6 + $0x1550] sm:$0xff]
    %v1417 = vld [vmem:[#allocation6 + $0x1558] sm:$0xff]
    %v1418 = vld [vmem:[#allocation6 + $0x1560] sm:$0xff]
    %v1419 = vld [vmem:[#allocation6 + $0x1568] sm:$0xff]
    %v1420 = vld [vmem:[#allocation6 + $0x1570] sm:$0xff]
    %v1421 = vld [vmem:[#allocation6 + $0x1578] sm:$0xff]
    %v1422 = vld [vmem:[#allocation6 + $0x1580] sm:$0xff]
    %v1423 = vld [vmem:[#allocation6 + $0x1588] sm:$0xff]
    %v1424 = vld [vmem:[#allocation6 + $0x1590] sm:$0xff]
    %v1425 = vld [vmem:[#allocation6 + $0x1598] sm:$0xff]
    %v1426 = vld [vmem:[#allocation6 + $0x15a0] sm:$0xff]
    %v1427 = vld [vmem:[#allocation6 + $0x15a8] sm:$0xff]
    %v1428 = vld [vmem:[#allocation6 + $0x15b0] sm:$0xff]
    %v1429 = vld [vmem:[#allocation6 + $0x15b8] sm:$0xff]
    %v1430 = vld [vmem:[#allocation6 + $0x15c0] sm:$0xff]
    %v1431 = vld [vmem:[#allocation6 + $0x15c8] sm:$0xff]
    %v1432 = vld [vmem:[#allocation6 + $0x15d0] sm:$0xff]
    %v1433 = vld [vmem:[#allocation6 + $0x15d8] sm:$0xff]
    %v1434 = vld [vmem:[#allocation6 + $0x15e0] sm:$0xff]
    %v1435 = vld [vmem:[#allocation6 + $0x15e8] sm:$0xff]
    %v1436 = vld [vmem:[#allocation6 + $0x15f0] sm:$0xff]
    %v1437 = vld [vmem:[#allocation6 + $0x15f8] sm:$0xff]
    %v1438 = vld [vmem:[#allocation6 + $0x1600] sm:$0xff]
    %v1439 = vld [vmem:[#allocation6 + $0x1608] sm:$0xff]
    %v1440 = vld [vmem:[#allocation6 + $0x1610] sm:$0xff]
    %v1441 = vld [vmem:[#allocation6 + $0x1618] sm:$0xff]
    %v1442 = vld [vmem:[#allocation6 + $0x1620] sm:$0xff]
    %v1443 = vld [vmem:[#allocation6 + $0x1628] sm:$0xff]
    %v1444 = vld [vmem:[#allocation6 + $0x1630] sm:$0xff]
    %v1445 = vld [vmem:[#allocation6 + $0x1638] sm:$0xff]
    %v1446 = vld [vmem:[#allocation6 + $0x1640] sm:$0xff]
    %v1447 = vld [vmem:[#allocation6 + $0x1648] sm:$0xff]
    %v1448 = vld [vmem:[#allocation6 + $0x1650] sm:$0xff]
    %v1449 = vld [vmem:[#allocation6 + $0x1658] sm:$0xff]
    %v1450 = vld [vmem:[#allocation6 + $0x1660] sm:$0xff]
    %v1451 = vld [vmem:[#allocation6 + $0x1668] sm:$0xff]
    %v1452 = vld [vmem:[#allocation6 + $0x1670] sm:$0xff]
    %v1453 = vld [vmem:[#allocation6 + $0x1678] sm:$0xff]
    %v1454 = vld [vmem:[#allocation6 + $0x1680] sm:$0xff]
    %v1455 = vld [vmem:[#allocation6 + $0x1688] sm:$0xff]
    %v1456 = vld [vmem:[#allocation6 + $0x1690] sm:$0xff]
    %v1457 = vld [vmem:[#allocation6 + $0x1698] sm:$0xff]
    %v1458 = vld [vmem:[#allocation6 + $0x16a0] sm:$0xff]
    %v1459 = vld [vmem:[#allocation6 + $0x16a8] sm:$0xff]
    %v1460 = vld [vmem:[#allocation6 + $0x16b0] sm:$0xff]
    %v1461 = vld [vmem:[#allocation6 + $0x16b8] sm:$0xff]
    %v1462 = vld [vmem:[#allocation6 + $0x16c0] sm:$0xff]
    %v1463 = vld [vmem:[#allocation6 + $0x16c8] sm:$0xff]
    %v1464 = vld [vmem:[#allocation6 + $0x16d0] sm:$0xff]
    %v1465 = vld [vmem:[#allocation6 + $0x16d8] sm:$0xff]
    %v1466 = vld [vmem:[#allocation6 + $0x16e0] sm:$0xff]
    %v1467 = vld [vmem:[#allocation6 + $0x16e8] sm:$0xff]
    %v1468 = vld [vmem:[#allocation6 + $0x16f0] sm:$0xff]
    %v1469 = vld [vmem:[#allocation6 + $0x16f8] sm:$0xff]
    %v1470 = vld [vmem:[#allocation6 + $0x1700] sm:$0xff]
    %v1471 = vld [vmem:[#allocation6 + $0x1708] sm:$0xff]
    %v1472 = vld [vmem:[#allocation6 + $0x1710] sm:$0xff]
    %v1473 = vld [vmem:[#allocation6 + $0x1718] sm:$0xff]
    %v1474 = vld [vmem:[#allocation6 + $0x1720] sm:$0xff]
    %v1475 = vld [vmem:[#allocation6 + $0x1728] sm:$0xff]
    %v1476 = vld [vmem:[#allocation6 + $0x1730] sm:$0xff]
    %v1477 = vld [vmem:[#allocation6 + $0x1738] sm:$0xff]
    %v1478 = vld [vmem:[#allocation6 + $0x1740] sm:$0xff]
    %v1479 = vld [vmem:[#allocation6 + $0x1748] sm:$0xff]
    %v1480 = vld [vmem:[#allocation6 + $0x1750] sm:$0xff]
    %v1481 = vld [vmem:[#allocation6 + $0x1758] sm:$0xff]
    %v1482 = vld [vmem:[#allocation6 + $0x1760] sm:$0xff]
    %v1483 = vld [vmem:[#allocation6 + $0x1768] sm:$0xff]
    %v1484 = vld [vmem:[#allocation6 + $0x1770] sm:$0xff]
    %v1485 = vld [vmem:[#allocation6 + $0x1778] sm:$0xff]
    %v1486 = vld [vmem:[#allocation6 + $0x1780] sm:$0xff]
    %v1487 = vld [vmem:[#allocation6 + $0x1788] sm:$0xff]
    %v1488 = vld [vmem:[#allocation6 + $0x1790] sm:$0xff]
    %v1489 = vld [vmem:[#allocation6 + $0x1798] sm:$0xff]
    %v1490 = vld [vmem:[#allocation6 + $0x17a0] sm:$0xff]
    %v1491 = vld [vmem:[#allocation6 + $0x17a8] sm:$0xff]
    %v1492 = vld [vmem:[#allocation6 + $0x17b0] sm:$0xff]
    %v1493 = vld [vmem:[#allocation6 + $0x17b8] sm:$0xff]
    %v1494 = vld [vmem:[#allocation6 + $0x17c0] sm:$0xff]
    %v1495 = vld [vmem:[#allocation6 + $0x17c8] sm:$0xff]
    %v1496 = vld [vmem:[#allocation6 + $0x17d0] sm:$0xff]
    %v1497 = vld [vmem:[#allocation6 + $0x17d8] sm:$0xff]
    %v1498 = vld [vmem:[#allocation6 + $0x17e0] sm:$0xff]
    %v1499 = vld [vmem:[#allocation6 + $0x17e8] sm:$0xff]
    %v1500 = vld [vmem:[#allocation6 + $0x17f0] sm:$0xff]
    %v1501 = vld [vmem:[#allocation6 + $0x17f8] sm:$0xff]
    %v1502 = vld [vmem:[#allocation6 + $0x1800] sm:$0xff]
    %v1503 = vld [vmem:[#allocation6 + $0x1808] sm:$0xff]
    %v1504 = vld [vmem:[#allocation6 + $0x1810] sm:$0xff]
    %v1505 = vld [vmem:[#allocation6 + $0x1818] sm:$0xff]
    %v1506 = vld [vmem:[#allocation6 + $0x1820] sm:$0xff]
    %v1507 = vld [vmem:[#allocation6 + $0x1828] sm:$0xff]
    %v1508 = vld [vmem:[#allocation6 + $0x1830] sm:$0xff]
    %v1509 = vld [vmem:[#allocation6 + $0x1838] sm:$0xff]
    %v1510 = vld [vmem:[#allocation6 + $0x1840] sm:$0xff]
    %v1511 = vld [vmem:[#allocation6 + $0x1848] sm:$0xff]
    %v1512 = vld [vmem:[#allocation6 + $0x1850] sm:$0xff]
    %v1513 = vld [vmem:[#allocation6 + $0x1858] sm:$0xff]
    %v1514 = vld [vmem:[#allocation6 + $0x1860] sm:$0xff]
    %v1515 = vld [vmem:[#allocation6 + $0x1868] sm:$0xff]
    %v1516 = vld [vmem:[#allocation6 + $0x1870] sm:$0xff]
    %v1517 = vld [vmem:[#allocation6 + $0x1878] sm:$0xff]
    %v1518 = vld [vmem:[#allocation6 + $0x1880] sm:$0xff]
    %v1519 = vld [vmem:[#allocation6 + $0x1888] sm:$0xff]
    %v1520 = vld [vmem:[#allocation6 + $0x1890] sm:$0xff]
    %v1521 = vld [vmem:[#allocation6 + $0x1898] sm:$0xff]
    %v1522 = vld [vmem:[#allocation6 + $0x18a0] sm:$0xff]
    %v1523 = vld [vmem:[#allocation6 + $0x18a8] sm:$0xff]
    %v1524 = vld [vmem:[#allocation6 + $0x18b0] sm:$0xff]
    %v1525 = vld [vmem:[#allocation6 + $0x18b8] sm:$0xff]
    %v1526 = vld [vmem:[#allocation6 + $0x18c0] sm:$0xff]
    %v1527 = vld [vmem:[#allocation6 + $0x18c8] sm:$0xff]
    %v1528 = vld [vmem:[#allocation6 + $0x18d0] sm:$0xff]
    %v1529 = vld [vmem:[#allocation6 + $0x18d8] sm:$0xff]
    %v1530 = vld [vmem:[#allocation6 + $0x18e0] sm:$0xff]
    %v1531 = vld [vmem:[#allocation6 + $0x18e8] sm:$0xff]
    %v1532 = vld [vmem:[#allocation6 + $0x18f0] sm:$0xff]
    %v1533 = vld [vmem:[#allocation6 + $0x18f8] sm:$0xff]
    %v1534 = vld [vmem:[#allocation6 + $0x1900] sm:$0xff]
    %v1535 = vld [vmem:[#allocation6 + $0x1908] sm:$0xff]
    %v1536 = vld [vmem:[#allocation6 + $0x1910] sm:$0xff]
    %v1537 = vld [vmem:[#allocation6 + $0x1918] sm:$0xff]
    %v1538 = vld [vmem:[#allocation6 + $0x1920] sm:$0xff]
    %v1539 = vld [vmem:[#allocation6 + $0x1928] sm:$0xff]
    %v1540 = vld [vmem:[#allocation6 + $0x1930] sm:$0xff]
    %v1541 = vld [vmem:[#allocation6 + $0x1938] sm:$0xff]
    %v1542 = vld [vmem:[#allocation6 + $0x1940] sm:$0xff]
    %v1543 = vld [vmem:[#allocation6 + $0x1948] sm:$0xff]
    %v1544 = vld [vmem:[#allocation6 + $0x1950] sm:$0xff]
    %v1545 = vld [vmem:[#allocation6 + $0x1958] sm:$0xff]
    %v1546 = vld [vmem:[#allocation6 + $0x1960] sm:$0xff]
    %v1547 = vld [vmem:[#allocation6 + $0x1968] sm:$0xff]
    %v1548 = vld [vmem:[#allocation6 + $0x1970] sm:$0xff]
    %v1549 = vld [vmem:[#allocation6 + $0x1978] sm:$0xff]
    %v1550 = vld [vmem:[#allocation6 + $0x1980] sm:$0xff]
    %v1551 = vld [vmem:[#allocation6 + $0x1988] sm:$0xff]
    %v1552 = vld [vmem:[#allocation6 + $0x1990] sm:$0xff]
    %v1553 = vld [vmem:[#allocation6 + $0x1998] sm:$0xff]
    %v1554 = vld [vmem:[#allocation6 + $0x19a0] sm:$0xff]
    %v1555 = vld [vmem:[#allocation6 + $0x19a8] sm:$0xff]
    %v1556 = vld [vmem:[#allocation6 + $0x19b0] sm:$0xff]
    %v1557 = vld [vmem:[#allocation6 + $0x19b8] sm:$0xff]
    %v1558 = vld [vmem:[#allocation6 + $0x19c0] sm:$0xff]
    %v1559 = vld [vmem:[#allocation6 + $0x19c8] sm:$0xff]
    %v1560 = vld [vmem:[#allocation6 + $0x19d0] sm:$0xff]
    %v1561 = vld [vmem:[#allocation6 + $0x19d8] sm:$0xff]
    %v1562 = vld [vmem:[#allocation6 + $0x19e0] sm:$0xff]
    %v1563 = vld [vmem:[#allocation6 + $0x19e8] sm:$0xff]
    %v1564 = vld [vmem:[#allocation6 + $0x19f0] sm:$0xff]
    %v1565 = vld [vmem:[#allocation6 + $0x19f8] sm:$0xff]
    %v1566 = vld [vmem:[#allocation6 + $0x1a00] sm:$0xff]
    %v1567 = vld [vmem:[#allocation6 + $0x1a08] sm:$0xff]
    %v1568 = vld [vmem:[#allocation6 + $0x1a10] sm:$0xff]
    %v1569 = vld [vmem:[#allocation6 + $0x1a18] sm:$0xff]
    %v1570 = vld [vmem:[#allocation6 + $0x1a20] sm:$0xff]
    %v1571 = vld [vmem:[#allocation6 + $0x1a28] sm:$0xff]
    %v1572 = vld [vmem:[#allocation6 + $0x1a30] sm:$0xff]
    %v1573 = vld [vmem:[#allocation6 + $0x1a38] sm:$0xff]
    %v1574 = vld [vmem:[#allocation6 + $0x1a40] sm:$0xff]
    %v1575 = vld [vmem:[#allocation6 + $0x1a48] sm:$0xff]
    %v1576 = vld [vmem:[#allocation6 + $0x1a50] sm:$0xff]
    %v1577 = vld [vmem:[#allocation6 + $0x1a58] sm:$0xff]
    %v1578 = vld [vmem:[#allocation6 + $0x1a60] sm:$0xff]
    %v1579 = vld [vmem:[#allocation6 + $0x1a68] sm:$0xff]
    %v1580 = vld [vmem:[#allocation6 + $0x1a70] sm:$0xff]
    %v1581 = vld [vmem:[#allocation6 + $0x1a78] sm:$0xff]
    %v1582 = vld [vmem:[#allocation6 + $0x1a80] sm:$0xff]
    %v1583 = vld [vmem:[#allocation6 + $0x1a88] sm:$0xff]
    %v1584 = vld [vmem:[#allocation6 + $0x1a90] sm:$0xff]
    %v1585 = vld [vmem:[#allocation6 + $0x1a98] sm:$0xff]
    %v1586 = vld [vmem:[#allocation6 + $0x1aa0] sm:$0xff]
    %v1587 = vld [vmem:[#allocation6 + $0x1aa8] sm:$0xff]
    %v1588 = vld [vmem:[#allocation6 + $0x1ab0] sm:$0xff]
    %v1589 = vld [vmem:[#allocation6 + $0x1ab8] sm:$0xff]
    %v1590 = vld [vmem:[#allocation6 + $0x1ac0] sm:$0xff]
    %v1591 = vld [vmem:[#allocation6 + $0x1ac8] sm:$0xff]
    %v1592 = vld [vmem:[#allocation6 + $0x1ad0] sm:$0xff]
    %v1593 = vld [vmem:[#allocation6 + $0x1ad8] sm:$0xff]
    %v1594 = vld [vmem:[#allocation6 + $0x1ae0] sm:$0xff]
    %v1595 = vld [vmem:[#allocation6 + $0x1ae8] sm:$0xff]
    %v1596 = vld [vmem:[#allocation6 + $0x1af0] sm:$0xff]
    %v1597 = vld [vmem:[#allocation6 + $0x1af8] sm:$0xff]
    %v1598 = vld [vmem:[#allocation6 + $0x1b00] sm:$0xff]
    %v1599 = vld [vmem:[#allocation6 + $0x1b08] sm:$0xff]
    %v1600 = vld [vmem:[#allocation6 + $0x1b10] sm:$0xff]
    %v1601 = vld [vmem:[#allocation6 + $0x1b18] sm:$0xff]
    %v1602 = vld [vmem:[#allocation6 + $0x1b20] sm:$0xff]
    %v1603 = vld [vmem:[#allocation6 + $0x1b28] sm:$0xff]
    %v1604 = vld [vmem:[#allocation6 + $0x1b30] sm:$0xff]
    %v1605 = vld [vmem:[#allocation6 + $0x1b38] sm:$0xff]
    %v1606 = vld [vmem:[#allocation6 + $0x1b40] sm:$0xff]
    %v1607 = vld [vmem:[#allocation6 + $0x1b48] sm:$0xff]
    %v1608 = vld [vmem:[#allocation6 + $0x1b50] sm:$0xff]
    %v1609 = vld [vmem:[#allocation6 + $0x1b58] sm:$0xff]
    %v1610 = vld [vmem:[#allocation6 + $0x1b60] sm:$0xff]
    %v1611 = vld [vmem:[#allocation6 + $0x1b68] sm:$0xff]
    %v1612 = vld [vmem:[#allocation6 + $0x1b70] sm:$0xff]
    %v1613 = vld [vmem:[#allocation6 + $0x1b78] sm:$0xff]
    %v1614 = vld [vmem:[#allocation6 + $0x1b80] sm:$0xff]
    %v1615 = vld [vmem:[#allocation6 + $0x1b88] sm:$0xff]
    %v1616 = vld [vmem:[#allocation6 + $0x1b90] sm:$0xff]
    %v1617 = vld [vmem:[#allocation6 + $0x1b98] sm:$0xff]
    %v1618 = vld [vmem:[#allocation6 + $0x1ba0] sm:$0xff]
    %v1619 = vld [vmem:[#allocation6 + $0x1ba8] sm:$0xff]
    %v1620 = vld [vmem:[#allocation6 + $0x1bb0] sm:$0xff]
    %v1621 = vld [vmem:[#allocation6 + $0x1bb8] sm:$0xff]
    %v1622 = vld [vmem:[#allocation6 + $0x1bc0] sm:$0xff]
    %v1623 = vld [vmem:[#allocation6 + $0x1bc8] sm:$0xff]
    %v1624 = vld [vmem:[#allocation6 + $0x1bd0] sm:$0xff]
    %v1625 = vld [vmem:[#allocation6 + $0x1bd8] sm:$0xff]
    %v1626 = vld [vmem:[#allocation6 + $0x1be0] sm:$0xff]
    %v1627 = vld [vmem:[#allocation6 + $0x1be8] sm:$0xff]
    %v1628 = vld [vmem:[#allocation6 + $0x1bf0] sm:$0xff]
    %v1629 = vld [vmem:[#allocation6 + $0x1bf8] sm:$0xff]
    %v1630 = vld [vmem:[#allocation6 + $0x1c00] sm:$0xff]
    %v1631 = vld [vmem:[#allocation6 + $0x1c08] sm:$0xff]
    %v1632 = vld [vmem:[#allocation6 + $0x1c10] sm:$0xff]
    %v1633 = vld [vmem:[#allocation6 + $0x1c18] sm:$0xff]
    %v1634 = vld [vmem:[#allocation6 + $0x1c20] sm:$0xff]
    %v1635 = vld [vmem:[#allocation6 + $0x1c28] sm:$0xff]
    %v1636 = vld [vmem:[#allocation6 + $0x1c30] sm:$0xff]
    %v1637 = vld [vmem:[#allocation6 + $0x1c38] sm:$0xff]
    %v1638 = vld [vmem:[#allocation6 + $0x1c40] sm:$0xff]
    %v1639 = vld [vmem:[#allocation6 + $0x1c48] sm:$0xff]
    %v1640 = vld [vmem:[#allocation6 + $0x1c50] sm:$0xff]
    %v1641 = vld [vmem:[#allocation6 + $0x1c58] sm:$0xff]
    %v1642 = vld [vmem:[#allocation6 + $0x1c60] sm:$0xff]
    %v1643 = vld [vmem:[#allocation6 + $0x1c68] sm:$0xff]
    %v1644 = vld [vmem:[#allocation6 + $0x1c70] sm:$0xff]
    %v1645 = vld [vmem:[#allocation6 + $0x1c78] sm:$0xff]
    %v1646 = vld [vmem:[#allocation6 + $0x1c80] sm:$0xff]
    %v1647 = vld [vmem:[#allocation6 + $0x1c88] sm:$0xff]
    %v1648 = vld [vmem:[#allocation6 + $0x1c90] sm:$0xff]
    %v1649 = vld [vmem:[#allocation6 + $0x1c98] sm:$0xff]
    %v1650 = vld [vmem:[#allocation6 + $0x1ca0] sm:$0xff]
    %v1651 = vld [vmem:[#allocation6 + $0x1ca8] sm:$0xff]
    %v1652 = vld [vmem:[#allocation6 + $0x1cb0] sm:$0xff]
    %v1653 = vld [vmem:[#allocation6 + $0x1cb8] sm:$0xff]
    %v1654 = vld [vmem:[#allocation6 + $0x1cc0] sm:$0xff]
    %v1655 = vld [vmem:[#allocation6 + $0x1cc8] sm:$0xff]
    %v1656 = vld [vmem:[#allocation6 + $0x1cd0] sm:$0xff]
    %v1657 = vld [vmem:[#allocation6 + $0x1cd8] sm:$0xff]
    %v1658 = vld [vmem:[#allocation6 + $0x1ce0] sm:$0xff]
    %v1659 = vld [vmem:[#allocation6 + $0x1ce8] sm:$0xff]
    %v1660 = vld [vmem:[#allocation6 + $0x1cf0] sm:$0xff]
    %v1661 = vld [vmem:[#allocation6 + $0x1cf8] sm:$0xff]
    %v1662 = vld [vmem:[#allocation6 + $0x1d00] sm:$0xff]
    %v1663 = vld [vmem:[#allocation6 + $0x1d08] sm:$0xff]
    %v1664 = vld [vmem:[#allocation6 + $0x1d10] sm:$0xff]
    %v1665 = vld [vmem:[#allocation6 + $0x1d18] sm:$0xff]
    %v1666 = vld [vmem:[#allocation6 + $0x1d20] sm:$0xff]
    %v1667 = vld [vmem:[#allocation6 + $0x1d28] sm:$0xff]
    %v1668 = vld [vmem:[#allocation6 + $0x1d30] sm:$0xff]
    %v1669 = vld [vmem:[#allocation6 + $0x1d38] sm:$0xff]
    %v1670 = vld [vmem:[#allocation6 + $0x1d40] sm:$0xff]
    %v1671 = vld [vmem:[#allocation6 + $0x1d48] sm:$0xff]
    %v1672 = vld [vmem:[#allocation6 + $0x1d50] sm:$0xff]
    %v1673 = vld [vmem:[#allocation6 + $0x1d58] sm:$0xff]
    %v1674 = vld [vmem:[#allocation6 + $0x1d60] sm:$0xff]
    %v1675 = vld [vmem:[#allocation6 + $0x1d68] sm:$0xff]
    %v1676 = vld [vmem:[#allocation6 + $0x1d70] sm:$0xff]
    %v1677 = vld [vmem:[#allocation6 + $0x1d78] sm:$0xff]
    %v1678 = vld [vmem:[#allocation6 + $0x1d80] sm:$0xff]
    %v1679 = vld [vmem:[#allocation6 + $0x1d88] sm:$0xff]
    %v1680 = vld [vmem:[#allocation6 + $0x1d90] sm:$0xff]
    %v1681 = vld [vmem:[#allocation6 + $0x1d98] sm:$0xff]
    %v1682 = vld [vmem:[#allocation6 + $0x1da0] sm:$0xff]
    %v1683 = vld [vmem:[#allocation6 + $0x1da8] sm:$0xff]
    %v1684 = vld [vmem:[#allocation6 + $0x1db0] sm:$0xff]
    %v1685 = vld [vmem:[#allocation6 + $0x1db8] sm:$0xff]
    %v1686 = vld [vmem:[#allocation6 + $0x1dc0] sm:$0xff]
    %v1687 = vld [vmem:[#allocation6 + $0x1dc8] sm:$0xff]
    %v1688 = vld [vmem:[#allocation6 + $0x1dd0] sm:$0xff]
    %v1689 = vld [vmem:[#allocation6 + $0x1dd8] sm:$0xff]
    %v1690 = vld [vmem:[#allocation6 + $0x1de0] sm:$0xff]
    %v1691 = vld [vmem:[#allocation6 + $0x1de8] sm:$0xff]
    %v1692 = vld [vmem:[#allocation6 + $0x1df0] sm:$0xff]
    %v1693 = vld [vmem:[#allocation6 + $0x1df8] sm:$0xff]
    %v1694 = vld [vmem:[#allocation6 + $0x1e00] sm:$0xff]
    %v1695 = vld [vmem:[#allocation6 + $0x1e08] sm:$0xff]
    %v1696 = vld [vmem:[#allocation6 + $0x1e10] sm:$0xff]
    %v1697 = vld [vmem:[#allocation6 + $0x1e18] sm:$0xff]
    %v1698 = vld [vmem:[#allocation6 + $0x1e20] sm:$0xff]
    %v1699 = vld [vmem:[#allocation6 + $0x1e28] sm:$0xff]
    %v1700 = vld [vmem:[#allocation6 + $0x1e30] sm:$0xff]
    %v1701 = vld [vmem:[#allocation6 + $0x1e38] sm:$0xff]
    %v1702 = vld [vmem:[#allocation6 + $0x1e40] sm:$0xff]
    %v1703 = vld [vmem:[#allocation6 + $0x1e48] sm:$0xff]
    %v1704 = vld [vmem:[#allocation6 + $0x1e50] sm:$0xff]
    %v1705 = vld [vmem:[#allocation6 + $0x1e58] sm:$0xff]
    %v1706 = vld [vmem:[#allocation6 + $0x1e60] sm:$0xff]
    %v1707 = vld [vmem:[#allocation6 + $0x1e68] sm:$0xff]
    %v1708 = vld [vmem:[#allocation6 + $0x1e70] sm:$0xff]
    %v1709 = vld [vmem:[#allocation6 + $0x1e78] sm:$0xff]
    %v1710 = vld [vmem:[#allocation6 + $0x1e80] sm:$0xff]
    %v1711 = vld [vmem:[#allocation6 + $0x1e88] sm:$0xff]
    %v1712 = vld [vmem:[#allocation6 + $0x1e90] sm:$0xff]
    %v1713 = vld [vmem:[#allocation6 + $0x1e98] sm:$0xff]
    %v1714 = vld [vmem:[#allocation6 + $0x1ea0] sm:$0xff]
    %v1715 = vld [vmem:[#allocation6 + $0x1ea8] sm:$0xff]
    %v1716 = vld [vmem:[#allocation6 + $0x1eb0] sm:$0xff]
    %v1717 = vld [vmem:[#allocation6 + $0x1eb8] sm:$0xff]
    %v1718 = vld [vmem:[#allocation6 + $0x1ec0] sm:$0xff]
    %v1719 = vld [vmem:[#allocation6 + $0x1ec8] sm:$0xff]
    %v1720 = vld [vmem:[#allocation6 + $0x1ed0] sm:$0xff]
    %v1721 = vld [vmem:[#allocation6 + $0x1ed8] sm:$0xff]
    %v1722 = vld [vmem:[#allocation6 + $0x1ee0] sm:$0xff]
    %v1723 = vld [vmem:[#allocation6 + $0x1ee8] sm:$0xff]
    %v1724 = vld [vmem:[#allocation6 + $0x1ef0] sm:$0xff]
    %v1725 = vld [vmem:[#allocation6 + $0x1ef8] sm:$0xff]
    %v1726 = vld [vmem:[#allocation6 + $0x1f00] sm:$0xff]
    %v1727 = vld [vmem:[#allocation6 + $0x1f08] sm:$0xff]
    %v1728 = vld [vmem:[#allocation6 + $0x1f10] sm:$0xff]
    %v1729 = vld [vmem:[#allocation6 + $0x1f18] sm:$0xff]
    %v1730 = vld [vmem:[#allocation6 + $0x1f20] sm:$0xff]
    %v1731 = vld [vmem:[#allocation6 + $0x1f28] sm:$0xff]
    %v1732 = vld [vmem:[#allocation6 + $0x1f30] sm:$0xff]
    %v1733 = vld [vmem:[#allocation6 + $0x1f38] sm:$0xff]
    %v1734 = vld [vmem:[#allocation6 + $0x1f40] sm:$0xff]
    %v1735 = vld [vmem:[#allocation6 + $0x1f48] sm:$0xff]
    %v1736 = vld [vmem:[#allocation6 + $0x1f50] sm:$0xff]
    %v1737 = vld [vmem:[#allocation6 + $0x1f58] sm:$0xff]
    %v1738 = vld [vmem:[#allocation6 + $0x1f60] sm:$0xff]
    %v1739 = vld [vmem:[#allocation6 + $0x1f68] sm:$0xff]
    %v1740 = vld [vmem:[#allocation6 + $0x1f70] sm:$0xff]
    %v1741 = vld [vmem:[#allocation6 + $0x1f78] sm:$0xff]
    %v1742 = vld [vmem:[#allocation6 + $0x1f80] sm:$0xff]
    %v1743 = vld [vmem:[#allocation6 + $0x1f88] sm:$0xff]
    %v1744 = vld [vmem:[#allocation6 + $0x1f90] sm:$0xff]
    %v1745 = vld [vmem:[#allocation6 + $0x1f98] sm:$0xff]
    %v1746 = vld [vmem:[#allocation6 + $0x1fa0] sm:$0xff]
    %v1747 = vld [vmem:[#allocation6 + $0x1fa8] sm:$0xff]
    %v1748 = vld [vmem:[#allocation6 + $0x1fb0] sm:$0xff]
    %v1749 = vld [vmem:[#allocation6 + $0x1fb8] sm:$0xff]
    %v1750 = vld [vmem:[#allocation6 + $0x1fc0] sm:$0xff]
    %v1751 = vld [vmem:[#allocation6 + $0x1fc8] sm:$0xff]
    %v1752 = vld [vmem:[#allocation6 + $0x1fd0] sm:$0xff]
    %v1753 = vld [vmem:[#allocation6 + $0x1fd8] sm:$0xff]
    %v1754 = vld [vmem:[#allocation6 + $0x1fe0] sm:$0xff]
    %v1755 = vld [vmem:[#allocation6 + $0x1fe8] sm:$0xff]
    %v1756 = vld [vmem:[#allocation6 + $0x1ff0] sm:$0xff]
    %v1757 = vld [vmem:[#allocation6 + $0x1ff8] sm:$0xff]
    %v1758 = vld [vmem:[#allocation6 + $0x2000] sm:$0xff]
    %v1759 = vld [vmem:[#allocation6 + $0x2008] sm:$0xff]
    %v1760 = vld [vmem:[#allocation6 + $0x2010] sm:$0xff]
    %v1761 = vld [vmem:[#allocation6 + $0x2018] sm:$0xff]
    %v1762 = vld [vmem:[#allocation6 + $0x2020] sm:$0xff]
    %v1763 = vld [vmem:[#allocation6 + $0x2028] sm:$0xff]
    %v1764 = vld [vmem:[#allocation6 + $0x2030] sm:$0xff]
    %v1765 = vld [vmem:[#allocation6 + $0x2038] sm:$0xff]
    %v1766 = vld [vmem:[#allocation6 + $0x2040] sm:$0xff]
    %v1767 = vld [vmem:[#allocation6 + $0x2048] sm:$0xff]
    %v1768 = vld [vmem:[#allocation6 + $0x2050] sm:$0xff]
    %v1769 = vld [vmem:[#allocation6 + $0x2058] sm:$0xff]
    %v1770 = vld [vmem:[#allocation6 + $0x2060] sm:$0xff]
    %v1771 = vld [vmem:[#allocation6 + $0x2068] sm:$0xff]
    %v1772 = vld [vmem:[#allocation6 + $0x2070] sm:$0xff]
    %v1773 = vld [vmem:[#allocation6 + $0x2078] sm:$0xff]
    %v1774 = vld [vmem:[#allocation6 + $0x2080] sm:$0xff]
    %v1775 = vld [vmem:[#allocation6 + $0x2088] sm:$0xff]
    %v1776 = vld [vmem:[#allocation6 + $0x2090] sm:$0xff]
    %v1777 = vld [vmem:[#allocation6 + $0x2098] sm:$0xff]
    %v1778 = vld [vmem:[#allocation6 + $0x20a0] sm:$0xff]
    %v1779 = vld [vmem:[#allocation6 + $0x20a8] sm:$0xff]
    %v1780 = vld [vmem:[#allocation6 + $0x20b0] sm:$0xff]
    %v1781 = vld [vmem:[#allocation6 + $0x20b8] sm:$0xff]
    %v1782 = vld [vmem:[#allocation6 + $0x20c0] sm:$0xff]
    %v1783 = vld [vmem:[#allocation6 + $0x20c8] sm:$0xff]
    %v1784 = vld [vmem:[#allocation6 + $0x20d0] sm:$0xff]
    %v1785 = vld [vmem:[#allocation6 + $0x20d8] sm:$0xff]
    %v1786 = vld [vmem:[#allocation6 + $0x20e0] sm:$0xff]
    %v1787 = vld [vmem:[#allocation6 + $0x20e8] sm:$0xff]
    %v1788 = vld [vmem:[#allocation6 + $0x20f0] sm:$0xff]
    %v1789 = vld [vmem:[#allocation6 + $0x20f8] sm:$0xff]
    %v1790 = vld [vmem:[#allocation6 + $0x2100] sm:$0xff]
    %v1791 = vld [vmem:[#allocation6 + $0x2108] sm:$0xff]
    %v1792 = vld [vmem:[#allocation6 + $0x2110] sm:$0xff]
    %v1793 = vld [vmem:[#allocation6 + $0x2118] sm:$0xff]
    %v1794 = vld [vmem:[#allocation6 + $0x2120] sm:$0xff]
    %v1795 = vld [vmem:[#allocation6 + $0x2128] sm:$0xff]
    %v1796 = vld [vmem:[#allocation6 + $0x2130] sm:$0xff]
    %v1797 = vld [vmem:[#allocation6 + $0x2138] sm:$0xff]
    %v1798 = vld [vmem:[#allocation6 + $0x2140] sm:$0xff]
    %v1799 = vld [vmem:[#allocation6 + $0x2148] sm:$0xff]
    %v1800 = vld [vmem:[#allocation6 + $0x2150] sm:$0xff]
    %v1801 = vld [vmem:[#allocation6 + $0x2158] sm:$0xff]
    %v1802 = vld [vmem:[#allocation6 + $0x2160] sm:$0xff]
    %v1803 = vld [vmem:[#allocation6 + $0x2168] sm:$0xff]
    %v1804 = vld [vmem:[#allocation6 + $0x2170] sm:$0xff]
    %v1805 = vld [vmem:[#allocation6 + $0x2178] sm:$0xff]
    %v1806 = vld [vmem:[#allocation6 + $0x2180] sm:$0xff]
    %v1807 = vld [vmem:[#allocation6 + $0x2188] sm:$0xff]
    %v1808 = vld [vmem:[#allocation6 + $0x2190] sm:$0xff]
    %v1809 = vld [vmem:[#allocation6 + $0x2198] sm:$0xff]
    %v1810 = vld [vmem:[#allocation6 + $0x21a0] sm:$0xff]
    %v1811 = vld [vmem:[#allocation6 + $0x21a8] sm:$0xff]
    %v1812 = vld [vmem:[#allocation6 + $0x21b0] sm:$0xff]
    %v1813 = vld [vmem:[#allocation6 + $0x21b8] sm:$0xff]
    %v1814 = vld [vmem:[#allocation6 + $0x21c0] sm:$0xff]
    %v1815 = vld [vmem:[#allocation6 + $0x21c8] sm:$0xff]
    %v1816 = vld [vmem:[#allocation6 + $0x21d0] sm:$0xff]
    %v1817 = vld [vmem:[#allocation6 + $0x21d8] sm:$0xff]
    %v1818 = vld [vmem:[#allocation6 + $0x21e0] sm:$0xff]
    %v1819 = vld [vmem:[#allocation6 + $0x21e8] sm:$0xff]
    %v1820 = vld [vmem:[#allocation6 + $0x21f0] sm:$0xff]
    %v1821 = vld [vmem:[#allocation6 + $0x21f8] sm:$0xff]
    %v1822 = vld [vmem:[#allocation6 + $0x2200] sm:$0xff]
    %v1823 = vld [vmem:[#allocation6 + $0x2208] sm:$0xff]
    %v1824 = vld [vmem:[#allocation6 + $0x2210] sm:$0xff]
    %v1825 = vld [vmem:[#allocation6 + $0x2218] sm:$0xff]
    %v1826 = vld [vmem:[#allocation6 + $0x2220] sm:$0xff]
    %v1827 = vld [vmem:[#allocation6 + $0x2228] sm:$0xff]
    %v1828 = vld [vmem:[#allocation6 + $0x2230] sm:$0xff]
    %v1829 = vld [vmem:[#allocation6 + $0x2238] sm:$0xff]
    %v1830 = vld [vmem:[#allocation6 + $0x2240] sm:$0xff]
    %v1831 = vld [vmem:[#allocation6 + $0x2248] sm:$0xff]
    %v1832 = vld [vmem:[#allocation6 + $0x2250] sm:$0xff]
    %v1833 = vld [vmem:[#allocation6 + $0x2258] sm:$0xff]
    %v1834 = vld [vmem:[#allocation6 + $0x2260] sm:$0xff]
    %v1835 = vld [vmem:[#allocation6 + $0x2268] sm:$0xff]
    %v1836 = vld [vmem:[#allocation6 + $0x2270] sm:$0xff]
    %v1837 = vld [vmem:[#allocation6 + $0x2278] sm:$0xff]
    %v1838 = vld [vmem:[#allocation6 + $0x2280] sm:$0xff]
    %v1839 = vld [vmem:[#allocation6 + $0x2288] sm:$0xff]
    %v1840 = vld [vmem:[#allocation6 + $0x2290] sm:$0xff]
    %v1841 = vld [vmem:[#allocation6 + $0x2298] sm:$0xff]
    %v1842 = vld [vmem:[#allocation6 + $0x22a0] sm:$0xff]
    %v1843 = vld [vmem:[#allocation6 + $0x22a8] sm:$0xff]
    %v1844 = vld [vmem:[#allocation6 + $0x22b0] sm:$0xff]
    %v1845 = vld [vmem:[#allocation6 + $0x22b8] sm:$0xff]
    %v1846 = vld [vmem:[#allocation6 + $0x22c0] sm:$0xff]
    %v1847 = vld [vmem:[#allocation6 + $0x22c8] sm:$0xff]
    %v1848 = vld [vmem:[#allocation6 + $0x22d0] sm:$0xff]
    %v1849 = vld [vmem:[#allocation6 + $0x22d8] sm:$0xff]
    %v1850 = vld [vmem:[#allocation6 + $0x22e0] sm:$0xff]
    %v1851 = vld [vmem:[#allocation6 + $0x22e8] sm:$0xff]
    %v1852 = vld [vmem:[#allocation6 + $0x22f0] sm:$0xff]
    %v1853 = vld [vmem:[#allocation6 + $0x22f8] sm:$0xff]
    %v1854 = vld [vmem:[#allocation6 + $0x2300] sm:$0xff]
    %v1855 = vld [vmem:[#allocation6 + $0x2308] sm:$0xff]
    %v1856 = vld [vmem:[#allocation6 + $0x2310] sm:$0xff]
    %v1857 = vld [vmem:[#allocation6 + $0x2318] sm:$0xff]
    %v1858 = vld [vmem:[#allocation6 + $0x2320] sm:$0xff]
    %v1859 = vld [vmem:[#allocation6 + $0x2328] sm:$0xff]
    %v1860 = vld [vmem:[#allocation6 + $0x2330] sm:$0xff]
    %v1861 = vld [vmem:[#allocation6 + $0x2338] sm:$0xff]
    %v1862 = vld [vmem:[#allocation6 + $0x2340] sm:$0xff]
    %v1863 = vld [vmem:[#allocation6 + $0x2348] sm:$0xff]
    %v1864 = vld [vmem:[#allocation6 + $0x2350] sm:$0xff]
    %v1865 = vld [vmem:[#allocation6 + $0x2358] sm:$0xff]
    %v1866 = vld [vmem:[#allocation6 + $0x2360] sm:$0xff]
    %v1867 = vld [vmem:[#allocation6 + $0x2368] sm:$0xff]
    %v1868 = vld [vmem:[#allocation6 + $0x2370] sm:$0xff]
    %v1869 = vld [vmem:[#allocation6 + $0x2378] sm:$0xff]
    %v1870 = vld [vmem:[#allocation6 + $0x2380] sm:$0xff]
    %v1871 = vld [vmem:[#allocation6 + $0x2388] sm:$0xff]
    %v1872 = vld [vmem:[#allocation6 + $0x2390] sm:$0xff]
    %v1873 = vld [vmem:[#allocation6 + $0x2398] sm:$0xff]
    %v1874 = vld [vmem:[#allocation6 + $0x23a0] sm:$0xff]
    %v1875 = vld [vmem:[#allocation6 + $0x23a8] sm:$0xff]
    %v1876 = vld [vmem:[#allocation6 + $0x23b0] sm:$0xff]
    %v1877 = vld [vmem:[#allocation6 + $0x23b8] sm:$0xff]
    %v1878 = vld [vmem:[#allocation6 + $0x23c0] sm:$0xff]
    %v1879 = vld [vmem:[#allocation6 + $0x23c8] sm:$0xff]
    %v1880 = vld [vmem:[#allocation6 + $0x23d0] sm:$0xff]
    %v1881 = vld [vmem:[#allocation6 + $0x23d8] sm:$0xff]
    %v1882 = vld [vmem:[#allocation6 + $0x23e0] sm:$0xff]
    %v1883 = vld [vmem:[#allocation6 + $0x23e8] sm:$0xff]
    %v1884 = vld [vmem:[#allocation6 + $0x23f0] sm:$0xff]
    %v1885 = vld [vmem:[#allocation6 + $0x23f8] sm:$0xff]
    %v1886 = vld [vmem:[#allocation6 + $0x2400] sm:$0xff]
    %v1887 = vld [vmem:[#allocation6 + $0x2408] sm:$0xff]
    %v1888 = vld [vmem:[#allocation6 + $0x2410] sm:$0xff]
    %v1889 = vld [vmem:[#allocation6 + $0x2418] sm:$0xff]
    %v1890 = vld [vmem:[#allocation6 + $0x2420] sm:$0xff]
    %v1891 = vld [vmem:[#allocation6 + $0x2428] sm:$0xff]
    %v1892 = vld [vmem:[#allocation6 + $0x2430] sm:$0xff]
    %v1893 = vld [vmem:[#allocation6 + $0x2438] sm:$0xff]
    %v1894 = vld [vmem:[#allocation6 + $0x2440] sm:$0xff]
    %v1895 = vld [vmem:[#allocation6 + $0x2448] sm:$0xff]
    %v1896 = vld [vmem:[#allocation6 + $0x2450] sm:$0xff]
    %v1897 = vld [vmem:[#allocation6 + $0x2458] sm:$0xff]
    %v1898 = vld [vmem:[#allocation6 + $0x2460] sm:$0xff]
    %v1899 = vld [vmem:[#allocation6 + $0x2468] sm:$0xff]
    %v1900 = vld [vmem:[#allocation6 + $0x2470] sm:$0xff]
    %v1901 = vld [vmem:[#allocation6 + $0x2478] sm:$0xff]
    %v1902 = vld [vmem:[#allocation6 + $0x2480] sm:$0xff]
    %v1903 = vld [vmem:[#allocation6 + $0x2488] sm:$0xff]
    %v1904 = vld [vmem:[#allocation6 + $0x2490] sm:$0xff]
    %v1905 = vld [vmem:[#allocation6 + $0x2498] sm:$0xff]
    %v1906 = vld [vmem:[#allocation6 + $0x24a0] sm:$0xff]
    %v1907 = vld [vmem:[#allocation6 + $0x24a8] sm:$0xff]
    %v1908 = vld [vmem:[#allocation6 + $0x24b0] sm:$0xff]
    %v1909 = vld [vmem:[#allocation6 + $0x24b8] sm:$0xff]
    %v1910 = vld [vmem:[#allocation6 + $0x24c0] sm:$0xff]
    %v1911 = vld [vmem:[#allocation6 + $0x24c8] sm:$0xff]
    %v1912 = vld [vmem:[#allocation6 + $0x24d0] sm:$0xff]
    %v1913 = vld [vmem:[#allocation6 + $0x24d8] sm:$0xff]
    %v1914 = vld [vmem:[#allocation6 + $0x24e0] sm:$0xff]
    %v1915 = vld [vmem:[#allocation6 + $0x24e8] sm:$0xff]
    %v1916 = vld [vmem:[#allocation6 + $0x24f0] sm:$0xff]
    %v1917 = vld [vmem:[#allocation6 + $0x24f8] sm:$0xff]
    %v1918 = vld [vmem:[#allocation6 + $0x2500] sm:$0xff]
    %v1919 = vld [vmem:[#allocation6 + $0x2508] sm:$0xff]
    %v1920 = vld [vmem:[#allocation6 + $0x2510] sm:$0xff]
    %v1921 = vld [vmem:[#allocation6 + $0x2518] sm:$0xff]
    %v1922 = vld [vmem:[#allocation6 + $0x2520] sm:$0xff]
    %v1923 = vld [vmem:[#allocation6 + $0x2528] sm:$0xff]
    %v1924 = vld [vmem:[#allocation6 + $0x2530] sm:$0xff]
    %v1925 = vld [vmem:[#allocation6 + $0x2538] sm:$0xff]
    %v1926 = vld [vmem:[#allocation6 + $0x2540] sm:$0xff]
    %v1927 = vld [vmem:[#allocation6 + $0x2548] sm:$0xff]
    %v1928 = vld [vmem:[#allocation6 + $0x2550] sm:$0xff]
    %v1929 = vld [vmem:[#allocation6 + $0x2558] sm:$0xff]
    %v1930 = vld [vmem:[#allocation6 + $0x2560] sm:$0xff]
    %v1931 = vld [vmem:[#allocation6 + $0x2568] sm:$0xff]
    %v1932 = vld [vmem:[#allocation6 + $0x2570] sm:$0xff]
    %v1933 = vld [vmem:[#allocation6 + $0x2578] sm:$0xff]
    %v1934 = vld [vmem:[#allocation6 + $0x2580] sm:$0xff]
    %v1935 = vld [vmem:[#allocation6 + $0x2588] sm:$0xff]
    %v1936 = vld [vmem:[#allocation6 + $0x2590] sm:$0xff]
    %v1937 = vld [vmem:[#allocation6 + $0x2598] sm:$0xff]
    %v1938 = vld [vmem:[#allocation6 + $0x25a0] sm:$0xff]
    %v1939 = vld [vmem:[#allocation6 + $0x25a8] sm:$0xff]
    %v1940 = vld [vmem:[#allocation6 + $0x25b0] sm:$0xff]
    %v1941 = vld [vmem:[#allocation6 + $0x25b8] sm:$0xff]
    %v1942 = vld [vmem:[#allocation6 + $0x25c0] sm:$0x3]
    %v1943 = vld [vmem:[#allocation6 + $0x25c8] sm:$0x3]
    %v1944 = vld [vmem:[#allocation6 + $0x25d0] sm:$0x3]
    %v1945 = vld [vmem:[#allocation6 + $0x25d8] sm:$0x3]
    %v1946 = vld [vmem:[#allocation6 + $0x25e0] sm:$0x3]
    %v1947 = vld [vmem:[#allocation6 + $0x25e8] sm:$0x3]
    %v1948 = vld [vmem:[#allocation6 + $0x25f0] sm:$0x3]
    %v1949 = vld [vmem:[#allocation6 + $0x25f8] sm:$0x3]
    %vm1950 = vcmask 474112
    %v1952 = vsel %vm1950, %v732, 0
    %vm1954 = vcmask 1041408
    %v1956 = vsel %vm1954, %v1942, 0
    %v1959 = vsel %vm1954, %v1943, 0
    %v1962 = vsel %vm1954, %v1944, 0
    %v1965 = vsel %vm1954, %v1945, 0
    %v1968 = vsel %vm1954, %v1946, 0
    %v1971 = vsel %vm1954, %v1947, 0
    %v1974 = vsel %vm1954, %v1948, 0
    %v1977 = vsel %vm1954, %v1949, 0
    %1979 = vmatprep.subr.mxu0 %v735
    %1980 = vmatpush1.msra.mxu0 %v734
    %1981 = vmatprep.subr.mxu0 %v743
    %1982 = vmatpush1.msra.mxu0 %v742
    %1983 = vmatprep.subr.mxu0 %v751
    %1984 = vmatpush1.msra.mxu0 %v750
    %1985 = vmatprep.subr.mxu0 %v759
    %1986 = vmatpush1.msra.mxu0 %v758
    %1987 = vmatprep.subr.mxu0 %v767
    %1988 = vmatpush1.msra.mxu0 %v766
    %1989 = vmatprep.subr.mxu0 %v775
    %1990 = vmatpush1.msra.mxu0 %v774
    %1991 = vmatprep.subr.mxu0 %v783
    %1992 = vmatpush1.msra.mxu0 %v782
    %1993 = vmatprep.subr.mxu0 %v791
    %1994 = vmatpush1.msra.mxu0 %v790
    %1995 = vmatprep.subr.mxu0 %v799
    %1996 = vmatpush1.msra.mxu0 %v798
    %1997 = vmatprep.subr.mxu0 %v807
    %1998 = vmatpush1.msra.mxu0 %v806
    %1999 = vmatprep.subr.mxu0 %v815
    %2000 = vmatpush1.msra.mxu0 %v814
    %2001 = vmatprep.subr.mxu0 %v823
    %2002 = vmatpush1.msra.mxu0 %v822
    %2003 = vmatprep.subr.mxu0 %v831
    %2004 = vmatpush1.msra.mxu0 %v830
    %2005 = vmatprep.subr.mxu0 %v839
    %2006 = vmatpush1.msra.mxu0 %v838
    %2007 = vmatprep.subr.mxu0 %v847
    %2008 = vmatpush1.msra.mxu0 %v846
    %2009 = vmatprep.subr.mxu0 %v855
    %2010 = vmatpush1.msra.mxu0 %v854
    %2011 = vmatprep.subr.mxu0 %v863
    %2012 = vmatpush1.msra.mxu0 %v862
    %2013 = vmatprep.subr.mxu0 %v871
    %2014 = vmatpush1.msra.mxu0 %v870
    %2015 = vmatprep.subr.mxu0 %v879
    %2016 = vmatpush1.msra.mxu0 %v878
    %2017 = vmatprep.subr.mxu0 %v887
    %2018 = vmatpush1.msra.mxu0 %v886
    %2019 = vmatprep.subr.mxu0 %v895
    %2020 = vmatpush1.msra.mxu0 %v894
    %2021 = vmatprep.subr.mxu0 %v903
    %2022 = vmatpush1.msra.mxu0 %v902
    %2023 = vmatprep.subr.mxu0 %v911
    %2024 = vmatpush1.msra.mxu0 %v910
    %2025 = vmatprep.subr.mxu0 %v919
    %2026 = vmatpush1.msra.mxu0 %v918
    %2027 = vmatprep.subr.mxu0 %v927
    %2028 = vmatpush1.msra.mxu0 %v926
    %2029 = vmatprep.subr.mxu0 %v935
    %2030 = vmatpush1.msra.mxu0 %v934
    %2031 = vmatprep.subr.mxu0 %v943
    %2032 = vmatpush1.msra.mxu0 %v942
    %2033 = vmatprep.subr.mxu0 %v951
    %2034 = vmatpush1.msra.mxu0 %v950
    %2035 = vmatprep.subr.mxu0 %v959
    %2036 = vmatpush1.msra.mxu0 %v958
    %2037 = vmatprep.subr.mxu0 %v967
    %2038 = vmatpush1.msra.mxu0 %v966
    %2039 = vmatprep.subr.mxu0 %v975
    %2040 = vmatpush1.msra.mxu0 %v974
    %2041 = vmatprep.subr.mxu0 %v983
    %2042 = vmatpush1.msra.mxu0 %v982
    %2043 = vmatprep.mubr.f32.mxu0 %v448
    %2044 = vmatmul.mubr.f32.gmra.mrb[0].mxu0 %v446
    %v2045 = vpop.f32.mrb[0].mxu0
    %v2046 = vadd.f32 0.0, %v2045
    %v2047 = vpop.f32.mrb[0].mxu0
    %v2048 = vadd.f32 0.0, %v2047
    %2049 = vdwg.mxu0
    %2050 = vmatprep.subr.mxu0 %v991
    %2051 = vmatpush1.msra.mxu0 %v990
    %2052 = vmatprep.subr.mxu0 %v999
    %2053 = vmatpush1.msra.mxu0 %v998
    %2054 = vmatprep.subr.mxu0 %v1007
    %2055 = vmatpush1.msra.mxu0 %v1006
    %2056 = vmatprep.subr.mxu0 %v1015
    %2057 = vmatpush1.msra.mxu0 %v1014
    %2058 = vmatprep.subr.mxu0 %v1023
    %2059 = vmatpush1.msra.mxu0 %v1022
    %2060 = vmatprep.subr.mxu0 %v1031
    %2061 = vmatpush1.msra.mxu0 %v1030
    %2062 = vmatprep.subr.mxu0 %v1039
    %2063 = vmatpush1.msra.mxu0 %v1038
    %2064 = vmatprep.subr.mxu0 %v1047
    %2065 = vmatpush1.msra.mxu0 %v1046
    %2066 = vmatprep.subr.mxu0 %v1055
    %2067 = vmatpush1.msra.mxu0 %v1054
    %2068 = vmatprep.subr.mxu0 %v1063
    %2069 = vmatpush1.msra.mxu0 %v1062
    %2070 = vmatprep.subr.mxu0 %v1071
    %2071 = vmatpush1.msra.mxu0 %v1070
    %2072 = vmatprep.subr.mxu0 %v1079
    %2073 = vmatpush1.msra.mxu0 %v1078
    %2074 = vmatprep.subr.mxu0 %v1087
    %2075 = vmatpush1.msra.mxu0 %v1086
    %2076 = vmatprep.subr.mxu0 %v1095
    %2077 = vmatpush1.msra.mxu0 %v1094
    %2078 = vmatprep.subr.mxu0 %v1103
    %2079 = vmatpush1.msra.mxu0 %v1102
    %2080 = vmatprep.subr.mxu0 %v1111
    %2081 = vmatpush1.msra.mxu0 %v1110
    %2082 = vmatprep.subr.mxu0 %v1119
    %2083 = vmatpush1.msra.mxu0 %v1118
    %2084 = vmatprep.subr.mxu0 %v1127
    %2085 = vmatpush1.msra.mxu0 %v1126
    %2086 = vmatprep.subr.mxu0 %v1135
    %2087 = vmatpush1.msra.mxu0 %v1134
    %2088 = vmatprep.subr.mxu0 %v1143
    %2089 = vmatpush1.msra.mxu0 %v1142
    %2090 = vmatprep.subr.mxu0 %v1151
    %2091 = vmatpush1.msra.mxu0 %v1150
    %2092 = vmatprep.subr.mxu0 %v1159
    %2093 = vmatpush1.msra.mxu0 %v1158
    %2094 = vmatprep.subr.mxu0 %v1167
    %2095 = vmatpush1.msra.mxu0 %v1166
    %2096 = vmatprep.subr.mxu0 %v1175
    %2097 = vmatpush1.msra.mxu0 %v1174
    %2098 = vmatprep.subr.mxu0 %v1183
    %2099 = vmatpush1.msra.mxu0 %v1182
    %2100 = vmatprep.subr.mxu0 %v1191
    %2101 = vmatpush1.msra.mxu0 %v1190
    %2102 = vmatprep.subr.mxu0 %v1199
    %2103 = vmatpush1.msra.mxu0 %v1198
    %2104 = vmatprep.subr.mxu0 %v1207
    %2105 = vmatpush1.msra.mxu0 %v1206
    %2106 = vmatprep.subr.mxu0 %v1215
    %2107 = vmatpush1.msra.mxu0 %v1214
    %2108 = vmatprep.subr.mxu0 %v1223
    %2109 = vmatpush1.msra.mxu0 %v1222
    %2110 = vmatprep.subr.mxu0 %v1231
    %2111 = vmatpush1.msra.mxu0 %v1230
    %2112 = vmatprep.subr.mxu0 %v1239
    %2113 = vmatpush1.msra.mxu0 %v1238
    %2114 = vmatprep.mubr.f32.mxu0 %v519
    %2115 = vmatmul.mubr.f32.gmra.mrb[0].mxu0 %v517
    %v2116 = vpop.f32.mrb[0].mxu0
    %v2117 = vadd.f32 %v2046, %v2116
    %v2118 = vpop.f32.mrb[0].mxu0
    %v2119 = vadd.f32 %v2048, %v2118
    %2120 = vdwg.mxu0
    %2121 = vmatprep.subr.mxu0 %v1247
    %2122 = vmatpush1.msra.mxu0 %v1246
    %2123 = vmatprep.subr.mxu0 %v1255
    %2124 = vmatpush1.msra.mxu0 %v1254
    %2125 = vmatprep.subr.mxu0 %v1263
    %2126 = vmatpush1.msra.mxu0 %v1262
    %2127 = vmatprep.subr.mxu0 %v1271
    %2128 = vmatpush1.msra.mxu0 %v1270
    %2129 = vmatprep.subr.mxu0 %v1279
    %2130 = vmatpush1.msra.mxu0 %v1278
    %2131 = vmatprep.subr.mxu0 %v1287
    %2132 = vmatpush1.msra.mxu0 %v1286
    %2133 = vmatprep.subr.mxu0 %v1295
    %2134 = vmatpush1.msra.mxu0 %v1294
    %2135 = vmatprep.subr.mxu0 %v1303
    %2136 = vmatpush1.msra.mxu0 %v1302
    %2137 = vmatprep.subr.mxu0 %v1311
    %2138 = vmatpush1.msra.mxu0 %v1310
    %2139 = vmatprep.subr.mxu0 %v1319
    %2140 = vmatpush1.msra.mxu0 %v1318
    %2141 = vmatprep.subr.mxu0 %v1327
    %2142 = vmatpush1.msra.mxu0 %v1326
    %2143 = vmatprep.subr.mxu0 %v1335
    %2144 = vmatpush1.msra.mxu0 %v1334
    %2145 = vmatprep.subr.mxu0 %v1343
    %2146 = vmatpush1.msra.mxu0 %v1342
    %2147 = vmatprep.subr.mxu0 %v1351
    %2148 = vmatpush1.msra.mxu0 %v1350
    %2149 = vmatprep.subr.mxu0 %v1359
    %2150 = vmatpush1.msra.mxu0 %v1358
    %2151 = vmatprep.subr.mxu0 %v1367
    %2152 = vmatpush1.msra.mxu0 %v1366
    %2153 = vmatprep.subr.mxu0 %v1375
    %2154 = vmatpush1.msra.mxu0 %v1374
    %2155 = vmatprep.subr.mxu0 %v1383
    %2156 = vmatpush1.msra.mxu0 %v1382
    %2157 = vmatprep.subr.mxu0 %v1391
    %2158 = vmatpush1.msra.mxu0 %v1390
    %2159 = vmatprep.subr.mxu0 %v1399
    %2160 = vmatpush1.msra.mxu0 %v1398
    %2161 = vmatprep.subr.mxu0 %v1407
    %2162 = vmatpush1.msra.mxu0 %v1406
    %2163 = vmatprep.subr.mxu0 %v1415
    %2164 = vmatpush1.msra.mxu0 %v1414
    %2165 = vmatprep.subr.mxu0 %v1423
    %2166 = vmatpush1.msra.mxu0 %v1422
    %2167 = vmatprep.subr.mxu0 %v1431
    %2168 = vmatpush1.msra.mxu0 %v1430
    %2169 = vmatprep.subr.mxu0 %v1439
    %2170 = vmatpush1.msra.mxu0 %v1438
    %2171 = vmatprep.subr.mxu0 %v1447
    %2172 = vmatpush1.msra.mxu0 %v1446
    %2173 = vmatprep.subr.mxu0 %v1455
    %2174 = vmatpush1.msra.mxu0 %v1454
    %2175 = vmatprep.subr.mxu0 %v1463
    %2176 = vmatpush1.msra.mxu0 %v1462
    %2177 = vmatprep.subr.mxu0 %v1471
    %2178 = vmatpush1.msra.mxu0 %v1470
    %2179 = vmatprep.subr.mxu0 %v1479
    %2180 = vmatpush1.msra.mxu0 %v1478
    %2181 = vmatprep.subr.mxu0 %v1487
    %2182 = vmatpush1.msra.mxu0 %v1486
    %2183 = vmatprep.subr.mxu0 %v1495
    %2184 = vmatpush1.msra.mxu0 %v1494
    %2185 = vmatprep.mubr.f32.mxu0 %v590
    %2186 = vmatmul.mubr.f32.gmra.mrb[0].mxu0 %v588
    %v2187 = vpop.f32.mrb[0].mxu0
    %v2188 = vadd.f32 %v2117, %v2187
    %v2189 = vpop.f32.mrb[0].mxu0
    %v2190 = vadd.f32 %v2119, %v2189
    %2191 = vdwg.mxu0
    %2192 = vmatprep.subr.mxu0 %v1503
    %2193 = vmatpush1.msra.mxu0 %v1502
    %2194 = vmatprep.subr.mxu0 %v1511
    %2195 = vmatpush1.msra.mxu0 %v1510
    %2196 = vmatprep.subr.mxu0 %v1519
    %2197 = vmatpush1.msra.mxu0 %v1518
    %2198 = vmatprep.subr.mxu0 %v1527
    %2199 = vmatpush1.msra.mxu0 %v1526
    %2200 = vmatprep.subr.mxu0 %v1535
    %2201 = vmatpush1.msra.mxu0 %v1534
    %2202 = vmatprep.subr.mxu0 %v1543
    %2203 = vmatpush1.msra.mxu0 %v1542
    %2204 = vmatprep.subr.mxu0 %v1551
    %2205 = vmatpush1.msra.mxu0 %v1550
    %2206 = vmatprep.subr.mxu0 %v1559
    %2207 = vmatpush1.msra.mxu0 %v1558
    %2208 = vmatprep.subr.mxu0 %v1567
    %2209 = vmatpush1.msra.mxu0 %v1566
    %2210 = vmatprep.subr.mxu0 %v1575
    %2211 = vmatpush1.msra.mxu0 %v1574
    %2212 = vmatprep.subr.mxu0 %v1583
    %2213 = vmatpush1.msra.mxu0 %v1582
    %2214 = vmatprep.subr.mxu0 %v1591
    %2215 = vmatpush1.msra.mxu0 %v1590
    %2216 = vmatprep.subr.mxu0 %v1599
    %2217 = vmatpush1.msra.mxu0 %v1598
    %2218 = vmatprep.subr.mxu0 %v1607
    %2219 = vmatpush1.msra.mxu0 %v1606
    %2220 = vmatprep.subr.mxu0 %v1615
    %2221 = vmatpush1.msra.mxu0 %v1614
    %2222 = vmatprep.subr.mxu0 %v1623
    %2223 = vmatpush1.msra.mxu0 %v1622
    %2224 = vmatprep.subr.mxu0 %v1631
    %2225 = vmatpush1.msra.mxu0 %v1630
    %2226 = vmatprep.subr.mxu0 %v1639
    %2227 = vmatpush1.msra.mxu0 %v1638
    %2228 = vmatprep.subr.mxu0 %v1647
    %2229 = vmatpush1.msra.mxu0 %v1646
    %2230 = vmatprep.subr.mxu0 %v1655
    %2231 = vmatpush1.msra.mxu0 %v1654
    %2232 = vmatprep.subr.mxu0 %v1663
    %2233 = vmatpush1.msra.mxu0 %v1662
    %2234 = vmatprep.subr.mxu0 %v1671
    %2235 = vmatpush1.msra.mxu0 %v1670
    %2236 = vmatprep.subr.mxu0 %v1679
    %2237 = vmatpush1.msra.mxu0 %v1678
    %2238 = vmatprep.subr.mxu0 %v1687
    %2239 = vmatpush1.msra.mxu0 %v1686
    %2240 = vmatprep.subr.mxu0 %v1695
    %2241 = vmatpush1.msra.mxu0 %v1694
    %2242 = vmatprep.subr.mxu0 %v1703
    %2243 = vmatpush1.msra.mxu0 %v1702
    %2244 = vmatprep.subr.mxu0 %v1711
    %2245 = vmatpush1.msra.mxu0 %v1710
    %2246 = vmatprep.subr.mxu0 %v1719
    %2247 = vmatpush1.msra.mxu0 %v1718
    %2248 = vmatprep.subr.mxu0 %v1727
    %2249 = vmatpush1.msra.mxu0 %v1726
    %2250 = vmatprep.subr.mxu0 %v1735
    %2251 = vmatpush1.msra.mxu0 %v1734
    %2252 = vmatprep.subr.mxu0 %v1743
    %2253 = vmatpush1.msra.mxu0 %v1742
    %2254 = vmatprep.subr.mxu0 %v1751
    %2255 = vmatpush1.msra.mxu0 %v1750
    %2256 = vmatprep.mubr.f32.mxu0 %v661
    %2257 = vmatmul.mubr.f32.gmra.mrb[0].mxu0 %v659
    %v2258 = vpop.f32.mrb[0].mxu0
    %v2259 = vadd.f32 %v2188, %v2258
    %v2260 = vpop.f32.mrb[0].mxu0
    %v2261 = vadd.f32 %v2190, %v2260
    %2262 = vdwg.mxu0
    %2263 = vmatprep.subr.mxu0 %v1759
    %2264 = vmatpush1.msra.mxu0 %v1758
    %2265 = vmatprep.subr.mxu0 %v1767
    %2266 = vmatpush1.msra.mxu0 %v1766
    %2267 = vmatprep.subr.mxu0 %v1775
    %2268 = vmatpush1.msra.mxu0 %v1774
    %2269 = vmatprep.subr.mxu0 %v1783
    %2270 = vmatpush1.msra.mxu0 %v1782
    %2271 = vmatprep.subr.mxu0 %v1791
    %2272 = vmatpush1.msra.mxu0 %v1790
    %2273 = vmatprep.subr.mxu0 %v1799
    %2274 = vmatpush1.msra.mxu0 %v1798
    %2275 = vmatprep.subr.mxu0 %v1807
    %2276 = vmatpush1.msra.mxu0 %v1806
    %2277 = vmatprep.subr.mxu0 %v1815
    %2278 = vmatpush1.msra.mxu0 %v1814
    %2279 = vmatprep.subr.mxu0 %v1823
    %2280 = vmatpush1.msra.mxu0 %v1822
    %2281 = vmatprep.subr.mxu0 %v1831
    %2282 = vmatpush1.msra.mxu0 %v1830
    %2283 = vmatprep.subr.mxu0 %v1839
    %2284 = vmatpush1.msra.mxu0 %v1838
    %2285 = vmatprep.subr.mxu0 %v1847
    %2286 = vmatpush1.msra.mxu0 %v1846
    %2287 = vmatprep.subr.mxu0 %v1855
    %2288 = vmatpush1.msra.mxu0 %v1854
    %2289 = vmatprep.subr.mxu0 %v1863
    %2290 = vmatpush1.msra.mxu0 %v1862
    %2291 = vmatprep.subr.mxu0 %v1871
    %2292 = vmatpush1.msra.mxu0 %v1870
    %2293 = vmatprep.subr.mxu0 %v1879
    %2294 = vmatpush1.msra.mxu0 %v1878
    %2295 = vmatprep.subr.mxu0 %v1887
    %2296 = vmatpush1.msra.mxu0 %v1886
    %2297 = vmatprep.subr.mxu0 %v1895
    %2298 = vmatpush1.msra.mxu0 %v1894
    %2299 = vmatprep.subr.mxu0 %v1903
    %2300 = vmatpush1.msra.mxu0 %v1902
    %2301 = vmatprep.subr.mxu0 %v1911
    %2302 = vmatpush1.msra.mxu0 %v1910
    %2303 = vmatprep.subr.mxu0 %v1919
    %2304 = vmatpush1.msra.mxu0 %v1918
    %2305 = vmatprep.subr.mxu0 %v1927
    %2306 = vmatpush1.msra.mxu0 %v1926
    %2307 = vmatprep.subr.mxu0 %v1935
    %2308 = vmatpush1.msra.mxu0 %v1934
    %2309 = vmatprep.subr.mxu0 %v1959
    %2310 = vmatpush1.msra.mxu0 %v1956
    %2311 = vmatprep.subr.mxu0 0.0
    %2312 = vmatpush1.msra.mxu0 0.0
    %2313 = vmatprep.subr.mxu0 0.0
    %2314 = vmatpush1.msra.mxu0 0.0
    %2315 = vmatprep.subr.mxu0 0.0
    %2316 = vmatpush1.msra.mxu0 0.0
    %2317 = vmatprep.subr.mxu0 0.0
    %2318 = vmatpush1.msra.mxu0 0.0
    %2319 = vmatprep.subr.mxu0 0.0
    %2320 = vmatpush1.msra.mxu0 0.0
    %2321 = vmatprep.subr.mxu0 0.0
    %2322 = vmatpush1.msra.mxu0 0.0
    %2323 = vmatprep.subr.mxu0 0.0
    %2324 = vmatpush1.msra.mxu0 0.0
    %2325 = vmatprep.subr.mxu0 0.0
    %2326 = vmatpush1.msra.mxu0 0.0
    %2327 = vmatprep.mubr.f32.mxu0 %v1952
    %2328 = vmatmul.mubr.f32.gmra.mrb[0].mxu0 %v730
    %v2329 = vpop.f32.mrb[0].mxu0
    %v2330 = vadd.f32 %v2259, %v2329
    %v2331 = vpop.f32.mrb[0].mxu0
    %v2332 = vadd.f32 %v2261, %v2331
    %2333 = vdwg.mxu0
    %2334 = vmatprep.subr.mxu0 %v737
    %2335 = vmatpush1.msra.mxu0 %v736
    %2336 = vmatprep.subr.mxu0 %v745
    %2337 = vmatpush1.msra.mxu0 %v744
    %2338 = vmatprep.subr.mxu0 %v753
    %2339 = vmatpush1.msra.mxu0 %v752
    %2340 = vmatprep.subr.mxu0 %v761
    %2341 = vmatpush1.msra.mxu0 %v760
    %2342 = vmatprep.subr.mxu0 %v769
    %2343 = vmatpush1.msra.mxu0 %v768
    %2344 = vmatprep.subr.mxu0 %v777
    %2345 = vmatpush1.msra.mxu0 %v776
    %2346 = vmatprep.subr.mxu0 %v785
    %2347 = vmatpush1.msra.mxu0 %v784
    %2348 = vmatprep.subr.mxu0 %v793
    %2349 = vmatpush1.msra.mxu0 %v792
    %2350 = vmatprep.subr.mxu0 %v801
    %2351 = vmatpush1.msra.mxu0 %v800
    %2352 = vmatprep.subr.mxu0 %v809
    %2353 = vmatpush1.msra.mxu0 %v808
    %2354 = vmatprep.subr.mxu0 %v817
    %2355 = vmatpush1.msra.mxu0 %v816
    %2356 = vmatprep.subr.mxu0 %v825
    %2357 = vmatpush1.msra.mxu0 %v824
    %2358 = vmatprep.subr.mxu0 %v833
    %2359 = vmatpush1.msra.mxu0 %v832
    %2360 = vmatprep.subr.mxu0 %v841
    %2361 = vmatpush1.msra.mxu0 %v840
    %2362 = vmatprep.subr.mxu0 %v849
    %2363 = vmatpush1.msra.mxu0 %v848
    %2364 = vmatprep.subr.mxu0 %v857
    %2365 = vmatpush1.msra.mxu0 %v856
    %2366 = vmatprep.subr.mxu0 %v865
    %2367 = vmatpush1.msra.mxu0 %v864
    %2368 = vmatprep.subr.mxu0 %v873
    %2369 = vmatpush1.msra.mxu0 %v872
    %2370 = vmatprep.subr.mxu0 %v881
    %2371 = vmatpush1.msra.mxu0 %v880
    %2372 = vmatprep.subr.mxu0 %v889
    %2373 = vmatpush1.msra.mxu0 %v888
    %2374 = vmatprep.subr.mxu0 %v897
    %2375 = vmatpush1.msra.mxu0 %v896
    %2376 = vmatprep.subr.mxu0 %v905
    %2377 = vmatpush1.msra.mxu0 %v904
    %2378 = vmatprep.subr.mxu0 %v913
    %2379 = vmatpush1.msra.mxu0 %v912
    %2380 = vmatprep.subr.mxu0 %v921
    %2381 = vmatpush1.msra.mxu0 %v920
    %2382 = vmatprep.subr.mxu0 %v929
    %2383 = vmatpush1.msra.mxu0 %v928
    %2384 = vmatprep.subr.mxu0 %v937
    %2385 = vmatpush1.msra.mxu0 %v936
    %2386 = vmatprep.subr.mxu0 %v945
    %2387 = vmatpush1.msra.mxu0 %v944
    %2388 = vmatprep.subr.mxu0 %v953
    %2389 = vmatpush1.msra.mxu0 %v952
    %2390 = vmatprep.subr.mxu0 %v961
    %2391 = vmatpush1.msra.mxu0 %v960
    %2392 = vmatprep.subr.mxu0 %v969
    %2393 = vmatpush1.msra.mxu0 %v968
    %2394 = vmatprep.subr.mxu0 %v977
    %2395 = vmatpush1.msra.mxu0 %v976
    %2396 = vmatprep.subr.mxu0 %v985
    %2397 = vmatpush1.msra.mxu0 %v984
    %2398 = vmatprep.mubr.f32.mxu0 %v448
    %2399 = vmatmul.mubr.f32.gmra.mrb[0].mxu0 %v446
    %v2400 = vpop.f32.mrb[0].mxu0
    %v2401 = vadd.f32 0.0, %v2400
    %v2402 = vpop.f32.mrb[0].mxu0
    %v2403 = vadd.f32 0.0, %v2402
    %2404 = vdwg.mxu0
    %2405 = vmatprep.subr.mxu0 %v993
    %2406 = vmatpush1.msra.mxu0 %v992
    %2407 = vmatprep.subr.mxu0 %v1001
    %2408 = vmatpush1.msra.mxu0 %v1000
    %2409 = vmatprep.subr.mxu0 %v1009
    %2410 = vmatpush1.msra.mxu0 %v1008
    %2411 = vmatprep.subr.mxu0 %v1017
    %2412 = vmatpush1.msra.mxu0 %v1016
    %2413 = vmatprep.subr.mxu0 %v1025
    %2414 = vmatpush1.msra.mxu0 %v1024
    %2415 = vmatprep.subr.mxu0 %v1033
    %2416 = vmatpush1.msra.mxu0 %v1032
    %2417 = vmatprep.subr.mxu0 %v1041
    %2418 = vmatpush1.msra.mxu0 %v1040
    %2419 = vmatprep.subr.mxu0 %v1049
    %2420 = vmatpush1.msra.mxu0 %v1048
    %2421 = vmatprep.subr.mxu0 %v1057
    %2422 = vmatpush1.msra.mxu0 %v1056
    %2423 = vmatprep.subr.mxu0 %v1065
    %2424 = vmatpush1.msra.mxu0 %v1064
    %2425 = vmatprep.subr.mxu0 %v1073
    %2426 = vmatpush1.msra.mxu0 %v1072
    %2427 = vmatprep.subr.mxu0 %v1081
    %2428 = vmatpush1.msra.mxu0 %v1080
    %2429 = vmatprep.subr.mxu0 %v1089
    %2430 = vmatpush1.msra.mxu0 %v1088
    %2431 = vmatprep.subr.mxu0 %v1097
    %2432 = vmatpush1.msra.mxu0 %v1096
    %2433 = vmatprep.subr.mxu0 %v1105
    %2434 = vmatpush1.msra.mxu0 %v1104
    %2435 = vmatprep.subr.mxu0 %v1113
    %2436 = vmatpush1.msra.mxu0 %v1112
    %2437 = vmatprep.subr.mxu0 %v1121
    %2438 = vmatpush1.msra.mxu0 %v1120
    %2439 = vmatprep.subr.mxu0 %v1129
    %2440 = vmatpush1.msra.mxu0 %v1128
    %2441 = vmatprep.subr.mxu0 %v1137
    %2442 = vmatpush1.msra.mxu0 %v1136
    %2443 = vmatprep.subr.mxu0 %v1145
    %2444 = vmatpush1.msra.mxu0 %v1144
    %2445 = vmatprep.subr.mxu0 %v1153
    %2446 = vmatpush1.msra.mxu0 %v1152
    %2447 = vmatprep.subr.mxu0 %v1161
    %2448 = vmatpush1.msra.mxu0 %v1160
    %2449 = vmatprep.subr.mxu0 %v1169
    %2450 = vmatpush1.msra.mxu0 %v1168
    %2451 = vmatprep.subr.mxu0 %v1177
    %2452 = vmatpush1.msra.mxu0 %v1176
    %2453 = vmatprep.subr.mxu0 %v1185
    %2454 = vmatpush1.msra.mxu0 %v1184
    %2455 = vmatprep.subr.mxu0 %v1193
    %2456 = vmatpush1.msra.mxu0 %v1192
    %2457 = vmatprep.subr.mxu0 %v1201
    %2458 = vmatpush1.msra.mxu0 %v1200
    %2459 = vmatprep.subr.mxu0 %v1209
    %2460 = vmatpush1.msra.mxu0 %v1208
    %2461 = vmatprep.subr.mxu0 %v1217
    %2462 = vmatpush1.msra.mxu0 %v1216
    %2463 = vmatprep.subr.mxu0 %v1225
    %2464 = vmatpush1.msra.mxu0 %v1224
    %2465 = vmatprep.subr.mxu0 %v1233
    %2466 = vmatpush1.msra.mxu0 %v1232
    %2467 = vmatprep.subr.mxu0 %v1241
    %2468 = vmatpush1.msra.mxu0 %v1240
    %2469 = vmatprep.mubr.f32.mxu0 %v519
    %2470 = vmatmul.mubr.f32.gmra.mrb[0].mxu0 %v517
    %v2471 = vpop.f32.mrb[0].mxu0
    %v2472 = vadd.f32 %v2401, %v2471
    %v2473 = vpop.f32.mrb[0].mxu0
    %v2474 = vadd.f32 %v2403, %v2473
    %2475 = vdwg.mxu0
    %2476 = vmatprep.subr.mxu0 %v1249
    %2477 = vmatpush1.msra.mxu0 %v1248
    %2478 = vmatprep.subr.mxu0 %v1257
    %2479 = vmatpush1.msra.mxu0 %v1256
    %2480 = vmatprep.subr.mxu0 %v1265
    %2481 = vmatpush1.msra.mxu0 %v1264
    %2482 = vmatprep.subr.mxu0 %v1273
    %2483 = vmatpush1.msra.mxu0 %v1272
    %2484 = vmatprep.subr.mxu0 %v1281
    %2485 = vmatpush1.msra.mxu0 %v1280
    %2486 = vmatprep.subr.mxu0 %v1289
    %2487 = vmatpush1.msra.mxu0 %v1288
    %2488 = vmatprep.subr.mxu0 %v1297
    %2489 = vmatpush1.msra.mxu0 %v1296
    %2490 = vmatprep.subr.mxu0 %v1305
    %2491 = vmatpush1.msra.mxu0 %v1304
    %2492 = vmatprep.subr.mxu0 %v1313
    %2493 = vmatpush1.msra.mxu0 %v1312
    %2494 = vmatprep.subr.mxu0 %v1321
    %2495 = vmatpush1.msra.mxu0 %v1320
    %2496 = vmatprep.subr.mxu0 %v1329
    %2497 = vmatpush1.msra.mxu0 %v1328
    %2498 = vmatprep.subr.mxu0 %v1337
    %2499 = vmatpush1.msra.mxu0 %v1336
    %2500 = vmatprep.subr.mxu0 %v1345
    %2501 = vmatpush1.msra.mxu0 %v1344
    %2502 = vmatprep.subr.mxu0 %v1353
    %2503 = vmatpush1.msra.mxu0 %v1352
    %2504 = vmatprep.subr.mxu0 %v1361
    %2505 = vmatpush1.msra.mxu0 %v1360
    %2506 = vmatprep.subr.mxu0 %v1369
    %2507 = vmatpush1.msra.mxu0 %v1368
    %2508 = vmatprep.subr.mxu0 %v1377
    %2509 = vmatpush1.msra.mxu0 %v1376
    %2510 = vmatprep.subr.mxu0 %v1385
    %2511 = vmatpush1.msra.mxu0 %v1384
    %2512 = vmatprep.subr.mxu0 %v1393
    %2513 = vmatpush1.msra.mxu0 %v1392
    %2514 = vmatprep.subr.mxu0 %v1401
    %2515 = vmatpush1.msra.mxu0 %v1400
    %2516 = vmatprep.subr.mxu0 %v1409
    %2517 = vmatpush1.msra.mxu0 %v1408
    %2518 = vmatprep.subr.mxu0 %v1417
    %2519 = vmatpush1.msra.mxu0 %v1416
    %2520 = vmatprep.subr.mxu0 %v1425
    %2521 = vmatpush1.msra.mxu0 %v1424
    %2522 = vmatprep.subr.mxu0 %v1433
    %2523 = vmatpush1.msra.mxu0 %v1432
    %2524 = vmatprep.subr.mxu0 %v1441
    %2525 = vmatpush1.msra.mxu0 %v1440
    %2526 = vmatprep.subr.mxu0 %v1449
    %2527 = vmatpush1.msra.mxu0 %v1448
    %2528 = vmatprep.subr.mxu0 %v1457
    %2529 = vmatpush1.msra.mxu0 %v1456
    %2530 = vmatprep.subr.mxu0 %v1465
    %2531 = vmatpush1.msra.mxu0 %v1464
    %2532 = vmatprep.subr.mxu0 %v1473
    %2533 = vmatpush1.msra.mxu0 %v1472
    %2534 = vmatprep.subr.mxu0 %v1481
    %2535 = vmatpush1.msra.mxu0 %v1480
    %2536 = vmatprep.subr.mxu0 %v1489
    %2537 = vmatpush1.msra.mxu0 %v1488
    %2538 = vmatprep.subr.mxu0 %v1497
    %2539 = vmatpush1.msra.mxu0 %v1496
    %2540 = vmatprep.mubr.f32.mxu0 %v590
    %2541 = vmatmul.mubr.f32.gmra.mrb[0].mxu0 %v588
    %v2542 = vpop.f32.mrb[0].mxu0
    %v2543 = vadd.f32 %v2472, %v2542
    %v2544 = vpop.f32.mrb[0].mxu0
    %v2545 = vadd.f32 %v2474, %v2544
    %2546 = vdwg.mxu0
    %2547 = vmatprep.subr.mxu0 %v1505
    %2548 = vmatpush1.msra.mxu0 %v1504
    %2549 = vmatprep.subr.mxu0 %v1513
    %2550 = vmatpush1.msra.mxu0 %v1512
    %2551 = vmatprep.subr.mxu0 %v1521
    %2552 = vmatpush1.msra.mxu0 %v1520
    %2553 = vmatprep.subr.mxu0 %v1529
    %2554 = vmatpush1.msra.mxu0 %v1528
    %2555 = vmatprep.subr.mxu0 %v1537
    %2556 = vmatpush1.msra.mxu0 %v1536
    %2557 = vmatprep.subr.mxu0 %v1545
    %2558 = vmatpush1.msra.mxu0 %v1544
    %2559 = vmatprep.subr.mxu0 %v1553
    %2560 = vmatpush1.msra.mxu0 %v1552
    %2561 = vmatprep.subr.mxu0 %v1561
    %2562 = vmatpush1.msra.mxu0 %v1560
    %2563 = vmatprep.subr.mxu0 %v1569
    %2564 = vmatpush1.msra.mxu0 %v1568
    %2565 = vmatprep.subr.mxu0 %v1577
    %2566 = vmatpush1.msra.mxu0 %v1576
    %2567 = vmatprep.subr.mxu0 %v1585
    %2568 = vmatpush1.msra.mxu0 %v1584
    %2569 = vmatprep.subr.mxu0 %v1593
    %2570 = vmatpush1.msra.mxu0 %v1592
    %2571 = vmatprep.subr.mxu0 %v1601
    %2572 = vmatpush1.msra.mxu0 %v1600
    %2573 = vmatprep.subr.mxu0 %v1609
    %2574 = vmatpush1.msra.mxu0 %v1608
    %2575 = vmatprep.subr.mxu0 %v1617
    %2576 = vmatpush1.msra.mxu0 %v1616
    %2577 = vmatprep.subr.mxu0 %v1625
    %2578 = vmatpush1.msra.mxu0 %v1624
    %2579 = vmatprep.subr.mxu0 %v1633
    %2580 = vmatpush1.msra.mxu0 %v1632
    %2581 = vmatprep.subr.mxu0 %v1641
    %2582 = vmatpush1.msra.mxu0 %v1640
    %2583 = vmatprep.subr.mxu0 %v1649
    %2584 = vmatpush1.msra.mxu0 %v1648
    %2585 = vmatprep.subr.mxu0 %v1657
    %2586 = vmatpush1.msra.mxu0 %v1656
    %2587 = vmatprep.subr.mxu0 %v1665
    %2588 = vmatpush1.msra.mxu0 %v1664
    %2589 = vmatprep.subr.mxu0 %v1673
    %2590 = vmatpush1.msra.mxu0 %v1672
    %2591 = vmatprep.subr.mxu0 %v1681
    %2592 = vmatpush1.msra.mxu0 %v1680
    %2593 = vmatprep.subr.mxu0 %v1689
    %2594 = vmatpush1.msra.mxu0 %v1688
    %2595 = vmatprep.subr.mxu0 %v1697
    %2596 = vmatpush1.msra.mxu0 %v1696
    %2597 = vmatprep.subr.mxu0 %v1705
    %2598 = vmatpush1.msra.mxu0 %v1704
    %2599 = vmatprep.subr.mxu0 %v1713
    %2600 = vmatpush1.msra.mxu0 %v1712
    %2601 = vmatprep.subr.mxu0 %v1721
    %2602 = vmatpush1.msra.mxu0 %v1720
    %2603 = vmatprep.subr.mxu0 %v1729
    %2604 = vmatpush1.msra.mxu0 %v1728
    %2605 = vmatprep.subr.mxu0 %v1737
    %2606 = vmatpush1.msra.mxu0 %v1736
    %2607 = vmatprep.subr.mxu0 %v1745
    %2608 = vmatpush1.msra.mxu0 %v1744
    %2609 = vmatprep.subr.mxu0 %v1753
    %2610 = vmatpush1.msra.mxu0 %v1752
    %2611 = vmatprep.mubr.f32.mxu0 %v661
    %2612 = vmatmul.mubr.f32.gmra.mrb[0].mxu0 %v659
    %v2613 = vpop.f32.mrb[0].mxu0
    %v2614 = vadd.f32 %v2543, %v2613
    %v2615 = vpop.f32.mrb[0].mxu0
    %v2616 = vadd.f32 %v2545, %v2615
    %2617 = vdwg.mxu0
    %2618 = vmatprep.subr.mxu0 %v1761
    %2619 = vmatpush1.msra.mxu0 %v1760
    %2620 = vmatprep.subr.mxu0 %v1769
    %2621 = vmatpush1.msra.mxu0 %v1768
    %2622 = vmatprep.subr.mxu0 %v1777
    %2623 = vmatpush1.msra.mxu0 %v1776
    %2624 = vmatprep.subr.mxu0 %v1785
    %2625 = vmatpush1.msra.mxu0 %v1784
    %2626 = vmatprep.subr.mxu0 %v1793
    %2627 = vmatpush1.msra.mxu0 %v1792
    %2628 = vmatprep.subr.mxu0 %v1801
    %2629 = vmatpush1.msra.mxu0 %v1800
    %2630 = vmatprep.subr.mxu0 %v1809
    %2631 = vmatpush1.msra.mxu0 %v1808
    %2632 = vmatprep.subr.mxu0 %v1817
    %2633 = vmatpush1.msra.mxu0 %v1816
    %2634 = vmatprep.subr.mxu0 %v1825
    %2635 = vmatpush1.msra.mxu0 %v1824
    %2636 = vmatprep.subr.mxu0 %v1833
    %2637 = vmatpush1.msra.mxu0 %v1832
    %2638 = vmatprep.subr.mxu0 %v1841
    %2639 = vmatpush1.msra.mxu0 %v1840
    %2640 = vmatprep.subr.mxu0 %v1849
    %2641 = vmatpush1.msra.mxu0 %v1848
    %2642 = vmatprep.subr.mxu0 %v1857
    %2643 = vmatpush1.msra.mxu0 %v1856
    %2644 = vmatprep.subr.mxu0 %v1865
    %2645 = vmatpush1.msra.mxu0 %v1864
    %2646 = vmatprep.subr.mxu0 %v1873
    %2647 = vmatpush1.msra.mxu0 %v1872
    %2648 = vmatprep.subr.mxu0 %v1881
    %2649 = vmatpush1.msra.mxu0 %v1880
    %2650 = vmatprep.subr.mxu0 %v1889
    %2651 = vmatpush1.msra.mxu0 %v1888
    %2652 = vmatprep.subr.mxu0 %v1897
    %2653 = vmatpush1.msra.mxu0 %v1896
    %2654 = vmatprep.subr.mxu0 %v1905
    %2655 = vmatpush1.msra.mxu0 %v1904
    %2656 = vmatprep.subr.mxu0 %v1913
    %2657 = vmatpush1.msra.mxu0 %v1912
    %2658 = vmatprep.subr.mxu0 %v1921
    %2659 = vmatpush1.msra.mxu0 %v1920
    %2660 = vmatprep.subr.mxu0 %v1929
    %2661 = vmatpush1.msra.mxu0 %v1928
    %2662 = vmatprep.subr.mxu0 %v1937
    %2663 = vmatpush1.msra.mxu0 %v1936
    %2664 = vmatprep.subr.mxu0 %v1965
    %2665 = vmatpush1.msra.mxu0 %v1962
    %2666 = vmatprep.subr.mxu0 0.0
    %2667 = vmatpush1.msra.mxu0 0.0
    %2668 = vmatprep.subr.mxu0 0.0
    %2669 = vmatpush1.msra.mxu0 0.0
    %2670 = vmatprep.subr.mxu0 0.0
    %2671 = vmatpush1.msra.mxu0 0.0
    %2672 = vmatprep.subr.mxu0 0.0
    %2673 = vmatpush1.msra.mxu0 0.0
    %2674 = vmatprep.subr.mxu0 0.0
    %2675 = vmatpush1.msra.mxu0 0.0
    %2676 = vmatprep.subr.mxu0 0.0
    %2677 = vmatpush1.msra.mxu0 0.0
    %2678 = vmatprep.subr.mxu0 0.0
    %2679 = vmatpush1.msra.mxu0 0.0
    %2680 = vmatprep.subr.mxu0 0.0
    %2681 = vmatpush1.msra.mxu0 0.0
    %2682 = vmatprep.mubr.f32.mxu0 %v1952
    %2683 = vmatmul.mubr.f32.gmra.mrb[0].mxu0 %v730
    %v2684 = vpop.f32.mrb[0].mxu0
    %v2685 = vadd.f32 %v2614, %v2684
    %v2686 = vpop.f32.mrb[0].mxu0
    %v2687 = vadd.f32 %v2616, %v2686
    %2688 = vdwg.mxu0
    %2689 = vmatprep.subr.mxu0 %v739
    %2690 = vmatpush1.msra.mxu0 %v738
    %2691 = vmatprep.subr.mxu0 %v747
    %2692 = vmatpush1.msra.mxu0 %v746
    %2693 = vmatprep.subr.mxu0 %v755
    %2694 = vmatpush1.msra.mxu0 %v754
    %2695 = vmatprep.subr.mxu0 %v763
    %2696 = vmatpush1.msra.mxu0 %v762
    %2697 = vmatprep.subr.mxu0 %v771
    %2698 = vmatpush1.msra.mxu0 %v770
    %2699 = vmatprep.subr.mxu0 %v779
    %2700 = vmatpush1.msra.mxu0 %v778
    %2701 = vmatprep.subr.mxu0 %v787
    %2702 = vmatpush1.msra.mxu0 %v786
    %2703 = vmatprep.subr.mxu0 %v795
    %2704 = vmatpush1.msra.mxu0 %v794
    %2705 = vmatprep.subr.mxu0 %v803
    %2706 = vmatpush1.msra.mxu0 %v802
    %2707 = vmatprep.subr.mxu0 %v811
    %2708 = vmatpush1.msra.mxu0 %v810
    %2709 = vmatprep.subr.mxu0 %v819
    %2710 = vmatpush1.msra.mxu0 %v818
    %2711 = vmatprep.subr.mxu0 %v827
    %2712 = vmatpush1.msra.mxu0 %v826
    %2713 = vmatprep.subr.mxu0 %v835
    %2714 = vmatpush1.msra.mxu0 %v834
    %2715 = vmatprep.subr.mxu0 %v843
    %2716 = vmatpush1.msra.mxu0 %v842
    %2717 = vmatprep.subr.mxu0 %v851
    %2718 = vmatpush1.msra.mxu0 %v850
    %2719 = vmatprep.subr.mxu0 %v859
    %2720 = vmatpush1.msra.mxu0 %v858
    %2721 = vmatprep.subr.mxu0 %v867
    %2722 = vmatpush1.msra.mxu0 %v866
    %2723 = vmatprep.subr.mxu0 %v875
    %2724 = vmatpush1.msra.mxu0 %v874
    %2725 = vmatprep.subr.mxu0 %v883
    %2726 = vmatpush1.msra.mxu0 %v882
    %2727 = vmatprep.subr.mxu0 %v891
    %2728 = vmatpush1.msra.mxu0 %v890
    %2729 = vmatprep.subr.mxu0 %v899
    %2730 = vmatpush1.msra.mxu0 %v898
    %2731 = vmatprep.subr.mxu0 %v907
    %2732 = vmatpush1.msra.mxu0 %v906
    %2733 = vmatprep.subr.mxu0 %v915
    %2734 = vmatpush1.msra.mxu0 %v914
    %2735 = vmatprep.subr.mxu0 %v923
    %2736 = vmatpush1.msra.mxu0 %v922
    %2737 = vmatprep.subr.mxu0 %v931
    %2738 = vmatpush1.msra.mxu0 %v930
    %2739 = vmatprep.subr.mxu0 %v939
    %2740 = vmatpush1.msra.mxu0 %v938
    %2741 = vmatprep.subr.mxu0 %v947
    %2742 = vmatpush1.msra.mxu0 %v946
    %2743 = vmatprep.subr.mxu0 %v955
    %2744 = vmatpush1.msra.mxu0 %v954
    %2745 = vmatprep.subr.mxu0 %v963
    %2746 = vmatpush1.msra.mxu0 %v962
    %2747 = vmatprep.subr.mxu0 %v971
    %2748 = vmatpush1.msra.mxu0 %v970
    %2749 = vmatprep.subr.mxu0 %v979
    %2750 = vmatpush1.msra.mxu0 %v978
    %2751 = vmatprep.subr.mxu0 %v987
    %2752 = vmatpush1.msra.mxu0 %v986
    %2753 = vmatprep.mubr.f32.mxu0 %v448
    %2754 = vmatmul.mubr.f32.gmra.mrb[0].mxu0 %v446
    %v2755 = vpop.f32.mrb[0].mxu0
    %v2756 = vadd.f32 0.0, %v2755
    %v2757 = vpop.f32.mrb[0].mxu0
    %v2758 = vadd.f32 0.0, %v2757
    %2759 = vdwg.mxu0
    %2760 = vmatprep.subr.mxu0 %v995
    %2761 = vmatpush1.msra.mxu0 %v994
    %2762 = vmatprep.subr.mxu0 %v1003
    %2763 = vmatpush1.msra.mxu0 %v1002
    %2764 = vmatprep.subr.mxu0 %v1011
    %2765 = vmatpush1.msra.mxu0 %v1010
    %2766 = vmatprep.subr.mxu0 %v1019
    %2767 = vmatpush1.msra.mxu0 %v1018
    %2768 = vmatprep.subr.mxu0 %v1027
    %2769 = vmatpush1.msra.mxu0 %v1026
    %2770 = vmatprep.subr.mxu0 %v1035
    %2771 = vmatpush1.msra.mxu0 %v1034
    %2772 = vmatprep.subr.mxu0 %v1043
    %2773 = vmatpush1.msra.mxu0 %v1042
    %2774 = vmatprep.subr.mxu0 %v1051
    %2775 = vmatpush1.msra.mxu0 %v1050
    %2776 = vmatprep.subr.mxu0 %v1059
    %2777 = vmatpush1.msra.mxu0 %v1058
    %2778 = vmatprep.subr.mxu0 %v1067
    %2779 = vmatpush1.msra.mxu0 %v1066
    %2780 = vmatprep.subr.mxu0 %v1075
    %2781 = vmatpush1.msra.mxu0 %v1074
    %2782 = vmatprep.subr.mxu0 %v1083
    %2783 = vmatpush1.msra.mxu0 %v1082
    %2784 = vmatprep.subr.mxu0 %v1091
    %2785 = vmatpush1.msra.mxu0 %v1090
    %2786 = vmatprep.subr.mxu0 %v1099
    %2787 = vmatpush1.msra.mxu0 %v1098
    %2788 = vmatprep.subr.mxu0 %v1107
    %2789 = vmatpush1.msra.mxu0 %v1106
    %2790 = vmatprep.subr.mxu0 %v1115
    %2791 = vmatpush1.msra.mxu0 %v1114
    %2792 = vmatprep.subr.mxu0 %v1123
    %2793 = vmatpush1.msra.mxu0 %v1122
    %2794 = vmatprep.subr.mxu0 %v1131
    %2795 = vmatpush1.msra.mxu0 %v1130
    %2796 = vmatprep.subr.mxu0 %v1139
    %2797 = vmatpush1.msra.mxu0 %v1138
    %2798 = vmatprep.subr.mxu0 %v1147
    %2799 = vmatpush1.msra.mxu0 %v1146
    %2800 = vmatprep.subr.mxu0 %v1155
    %2801 = vmatpush1.msra.mxu0 %v1154
    %2802 = vmatprep.subr.mxu0 %v1163
    %2803 = vmatpush1.msra.mxu0 %v1162
    %2804 = vmatprep.subr.mxu0 %v1171
    %2805 = vmatpush1.msra.mxu0 %v1170
    %2806 = vmatprep.subr.mxu0 %v1179
    %2807 = vmatpush1.msra.mxu0 %v1178
    %2808 = vmatprep.subr.mxu0 %v1187
    %2809 = vmatpush1.msra.mxu0 %v1186
    %2810 = vmatprep.subr.mxu0 %v1195
    %2811 = vmatpush1.msra.mxu0 %v1194
    %2812 = vmatprep.subr.mxu0 %v1203
    %2813 = vmatpush1.msra.mxu0 %v1202
    %2814 = vmatprep.subr.mxu0 %v1211
    %2815 = vmatpush1.msra.mxu0 %v1210
    %2816 = vmatprep.subr.mxu0 %v1219
    %2817 = vmatpush1.msra.mxu0 %v1218
    %2818 = vmatprep.subr.mxu0 %v1227
    %2819 = vmatpush1.msra.mxu0 %v1226
    %2820 = vmatprep.subr.mxu0 %v1235
    %2821 = vmatpush1.msra.mxu0 %v1234
    %2822 = vmatprep.subr.mxu0 %v1243
    %2823 = vmatpush1.msra.mxu0 %v1242
    %2824 = vmatprep.mubr.f32.mxu0 %v519
    %2825 = vmatmul.mubr.f32.gmra.mrb[0].mxu0 %v517
    %v2826 = vpop.f32.mrb[0].mxu0
    %v2827 = vadd.f32 %v2756, %v2826
    %v2828 = vpop.f32.mrb[0].mxu0
    %v2829 = vadd.f32 %v2758, %v2828
    %2830 = vdwg.mxu0
    %2831 = vmatprep.subr.mxu0 %v1251
    %2832 = vmatpush1.msra.mxu0 %v1250
    %2833 = vmatprep.subr.mxu0 %v1259
    %2834 = vmatpush1.msra.mxu0 %v1258
    %2835 = vmatprep.subr.mxu0 %v1267
    %2836 = vmatpush1.msra.mxu0 %v1266
    %2837 = vmatprep.subr.mxu0 %v1275
    %2838 = vmatpush1.msra.mxu0 %v1274
    %2839 = vmatprep.subr.mxu0 %v1283
    %2840 = vmatpush1.msra.mxu0 %v1282
    %2841 = vmatprep.subr.mxu0 %v1291
    %2842 = vmatpush1.msra.mxu0 %v1290
    %2843 = vmatprep.subr.mxu0 %v1299
    %2844 = vmatpush1.msra.mxu0 %v1298
    %2845 = vmatprep.subr.mxu0 %v1307
    %2846 = vmatpush1.msra.mxu0 %v1306
    %2847 = vmatprep.subr.mxu0 %v1315
    %2848 = vmatpush1.msra.mxu0 %v1314
    %2849 = vmatprep.subr.mxu0 %v1323
    %2850 = vmatpush1.msra.mxu0 %v1322
    %2851 = vmatprep.subr.mxu0 %v1331
    %2852 = vmatpush1.msra.mxu0 %v1330
    %2853 = vmatprep.subr.mxu0 %v1339
    %2854 = vmatpush1.msra.mxu0 %v1338
    %2855 = vmatprep.subr.mxu0 %v1347
    %2856 = vmatpush1.msra.mxu0 %v1346
    %2857 = vmatprep.subr.mxu0 %v1355
    %2858 = vmatpush1.msra.mxu0 %v1354
    %2859 = vmatprep.subr.mxu0 %v1363
    %2860 = vmatpush1.msra.mxu0 %v1362
    %2861 = vmatprep.subr.mxu0 %v1371
    %2862 = vmatpush1.msra.mxu0 %v1370
    %2863 = vmatprep.subr.mxu0 %v1379
    %2864 = vmatpush1.msra.mxu0 %v1378
    %2865 = vmatprep.subr.mxu0 %v1387
    %2866 = vmatpush1.msra.mxu0 %v1386
    %2867 = vmatprep.subr.mxu0 %v1395
    %2868 = vmatpush1.msra.mxu0 %v1394
    %2869 = vmatprep.subr.mxu0 %v1403
    %2870 = vmatpush1.msra.mxu0 %v1402
    %2871 = vmatprep.subr.mxu0 %v1411
    %2872 = vmatpush1.msra.mxu0 %v1410
    %2873 = vmatprep.subr.mxu0 %v1419
    %2874 = vmatpush1.msra.mxu0 %v1418
    %2875 = vmatprep.subr.mxu0 %v1427
    %2876 = vmatpush1.msra.mxu0 %v1426
    %2877 = vmatprep.subr.mxu0 %v1435
    %2878 = vmatpush1.msra.mxu0 %v1434
    %2879 = vmatprep.subr.mxu0 %v1443
    %2880 = vmatpush1.msra.mxu0 %v1442
    %2881 = vmatprep.subr.mxu0 %v1451
    %2882 = vmatpush1.msra.mxu0 %v1450
    %2883 = vmatprep.subr.mxu0 %v1459
    %2884 = vmatpush1.msra.mxu0 %v1458
    %2885 = vmatprep.subr.mxu0 %v1467
    %2886 = vmatpush1.msra.mxu0 %v1466
    %2887 = vmatprep.subr.mxu0 %v1475
    %2888 = vmatpush1.msra.mxu0 %v1474
    %2889 = vmatprep.subr.mxu0 %v1483
    %2890 = vmatpush1.msra.mxu0 %v1482
    %2891 = vmatprep.subr.mxu0 %v1491
    %2892 = vmatpush1.msra.mxu0 %v1490
    %2893 = vmatprep.subr.mxu0 %v1499
    %2894 = vmatpush1.msra.mxu0 %v1498
    %2895 = vmatprep.mubr.f32.mxu0 %v590
    %2896 = vmatmul.mubr.f32.gmra.mrb[0].mxu0 %v588
    %v2897 = vpop.f32.mrb[0].mxu0
    %v2898 = vadd.f32 %v2827, %v2897
    %v2899 = vpop.f32.mrb[0].mxu0
    %v2900 = vadd.f32 %v2829, %v2899
    %2901 = vdwg.mxu0
    %2902 = vmatprep.subr.mxu0 %v1507
    %2903 = vmatpush1.msra.mxu0 %v1506
    %2904 = vmatprep.subr.mxu0 %v1515
    %2905 = vmatpush1.msra.mxu0 %v1514
    %2906 = vmatprep.subr.mxu0 %v1523
    %2907 = vmatpush1.msra.mxu0 %v1522
    %2908 = vmatprep.subr.mxu0 %v1531
    %2909 = vmatpush1.msra.mxu0 %v1530
    %2910 = vmatprep.subr.mxu0 %v1539
    %2911 = vmatpush1.msra.mxu0 %v1538
    %2912 = vmatprep.subr.mxu0 %v1547
    %2913 = vmatpush1.msra.mxu0 %v1546
    %2914 = vmatprep.subr.mxu0 %v1555
    %2915 = vmatpush1.msra.mxu0 %v1554
    %2916 = vmatprep.subr.mxu0 %v1563
    %2917 = vmatpush1.msra.mxu0 %v1562
    %2918 = vmatprep.subr.mxu0 %v1571
    %2919 = vmatpush1.msra.mxu0 %v1570
    %2920 = vmatprep.subr.mxu0 %v1579
    %2921 = vmatpush1.msra.mxu0 %v1578
    %2922 = vmatprep.subr.mxu0 %v1587
    %2923 = vmatpush1.msra.mxu0 %v1586
    %2924 = vmatprep.subr.mxu0 %v1595
    %2925 = vmatpush1.msra.mxu0 %v1594
    %2926 = vmatprep.subr.mxu0 %v1603
    %2927 = vmatpush1.msra.mxu0 %v1602
    %2928 = vmatprep.subr.mxu0 %v1611
    %2929 = vmatpush1.msra.mxu0 %v1610
    %2930 = vmatprep.subr.mxu0 %v1619
    %2931 = vmatpush1.msra.mxu0 %v1618
    %2932 = vmatprep.subr.mxu0 %v1627
    %2933 = vmatpush1.msra.mxu0 %v1626
    %2934 = vmatprep.subr.mxu0 %v1635
    %2935 = vmatpush1.msra.mxu0 %v1634
    %2936 = vmatprep.subr.mxu0 %v1643
    %2937 = vmatpush1.msra.mxu0 %v1642
    %2938 = vmatprep.subr.mxu0 %v1651
    %2939 = vmatpush1.msra.mxu0 %v1650
    %2940 = vmatprep.subr.mxu0 %v1659
    %2941 = vmatpush1.msra.mxu0 %v1658
    %2942 = vmatprep.subr.mxu0 %v1667
    %2943 = vmatpush1.msra.mxu0 %v1666
    %2944 = vmatprep.subr.mxu0 %v1675
    %2945 = vmatpush1.msra.mxu0 %v1674
    %2946 = vmatprep.subr.mxu0 %v1683
    %2947 = vmatpush1.msra.mxu0 %v1682
    %2948 = vmatprep.subr.mxu0 %v1691
    %2949 = vmatpush1.msra.mxu0 %v1690
    %2950 = vmatprep.subr.mxu0 %v1699
    %2951 = vmatpush1.msra.mxu0 %v1698
    %2952 = vmatprep.subr.mxu0 %v1707
    %2953 = vmatpush1.msra.mxu0 %v1706
    %2954 = vmatprep.subr.mxu0 %v1715
    %2955 = vmatpush1.msra.mxu0 %v1714
    %2956 = vmatprep.subr.mxu0 %v1723
    %2957 = vmatpush1.msra.mxu0 %v1722
    %2958 = vmatprep.subr.mxu0 %v1731
    %2959 = vmatpush1.msra.mxu0 %v1730
    %2960 = vmatprep.subr.mxu0 %v1739
    %2961 = vmatpush1.msra.mxu0 %v1738
    %2962 = vmatprep.subr.mxu0 %v1747
    %2963 = vmatpush1.msra.mxu0 %v1746
    %2964 = vmatprep.subr.mxu0 %v1755
    %2965 = vmatpush1.msra.mxu0 %v1754
    %2966 = vmatprep.mubr.f32.mxu0 %v661
    %2967 = vmatmul.mubr.f32.gmra.mrb[0].mxu0 %v659
    %v2968 = vpop.f32.mrb[0].mxu0
    %v2969 = vadd.f32 %v2898, %v2968
    %v2970 = vpop.f32.mrb[0].mxu0
    %v2971 = vadd.f32 %v2900, %v2970
    %2972 = vdwg.mxu0
    %2973 = vmatprep.subr.mxu0 %v1763
    %2974 = vmatpush1.msra.mxu0 %v1762
    %2975 = vmatprep.subr.mxu0 %v1771
    %2976 = vmatpush1.msra.mxu0 %v1770
    %2977 = vmatprep.subr.mxu0 %v1779
    %2978 = vmatpush1.msra.mxu0 %v1778
    %2979 = vmatprep.subr.mxu0 %v1787
    %2980 = vmatpush1.msra.mxu0 %v1786
    %2981 = vmatprep.subr.mxu0 %v1795
    %2982 = vmatpush1.msra.mxu0 %v1794
    %2983 = vmatprep.subr.mxu0 %v1803
    %2984 = vmatpush1.msra.mxu0 %v1802
    %2985 = vmatprep.subr.mxu0 %v1811
    %2986 = vmatpush1.msra.mxu0 %v1810
    %2987 = vmatprep.subr.mxu0 %v1819
    %2988 = vmatpush1.msra.mxu0 %v1818
    %2989 = vmatprep.subr.mxu0 %v1827
    %2990 = vmatpush1.msra.mxu0 %v1826
    %2991 = vmatprep.subr.mxu0 %v1835
    %2992 = vmatpush1.msra.mxu0 %v1834
    %2993 = vmatprep.subr.mxu0 %v1843
    %2994 = vmatpush1.msra.mxu0 %v1842
    %2995 = vmatprep.subr.mxu0 %v1851
    %2996 = vmatpush1.msra.mxu0 %v1850
    %2997 = vmatprep.subr.mxu0 %v1859
    %2998 = vmatpush1.msra.mxu0 %v1858
    %2999 = vmatprep.subr.mxu0 %v1867
    %3000 = vmatpush1.msra.mxu0 %v1866
    %3001 = vmatprep.subr.mxu0 %v1875
    %3002 = vmatpush1.msra.mxu0 %v1874
    %3003 = vmatprep.subr.mxu0 %v1883
    %3004 = vmatpush1.msra.mxu0 %v1882
    %3005 = vmatprep.subr.mxu0 %v1891
    %3006 = vmatpush1.msra.mxu0 %v1890
    %3007 = vmatprep.subr.mxu0 %v1899
    %3008 = vmatpush1.msra.mxu0 %v1898
    %3009 = vmatprep.subr.mxu0 %v1907
    %3010 = vmatpush1.msra.mxu0 %v1906
    %3011 = vmatprep.subr.mxu0 %v1915
    %3012 = vmatpush1.msra.mxu0 %v1914
    %3013 = vmatprep.subr.mxu0 %v1923
    %3014 = vmatpush1.msra.mxu0 %v1922
    %3015 = vmatprep.subr.mxu0 %v1931
    %3016 = vmatpush1.msra.mxu0 %v1930
    %3017 = vmatprep.subr.mxu0 %v1939
    %3018 = vmatpush1.msra.mxu0 %v1938
    %3019 = vmatprep.subr.mxu0 %v1971
    %3020 = vmatpush1.msra.mxu0 %v1968
    %3021 = vmatprep.subr.mxu0 0.0
    %3022 = vmatpush1.msra.mxu0 0.0
    %3023 = vmatprep.subr.mxu0 0.0
    %3024 = vmatpush1.msra.mxu0 0.0
    %3025 = vmatprep.subr.mxu0 0.0
    %3026 = vmatpush1.msra.mxu0 0.0
    %3027 = vmatprep.subr.mxu0 0.0
    %3028 = vmatpush1.msra.mxu0 0.0
    %3029 = vmatprep.subr.mxu0 0.0
    %3030 = vmatpush1.msra.mxu0 0.0
    %3031 = vmatprep.subr.mxu0 0.0
    %3032 = vmatpush1.msra.mxu0 0.0
    %3033 = vmatprep.subr.mxu0 0.0
    %3034 = vmatpush1.msra.mxu0 0.0
    %3035 = vmatprep.subr.mxu0 0.0
    %3036 = vmatpush1.msra.mxu0 0.0
    %3037 = vmatprep.mubr.f32.mxu0 %v1952
    %3038 = vmatmul.mubr.f32.gmra.mrb[0].mxu0 %v730
    %v3039 = vpop.f32.mrb[0].mxu0
    %v3040 = vadd.f32 %v2969, %v3039
    %v3041 = vpop.f32.mrb[0].mxu0
    %v3042 = vadd.f32 %v2971, %v3041
    %3043 = vdwg.mxu0
    %3044 = vmatprep.subr.mxu0 %v741
    %3045 = vmatpush1.msra.mxu0 %v740
    %3046 = vmatprep.subr.mxu0 %v749
    %3047 = vmatpush1.msra.mxu0 %v748
    %3048 = vmatprep.subr.mxu0 %v757
    %3049 = vmatpush1.msra.mxu0 %v756
    %3050 = vmatprep.subr.mxu0 %v765
    %3051 = vmatpush1.msra.mxu0 %v764
    %3052 = vmatprep.subr.mxu0 %v773
    %3053 = vmatpush1.msra.mxu0 %v772
    %3054 = vmatprep.subr.mxu0 %v781
    %3055 = vmatpush1.msra.mxu0 %v780
    %3056 = vmatprep.subr.mxu0 %v789
    %3057 = vmatpush1.msra.mxu0 %v788
    %3058 = vmatprep.subr.mxu0 %v797
    %3059 = vmatpush1.msra.mxu0 %v796
    %3060 = vmatprep.subr.mxu0 %v805
    %3061 = vmatpush1.msra.mxu0 %v804
    %3062 = vmatprep.subr.mxu0 %v813
    %3063 = vmatpush1.msra.mxu0 %v812
    %3064 = vmatprep.subr.mxu0 %v821
    %3065 = vmatpush1.msra.mxu0 %v820
    %3066 = vmatprep.subr.mxu0 %v829
    %3067 = vmatpush1.msra.mxu0 %v828
    %3068 = vmatprep.subr.mxu0 %v837
    %3069 = vmatpush1.msra.mxu0 %v836
    %3070 = vmatprep.subr.mxu0 %v845
    %3071 = vmatpush1.msra.mxu0 %v844
    %3072 = vmatprep.subr.mxu0 %v853
    %3073 = vmatpush1.msra.mxu0 %v852
    %3074 = vmatprep.subr.mxu0 %v861
    %3075 = vmatpush1.msra.mxu0 %v860
    %3076 = vmatprep.subr.mxu0 %v869
    %3077 = vmatpush1.msra.mxu0 %v868
    %3078 = vmatprep.subr.mxu0 %v877
    %3079 = vmatpush1.msra.mxu0 %v876
    %3080 = vmatprep.subr.mxu0 %v885
    %3081 = vmatpush1.msra.mxu0 %v884
    %3082 = vmatprep.subr.mxu0 %v893
    %3083 = vmatpush1.msra.mxu0 %v892
    %3084 = vmatprep.subr.mxu0 %v901
    %3085 = vmatpush1.msra.mxu0 %v900
    %3086 = vmatprep.subr.mxu0 %v909
    %3087 = vmatpush1.msra.mxu0 %v908
    %3088 = vmatprep.subr.mxu0 %v917
    %3089 = vmatpush1.msra.mxu0 %v916
    %3090 = vmatprep.subr.mxu0 %v925
    %3091 = vmatpush1.msra.mxu0 %v924
    %3092 = vmatprep.subr.mxu0 %v933
    %3093 = vmatpush1.msra.mxu0 %v932
    %3094 = vmatprep.subr.mxu0 %v941
    %3095 = vmatpush1.msra.mxu0 %v940
    %3096 = vmatprep.subr.mxu0 %v949
    %3097 = vmatpush1.msra.mxu0 %v948
    %3098 = vmatprep.subr.mxu0 %v957
    %3099 = vmatpush1.msra.mxu0 %v956
    %3100 = vmatprep.subr.mxu0 %v965
    %3101 = vmatpush1.msra.mxu0 %v964
    %3102 = vmatprep.subr.mxu0 %v973
    %3103 = vmatpush1.msra.mxu0 %v972
    %3104 = vmatprep.subr.mxu0 %v981
    %3105 = vmatpush1.msra.mxu0 %v980
    %3106 = vmatprep.subr.mxu0 %v989
    %3107 = vmatpush1.msra.mxu0 %v988
    %3108 = vmatprep.mubr.f32.mxu0 %v448
    %3109 = vmatmul.mubr.f32.gmra.mrb[0].mxu0 %v446
    %v3110 = vpop.f32.mrb[0].mxu0
    %v3111 = vadd.f32 0.0, %v3110
    %v3112 = vpop.f32.mrb[0].mxu0
    %v3113 = vadd.f32 0.0, %v3112
    %3114 = vdwg.mxu0
    %3115 = vmatprep.subr.mxu0 %v997
    %3116 = vmatpush1.msra.mxu0 %v996
    %3117 = vmatprep.subr.mxu0 %v1005
    %3118 = vmatpush1.msra.mxu0 %v1004
    %3119 = vmatprep.subr.mxu0 %v1013
    %3120 = vmatpush1.msra.mxu0 %v1012
    %3121 = vmatprep.subr.mxu0 %v1021
    %3122 = vmatpush1.msra.mxu0 %v1020
    %3123 = vmatprep.subr.mxu0 %v1029
    %3124 = vmatpush1.msra.mxu0 %v1028
    %3125 = vmatprep.subr.mxu0 %v1037
    %3126 = vmatpush1.msra.mxu0 %v1036
    %3127 = vmatprep.subr.mxu0 %v1045
    %3128 = vmatpush1.msra.mxu0 %v1044
    %3129 = vmatprep.subr.mxu0 %v1053
    %3130 = vmatpush1.msra.mxu0 %v1052
    %3131 = vmatprep.subr.mxu0 %v1061
    %3132 = vmatpush1.msra.mxu0 %v1060
    %3133 = vmatprep.subr.mxu0 %v1069
    %3134 = vmatpush1.msra.mxu0 %v1068
    %3135 = vmatprep.subr.mxu0 %v1077
    %3136 = vmatpush1.msra.mxu0 %v1076
    %3137 = vmatprep.subr.mxu0 %v1085
    %3138 = vmatpush1.msra.mxu0 %v1084
    %3139 = vmatprep.subr.mxu0 %v1093
    %3140 = vmatpush1.msra.mxu0 %v1092
    %3141 = vmatprep.subr.mxu0 %v1101
    %3142 = vmatpush1.msra.mxu0 %v1100
    %3143 = vmatprep.subr.mxu0 %v1109
    %3144 = vmatpush1.msra.mxu0 %v1108
    %3145 = vmatprep.subr.mxu0 %v1117
    %3146 = vmatpush1.msra.mxu0 %v1116
    %3147 = vmatprep.subr.mxu0 %v1125
    %3148 = vmatpush1.msra.mxu0 %v1124
    %3149 = vmatprep.subr.mxu0 %v1133
    %3150 = vmatpush1.msra.mxu0 %v1132
    %3151 = vmatprep.subr.mxu0 %v1141
    %3152 = vmatpush1.msra.mxu0 %v1140
    %3153 = vmatprep.subr.mxu0 %v1149
    %3154 = vmatpush1.msra.mxu0 %v1148
    %3155 = vmatprep.subr.mxu0 %v1157
    %3156 = vmatpush1.msra.mxu0 %v1156
    %3157 = vmatprep.subr.mxu0 %v1165
    %3158 = vmatpush1.msra.mxu0 %v1164
    %3159 = vmatprep.subr.mxu0 %v1173
    %3160 = vmatpush1.msra.mxu0 %v1172
    %3161 = vmatprep.subr.mxu0 %v1181
    %3162 = vmatpush1.msra.mxu0 %v1180
    %3163 = vmatprep.subr.mxu0 %v1189
    %3164 = vmatpush1.msra.mxu0 %v1188
    %3165 = vmatprep.subr.mxu0 %v1197
    %3166 = vmatpush1.msra.mxu0 %v1196
    %3167 = vmatprep.subr.mxu0 %v1205
    %3168 = vmatpush1.msra.mxu0 %v1204
    %3169 = vmatprep.subr.mxu0 %v1213
    %3170 = vmatpush1.msra.mxu0 %v1212
    %3171 = vmatprep.subr.mxu0 %v1221
    %3172 = vmatpush1.msra.mxu0 %v1220
    %3173 = vmatprep.subr.mxu0 %v1229
    %3174 = vmatpush1.msra.mxu0 %v1228
    %3175 = vmatprep.subr.mxu0 %v1237
    %3176 = vmatpush1.msra.mxu0 %v1236
    %3177 = vmatprep.subr.mxu0 %v1245
    %3178 = vmatpush1.msra.mxu0 %v1244
    %3179 = vmatprep.mubr.f32.mxu0 %v519
    %3180 = vmatmul.mubr.f32.gmra.mrb[0].mxu0 %v517
    %v3181 = vpop.f32.mrb[0].mxu0
    %v3182 = vadd.f32 %v3111, %v3181
    %v3183 = vpop.f32.mrb[0].mxu0
    %v3184 = vadd.f32 %v3113, %v3183
    %3185 = vdwg.mxu0
    %3186 = vmatprep.subr.mxu0 %v1253
    %3187 = vmatpush1.msra.mxu0 %v1252
    %3188 = vmatprep.subr.mxu0 %v1261
    %3189 = vmatpush1.msra.mxu0 %v1260
    %3190 = vmatprep.subr.mxu0 %v1269
    %3191 = vmatpush1.msra.mxu0 %v1268
    %3192 = vmatprep.subr.mxu0 %v1277
    %3193 = vmatpush1.msra.mxu0 %v1276
    %3194 = vmatprep.subr.mxu0 %v1285
    %3195 = vmatpush1.msra.mxu0 %v1284
    %3196 = vmatprep.subr.mxu0 %v1293
    %3197 = vmatpush1.msra.mxu0 %v1292
    %3198 = vmatprep.subr.mxu0 %v1301
    %3199 = vmatpush1.msra.mxu0 %v1300
    %3200 = vmatprep.subr.mxu0 %v1309
    %3201 = vmatpush1.msra.mxu0 %v1308
    %3202 = vmatprep.subr.mxu0 %v1317
    %3203 = vmatpush1.msra.mxu0 %v1316
    %3204 = vmatprep.subr.mxu0 %v1325
    %3205 = vmatpush1.msra.mxu0 %v1324
    %3206 = vmatprep.subr.mxu0 %v1333
    %3207 = vmatpush1.msra.mxu0 %v1332
    %3208 = vmatprep.subr.mxu0 %v1341
    %3209 = vmatpush1.msra.mxu0 %v1340
    %3210 = vmatprep.subr.mxu0 %v1349
    %3211 = vmatpush1.msra.mxu0 %v1348
    %3212 = vmatprep.subr.mxu0 %v1357
    %3213 = vmatpush1.msra.mxu0 %v1356
    %3214 = vmatprep.subr.mxu0 %v1365
    %3215 = vmatpush1.msra.mxu0 %v1364
    %3216 = vmatprep.subr.mxu0 %v1373
    %3217 = vmatpush1.msra.mxu0 %v1372
    %3218 = vmatprep.subr.mxu0 %v1381
    %3219 = vmatpush1.msra.mxu0 %v1380
    %3220 = vmatprep.subr.mxu0 %v1389
    %3221 = vmatpush1.msra.mxu0 %v1388
    %3222 = vmatprep.subr.mxu0 %v1397
    %3223 = vmatpush1.msra.mxu0 %v1396
    %3224 = vmatprep.subr.mxu0 %v1405
    %3225 = vmatpush1.msra.mxu0 %v1404
    %3226 = vmatprep.subr.mxu0 %v1413
    %3227 = vmatpush1.msra.mxu0 %v1412
    %3228 = vmatprep.subr.mxu0 %v1421
    %3229 = vmatpush1.msra.mxu0 %v1420
    %3230 = vmatprep.subr.mxu0 %v1429
    %3231 = vmatpush1.msra.mxu0 %v1428
    %3232 = vmatprep.subr.mxu0 %v1437
    %3233 = vmatpush1.msra.mxu0 %v1436
    %3234 = vmatprep.subr.mxu0 %v1445
    %3235 = vmatpush1.msra.mxu0 %v1444
    %3236 = vmatprep.subr.mxu0 %v1453
    %3237 = vmatpush1.msra.mxu0 %v1452
    %3238 = vmatprep.subr.mxu0 %v1461
    %3239 = vmatpush1.msra.mxu0 %v1460
    %3240 = vmatprep.subr.mxu0 %v1469
    %3241 = vmatpush1.msra.mxu0 %v1468
    %3242 = vmatprep.subr.mxu0 %v1477
    %3243 = vmatpush1.msra.mxu0 %v1476
    %3244 = vmatprep.subr.mxu0 %v1485
    %3245 = vmatpush1.msra.mxu0 %v1484
    %3246 = vmatprep.subr.mxu0 %v1493
    %3247 = vmatpush1.msra.mxu0 %v1492
    %3248 = vmatprep.subr.mxu0 %v1501
    %3249 = vmatpush1.msra.mxu0 %v1500
    %3250 = vmatprep.mubr.f32.mxu0 %v590
    %3251 = vmatmul.mubr.f32.gmra.mrb[0].mxu0 %v588
    %v3252 = vpop.f32.mrb[0].mxu0
    %v3253 = vadd.f32 %v3182, %v3252
    %v3254 = vpop.f32.mrb[0].mxu0
    %v3255 = vadd.f32 %v3184, %v3254
    %3256 = vdwg.mxu0
    %3257 = vmatprep.subr.mxu0 %v1509
    %3258 = vmatpush1.msra.mxu0 %v1508
    %3259 = vmatprep.subr.mxu0 %v1517
    %3260 = vmatpush1.msra.mxu0 %v1516
    %3261 = vmatprep.subr.mxu0 %v1525
    %3262 = vmatpush1.msra.mxu0 %v1524
    %3263 = vmatprep.subr.mxu0 %v1533
    %3264 = vmatpush1.msra.mxu0 %v1532
    %3265 = vmatprep.subr.mxu0 %v1541
    %3266 = vmatpush1.msra.mxu0 %v1540
    %3267 = vmatprep.subr.mxu0 %v1549
    %3268 = vmatpush1.msra.mxu0 %v1548
    %3269 = vmatprep.subr.mxu0 %v1557
    %3270 = vmatpush1.msra.mxu0 %v1556
    %3271 = vmatprep.subr.mxu0 %v1565
    %3272 = vmatpush1.msra.mxu0 %v1564
    %3273 = vmatprep.subr.mxu0 %v1573
    %3274 = vmatpush1.msra.mxu0 %v1572
    %3275 = vmatprep.subr.mxu0 %v1581
    %3276 = vmatpush1.msra.mxu0 %v1580
    %3277 = vmatprep.subr.mxu0 %v1589
    %3278 = vmatpush1.msra.mxu0 %v1588
    %3279 = vmatprep.subr.mxu0 %v1597
    %3280 = vmatpush1.msra.mxu0 %v1596
    %3281 = vmatprep.subr.mxu0 %v1605
    %3282 = vmatpush1.msra.mxu0 %v1604
    %3283 = vmatprep.subr.mxu0 %v1613
    %3284 = vmatpush1.msra.mxu0 %v1612
    %3285 = vmatprep.subr.mxu0 %v1621
    %3286 = vmatpush1.msra.mxu0 %v1620
    %3287 = vmatprep.subr.mxu0 %v1629
    %3288 = vmatpush1.msra.mxu0 %v1628
    %3289 = vmatprep.subr.mxu0 %v1637
    %3290 = vmatpush1.msra.mxu0 %v1636
    %3291 = vmatprep.subr.mxu0 %v1645
    %3292 = vmatpush1.msra.mxu0 %v1644
    %3293 = vmatprep.subr.mxu0 %v1653
    %3294 = vmatpush1.msra.mxu0 %v1652
    %3295 = vmatprep.subr.mxu0 %v1661
    %3296 = vmatpush1.msra.mxu0 %v1660
    %3297 = vmatprep.subr.mxu0 %v1669
    %3298 = vmatpush1.msra.mxu0 %v1668
    %3299 = vmatprep.subr.mxu0 %v1677
    %3300 = vmatpush1.msra.mxu0 %v1676
    %3301 = vmatprep.subr.mxu0 %v1685
    %3302 = vmatpush1.msra.mxu0 %v1684
    %3303 = vmatprep.subr.mxu0 %v1693
    %3304 = vmatpush1.msra.mxu0 %v1692
    %3305 = vmatprep.subr.mxu0 %v1701
    %3306 = vmatpush1.msra.mxu0 %v1700
    %3307 = vmatprep.subr.mxu0 %v1709
    %3308 = vmatpush1.msra.mxu0 %v1708
    %3309 = vmatprep.subr.mxu0 %v1717
    %3310 = vmatpush1.msra.mxu0 %v1716
    %3311 = vmatprep.subr.mxu0 %v1725
    %3312 = vmatpush1.msra.mxu0 %v1724
    %3313 = vmatprep.subr.mxu0 %v1733
    %3314 = vmatpush1.msra.mxu0 %v1732
    %3315 = vmatprep.subr.mxu0 %v1741
    %3316 = vmatpush1.msra.mxu0 %v1740
    %3317 = vmatprep.subr.mxu0 %v1749
    %3318 = vmatpush1.msra.mxu0 %v1748
    %3319 = vmatprep.subr.mxu0 %v1757
    %3320 = vmatpush1.msra.mxu0 %v1756
    %3321 = vmatprep.mubr.f32.mxu0 %v661
    %3322 = vmatmul.mubr.f32.gmra.mrb[0].mxu0 %v659
    %v3323 = vpop.f32.mrb[0].mxu0
    %v3324 = vadd.f32 %v3253, %v3323
    %v3325 = vpop.f32.mrb[0].mxu0
    %v3326 = vadd.f32 %v3255, %v3325
    %3327 = vdwg.mxu0
    %3328 = vmatprep.subr.mxu0 %v1765
    %3329 = vmatpush1.msra.mxu0 %v1764
    %3330 = vmatprep.subr.mxu0 %v1773
    %3331 = vmatpush1.msra.mxu0 %v1772
    %3332 = vmatprep.subr.mxu0 %v1781
    %3333 = vmatpush1.msra.mxu0 %v1780
    %3334 = vmatprep.subr.mxu0 %v1789
    %3335 = vmatpush1.msra.mxu0 %v1788
    %3336 = vmatprep.subr.mxu0 %v1797
    %3337 = vmatpush1.msra.mxu0 %v1796
    %3338 = vmatprep.subr.mxu0 %v1805
    %3339 = vmatpush1.msra.mxu0 %v1804
    %3340 = vmatprep.subr.mxu0 %v1813
    %3341 = vmatpush1.msra.mxu0 %v1812
    %3342 = vmatprep.subr.mxu0 %v1821
    %3343 = vmatpush1.msra.mxu0 %v1820
    %3344 = vmatprep.subr.mxu0 %v1829
    %3345 = vmatpush1.msra.mxu0 %v1828
    %3346 = vmatprep.subr.mxu0 %v1837
    %3347 = vmatpush1.msra.mxu0 %v1836
    %3348 = vmatprep.subr.mxu0 %v1845
    %3349 = vmatpush1.msra.mxu0 %v1844
    %3350 = vmatprep.subr.mxu0 %v1853
    %3351 = vmatpush1.msra.mxu0 %v1852
    %3352 = vmatprep.subr.mxu0 %v1861
    %3353 = vmatpush1.msra.mxu0 %v1860
    %3354 = vmatprep.subr.mxu0 %v1869
    %3355 = vmatpush1.msra.mxu0 %v1868
    %3356 = vmatprep.subr.mxu0 %v1877
    %3357 = vmatpush1.msra.mxu0 %v1876
    %3358 = vmatprep.subr.mxu0 %v1885
    %3359 = vmatpush1.msra.mxu0 %v1884
    %3360 = vmatprep.subr.mxu0 %v1893
    %3361 = vmatpush1.msra.mxu0 %v1892
    %3362 = vmatprep.subr.mxu0 %v1901
    %3363 = vmatpush1.msra.mxu0 %v1900
    %3364 = vmatprep.subr.mxu0 %v1909
    %3365 = vmatpush1.msra.mxu0 %v1908
    %3366 = vmatprep.subr.mxu0 %v1917
    %3367 = vmatpush1.msra.mxu0 %v1916
    %3368 = vmatprep.subr.mxu0 %v1925
    %3369 = vmatpush1.msra.mxu0 %v1924
    %3370 = vmatprep.subr.mxu0 %v1933
    %3371 = vmatpush1.msra.mxu0 %v1932
    %3372 = vmatprep.subr.mxu0 %v1941
    %3373 = vmatpush1.msra.mxu0 %v1940
    %3374 = vmatprep.subr.mxu0 %v1977
    %3375 = vmatpush1.msra.mxu0 %v1974
    %3376 = vmatprep.subr.mxu0 0.0
    %3377 = vmatpush1.msra.mxu0 0.0
    %3378 = vmatprep.subr.mxu0 0.0
    %3379 = vmatpush1.msra.mxu0 0.0
    %3380 = vmatprep.subr.mxu0 0.0
    %3381 = vmatpush1.msra.mxu0 0.0
    %3382 = vmatprep.subr.mxu0 0.0
    %3383 = vmatpush1.msra.mxu0 0.0
    %3384 = vmatprep.subr.mxu0 0.0
    %3385 = vmatpush1.msra.mxu0 0.0
    %3386 = vmatprep.subr.mxu0 0.0
    %3387 = vmatpush1.msra.mxu0 0.0
    %3388 = vmatprep.subr.mxu0 0.0
    %3389 = vmatpush1.msra.mxu0 0.0
    %3390 = vmatprep.subr.mxu0 0.0
    %3391 = vmatpush1.msra.mxu0 0.0
    %3392 = vmatprep.mubr.f32.mxu0 %v1952
    %3393 = vmatmul.mubr.f32.gmra.mrb[0].mxu0 %v730
    %v3394 = vpop.f32.mrb[0].mxu0
    %v3395 = vadd.f32 %v3324, %v3394
    %v3396 = vpop.f32.mrb[0].mxu0
    %v3397 = vadd.f32 %v3326, %v3396
    %3398 = vdwg.mxu0
    %3402 = vrot.lane.b32.xlu0 %v2332, 6
    %v3403 = vpop.permute.xlu0 %3402
    %3404 = vrot.lane.b32.xlu0 %v2685, 6
    %v3405 = vpop.permute.xlu0 %3404
    %3406 = vrot.lane.b32.xlu0 %v2687, 6
    %v3407 = vpop.permute.xlu0 %3406
    %vm3408 = vcmask 48128
    %v3409 = vsel %vm3408, %v3403, %v3405
    %v3410 = vsel %vm3408, %v3405, %v3407
    %v3413 = vmax.f32 %v2330, %v3409
    %v3414 = vmax.f32 %v2332, %v3410
    %3418 = vrot.lane.b32.xlu0 %v3042, 6
    %v3419 = vpop.permute.xlu0 %3418
    %3420 = vrot.lane.b32.xlu0 %v3395, 6
    %v3421 = vpop.permute.xlu0 %3420
    %3422 = vrot.lane.b32.xlu0 %v3397, 6
    %v3423 = vpop.permute.xlu0 %3422
    %v3424 = vsel %vm3408, %v3419, %v3421
    %v3425 = vsel %vm3408, %v3421, %v3423
    %v3429 = vmax.f32 %v2687, %v3419
    %v3430 = vmax.f32 %v3040, %v3424
    %v3431 = vmax.f32 %v3042, %v3425
    %3435 = vrot.lane.b32.xlu0 %v3429, 12
    %v3436 = vpop.permute.xlu0 %3435
    %3437 = vrot.lane.b32.xlu0 %v3430, 12
    %v3438 = vpop.permute.xlu0 %3437
    %3439 = vrot.lane.b32.xlu0 %v3431, 12
    %v3440 = vpop.permute.xlu0 %3439
    %vm3441 = vcmask 97280
    %v3442 = vsel %vm3441, %v3436, %v3438
    %v3443 = vsel %vm3441, %v3438, %v3440
    %v3446 = vmax.f32 %v3413, %v3442
    %v3447 = vmax.f32 %v3414, %v3443
    %v3448 = vmax.f32 %v3446, 0.0
    %v3449 = vmax.f32 %v3447, 0.0
    %v3450 = vld [vmem:[%s4] sm:$0xff]
    %v3451 = vld [vmem:[%s4 + $0x8] sm:$0xff]
    %v3452 = vld [vmem:[%s4 + $0x10] sm:$0xff]
    %v3453 = vld [vmem:[%s4 + $0x18] sm:$0xff]
    %v3454 = vld [vmem:[%s4 + $0x20] sm:$0xff]
    %v3455 = vld [vmem:[%s4 + $0x28] sm:$0xff]
    %v3456 = vld [vmem:[%s4 + $0x30] sm:$0xff]
    %v3457 = vld [vmem:[%s4 + $0x38] sm:$0xff]
    %v3458 = vld [vmem:[%s4 + $0x40] sm:$0xff]
    %v3459 = vld [vmem:[%s4 + $0x48] sm:$0xff]
    %v3460 = vld [vmem:[%s4 + $0x50] sm:$0xff]
    %v3461 = vld [vmem:[%s4 + $0x58] sm:$0xff]
    %v3462 = vld [vmem:[%s4 + $0x60] sm:$0xff]
    %v3463 = vld [vmem:[%s4 + $0x68] sm:$0xff]
    %v3464 = vld [vmem:[%s4 + $0x70] sm:$0xff]
    %v3465 = vld [vmem:[%s4 + $0x78] sm:$0xff]
    %v3466 = vld [vmem:[%s4 + $0x80] sm:$0xff]
    %v3467 = vld [vmem:[%s4 + $0x88] sm:$0xff]
    %v3468 = vld [vmem:[%s4 + $0x90] sm:$0xff]
    %v3469 = vld [vmem:[%s4 + $0x98] sm:$0xff]
    %v3470 = vld [vmem:[%s4 + $0xa0] sm:$0xff]
    %v3471 = vld [vmem:[%s4 + $0xa8] sm:$0xff]
    %v3472 = vld [vmem:[%s4 + $0xb0] sm:$0xff]
    %v3473 = vld [vmem:[%s4 + $0xb8] sm:$0xff]
    %v3474 = vld [vmem:[%s4 + $0xc0] sm:$0xff]
    %v3475 = vld [vmem:[%s4 + $0xc8] sm:$0xff]
    %v3476 = vld [vmem:[%s4 + $0xd0] sm:$0xff]
    %v3477 = vld [vmem:[%s4 + $0xd8] sm:$0xff]
    %v3478 = vld [vmem:[%s4 + $0xe0] sm:$0xff]
    %v3479 = vld [vmem:[%s4 + $0xe8] sm:$0xff]
    %v3480 = vld [vmem:[%s4 + $0xf0] sm:$0xff]
    %v3481 = vld [vmem:[%s4 + $0xf8] sm:$0xff]
    %v3482 = vld [vmem:[%s4 + $0x100] sm:$0xff]
    %v3483 = vld [vmem:[%s4 + $0x108] sm:$0xff]
    %v3484 = vld [vmem:[%s4 + $0x110] sm:$0xff]
    %v3485 = vld [vmem:[%s4 + $0x118] sm:$0xff]
    %v3486 = vld [vmem:[%s4 + $0x120] sm:$0xff]
    %v3487 = vld [vmem:[%s4 + $0x128] sm:$0xff]
    %v3488 = vld [vmem:[%s4 + $0x130] sm:$0xff]
    %v3489 = vld [vmem:[%s4 + $0x138] sm:$0xff]
    %v3490 = vld [vmem:[%s4 + $0x140] sm:$0xff]
    %v3491 = vld [vmem:[%s4 + $0x148] sm:$0xff]
    %v3492 = vld [vmem:[%s4 + $0x150] sm:$0xff]
    %v3493 = vld [vmem:[%s4 + $0x158] sm:$0xff]
    %v3494 = vld [vmem:[%s4 + $0x160] sm:$0xff]
    %v3495 = vld [vmem:[%s4 + $0x168] sm:$0xff]
    %v3496 = vld [vmem:[%s4 + $0x170] sm:$0xff]
    %v3497 = vld [vmem:[%s4 + $0x178] sm:$0xff]
    %v3498 = vld [vmem:[%s4 + $0x180] sm:$0xff]
    %v3499 = vld [vmem:[%s4 + $0x188] sm:$0xff]
    %v3500 = vld [vmem:[%s4 + $0x190] sm:$0xff]
    %v3501 = vld [vmem:[%s4 + $0x198] sm:$0xff]
    %v3502 = vld [vmem:[%s4 + $0x1a0] sm:$0xff]
    %v3503 = vld [vmem:[%s4 + $0x1a8] sm:$0xff]
    %v3504 = vld [vmem:[%s4 + $0x1b0] sm:$0xff]
    %v3505 = vld [vmem:[%s4 + $0x1b8] sm:$0xff]
    %v3506 = vld [vmem:[%s4 + $0x1c0] sm:$0xff]
    %v3507 = vld [vmem:[%s4 + $0x1c8] sm:$0xff]
    %v3508 = vld [vmem:[%s4 + $0x1d0] sm:$0xff]
    %v3509 = vld [vmem:[%s4 + $0x1d8] sm:$0xff]
    %v3510 = vld [vmem:[%s4 + $0x1e0] sm:$0xff]
    %v3511 = vld [vmem:[%s4 + $0x1e8] sm:$0xff]
    %v3512 = vld [vmem:[%s4 + $0x1f0] sm:$0xff]
    %v3513 = vld [vmem:[%s4 + $0x1f8] sm:$0xff]
    %v3514 = vld [vmem:[%s4 + $0x200] sm:$0xff]
    %v3515 = vld [vmem:[%s4 + $0x208] sm:$0xff]
    %v3516 = vld [vmem:[%s4 + $0x210] sm:$0xff]
    %v3517 = vld [vmem:[%s4 + $0x218] sm:$0xff]
    %v3518 = vld [vmem:[%s4 + $0x220] sm:$0xff]
    %v3519 = vld [vmem:[%s4 + $0x228] sm:$0xff]
    %v3520 = vld [vmem:[%s4 + $0x230] sm:$0xff]
    %v3521 = vld [vmem:[%s4 + $0x238] sm:$0xff]
    %v3522 = vld [vmem:[%s4 + $0x240] sm:$0xff]
    %v3523 = vld [vmem:[%s4 + $0x248] sm:$0xff]
    %v3524 = vld [vmem:[%s4 + $0x250] sm:$0xff]
    %v3525 = vld [vmem:[%s4 + $0x258] sm:$0xff]
    %v3526 = vld [vmem:[%s4 + $0x260] sm:$0xff]
    %v3527 = vld [vmem:[%s4 + $0x268] sm:$0xff]
    %v3528 = vld [vmem:[%s4 + $0x270] sm:$0xff]
    %v3529 = vld [vmem:[%s4 + $0x278] sm:$0xff]
    %v3530 = vld [vmem:[%s4 + $0x280] sm:$0xff]
    %v3531 = vld [vmem:[%s4 + $0x288] sm:$0xff]
    %v3532 = vld [vmem:[%s4 + $0x290] sm:$0xff]
    %v3533 = vld [vmem:[%s4 + $0x298] sm:$0xff]
    %v3534 = vld [vmem:[%s4 + $0x2a0] sm:$0xff]
    %v3535 = vld [vmem:[%s4 + $0x2a8] sm:$0xff]
    %v3536 = vld [vmem:[%s4 + $0x2b0] sm:$0xff]
    %v3537 = vld [vmem:[%s4 + $0x2b8] sm:$0xff]
    %v3538 = vld [vmem:[%s4 + $0x2c0] sm:$0xff]
    %v3539 = vld [vmem:[%s4 + $0x2c8] sm:$0xff]
    %v3540 = vld [vmem:[%s4 + $0x2d0] sm:$0xff]
    %v3541 = vld [vmem:[%s4 + $0x2d8] sm:$0xff]
    %v3542 = vld [vmem:[%s4 + $0x2e0] sm:$0xff]
    %v3543 = vld [vmem:[%s4 + $0x2e8] sm:$0x3]
    %v3544 = vld [vmem:[%s4 + $0x2f0] sm:$0x3]
    %v3545 = vld [vmem:[%s4 + $0x2f8] sm:$0x3]
    %v3546 = vld [vmem:[#allocation7] sm:$0x7]
    %v3548 = vlaneseq
    %v3549 = vshrl.u32 %v3548, 7
    %v3550 = vsub.s32 0, %v3549
    %v3551 = vrot.slane %v3546, %v3550
    %v3552 = vlaneseq
    %v3553 = vshrl.u32 %v3552, 7
    %v3554 = vsub.s32 1, %v3553
    %v3555 = vrot.slane %v3546, %v3554
    %v3556 = vlaneseq
    %v3557 = vshrl.u32 %v3556, 7
    %v3558 = vsub.s32 2, %v3557
    %v3559 = vrot.slane %v3546, %v3558
    %vm3563 = vcmask 998400
    %v3565 = vsel %vm3563, %v3449, 0
    %v3568 = vsel %vm1954, %v3543, 0
    %v3571 = vsel %vm1954, %v3544, 0
    %v3574 = vsel %vm1954, %v3545, 0
    %3576 = vmatprep.subr.mxu0 %v3451
    %3577 = vmatpush1.msra.mxu0 %v3450
    %3578 = vmatprep.subr.mxu0 %v3454
    %3579 = vmatpush1.msra.mxu0 %v3453
    %3580 = vmatprep.subr.mxu0 %v3457
    %3581 = vmatpush1.msra.mxu0 %v3456
    %3582 = vmatprep.subr.mxu0 %v3460
    %3583 = vmatpush1.msra.mxu0 %v3459
    %3584 = vmatprep.subr.mxu0 %v3463
    %3585 = vmatpush1.msra.mxu0 %v3462
    %3586 = vmatprep.subr.mxu0 %v3466
    %3587 = vmatpush1.msra.mxu0 %v3465
    %3588 = vmatprep.subr.mxu0 %v3469
    %3589 = vmatpush1.msra.mxu0 %v3468
    %3590 = vmatprep.subr.mxu0 %v3472
    %3591 = vmatpush1.msra.mxu0 %v3471
    %3592 = vmatprep.subr.mxu0 %v3475
    %3593 = vmatpush1.msra.mxu0 %v3474
    %3594 = vmatprep.subr.mxu0 %v3478
    %3595 = vmatpush1.msra.mxu0 %v3477
    %3596 = vmatprep.subr.mxu0 %v3481
    %3597 = vmatpush1.msra.mxu0 %v3480
    %3598 = vmatprep.subr.mxu0 %v3484
    %3599 = vmatpush1.msra.mxu0 %v3483
    %3600 = vmatprep.subr.mxu0 %v3487
    %3601 = vmatpush1.msra.mxu0 %v3486
    %3602 = vmatprep.subr.mxu0 %v3490
    %3603 = vmatpush1.msra.mxu0 %v3489
    %3604 = vmatprep.subr.mxu0 %v3493
    %3605 = vmatpush1.msra.mxu0 %v3492
    %3606 = vmatprep.subr.mxu0 %v3496
    %3607 = vmatpush1.msra.mxu0 %v3495
    %3608 = vmatprep.subr.mxu0 %v3499
    %3609 = vmatpush1.msra.mxu0 %v3498
    %3610 = vmatprep.subr.mxu0 %v3502
    %3611 = vmatpush1.msra.mxu0 %v3501
    %3612 = vmatprep.subr.mxu0 %v3505
    %3613 = vmatpush1.msra.mxu0 %v3504
    %3614 = vmatprep.subr.mxu0 %v3508
    %3615 = vmatpush1.msra.mxu0 %v3507
    %3616 = vmatprep.subr.mxu0 %v3511
    %3617 = vmatpush1.msra.mxu0 %v3510
    %3618 = vmatprep.subr.mxu0 %v3514
    %3619 = vmatpush1.msra.mxu0 %v3513
    %3620 = vmatprep.subr.mxu0 %v3517
    %3621 = vmatpush1.msra.mxu0 %v3516
    %3622 = vmatprep.subr.mxu0 %v3520
    %3623 = vmatpush1.msra.mxu0 %v3519
    %3624 = vmatprep.subr.mxu0 %v3523
    %3625 = vmatpush1.msra.mxu0 %v3522
    %3626 = vmatprep.subr.mxu0 %v3526
    %3627 = vmatpush1.msra.mxu0 %v3525
    %3628 = vmatprep.subr.mxu0 %v3529
    %3629 = vmatpush1.msra.mxu0 %v3528
    %3630 = vmatprep.subr.mxu0 %v3532
    %3631 = vmatpush1.msra.mxu0 %v3531
    %3632 = vmatprep.subr.mxu0 %v3535
    %3633 = vmatpush1.msra.mxu0 %v3534
    %3634 = vmatprep.subr.mxu0 %v3538
    %3635 = vmatpush1.msra.mxu0 %v3537
    %3636 = vmatprep.subr.mxu0 %v3541
    %3637 = vmatpush1.msra.mxu0 %v3540
    %3638 = vmatprep.subr.mxu0 %v3571
    %3639 = vmatpush1.msra.mxu0 %v3568
    %3640 = vmatprep.mubr.f32.mxu0 %v3565
    %3641 = vmatmul.mubr.f32.gmra.mrb[0].mxu0 %v3448
    %v3642 = vpop.f32.mrb[0].mxu0
    %v3643 = vadd.f32 %v3551, %v3642
    %v3644 = vpop.f32.mrb[0].mxu0
    %v3645 = vadd.f32 %v3555, %v3644
    %3646 = vdwg.mxu0
    %3647 = vmatprep.subr.mxu0 0.0
    %3648 = vmatpush1.msra.mxu0 %v3452
    %3649 = vmatprep.subr.mxu0 0.0
    %3650 = vmatpush1.msra.mxu0 %v3455
    %3651 = vmatprep.subr.mxu0 0.0
    %3652 = vmatpush1.msra.mxu0 %v3458
    %3653 = vmatprep.subr.mxu0 0.0
    %3654 = vmatpush1.msra.mxu0 %v3461
    %3655 = vmatprep.subr.mxu0 0.0
    %3656 = vmatpush1.msra.mxu0 %v3464
    %3657 = vmatprep.subr.mxu0 0.0
    %3658 = vmatpush1.msra.mxu0 %v3467
    %3659 = vmatprep.subr.mxu0 0.0
    %3660 = vmatpush1.msra.mxu0 %v3470
    %3661 = vmatprep.subr.mxu0 0.0
    %3662 = vmatpush1.msra.mxu0 %v3473
    %3663 = vmatprep.subr.mxu0 0.0
    %3664 = vmatpush1.msra.mxu0 %v3476
    %3665 = vmatprep.subr.mxu0 0.0
    %3666 = vmatpush1.msra.mxu0 %v3479
    %3667 = vmatprep.subr.mxu0 0.0
    %3668 = vmatpush1.msra.mxu0 %v3482
    %3669 = vmatprep.subr.mxu0 0.0
    %3670 = vmatpush1.msra.mxu0 %v3485
    %3671 = vmatprep.subr.mxu0 0.0
    %3672 = vmatpush1.msra.mxu0 %v3488
    %3673 = vmatprep.subr.mxu0 0.0
    %3674 = vmatpush1.msra.mxu0 %v3491
    %3675 = vmatprep.subr.mxu0 0.0
    %3676 = vmatpush1.msra.mxu0 %v3494
    %3677 = vmatprep.subr.mxu0 0.0
    %3678 = vmatpush1.msra.mxu0 %v3497
    %3679 = vmatprep.subr.mxu0 0.0
    %3680 = vmatpush1.msra.mxu0 %v3500
    %3681 = vmatprep.subr.mxu0 0.0
    %3682 = vmatpush1.msra.mxu0 %v3503
    %3683 = vmatprep.subr.mxu0 0.0
    %3684 = vmatpush1.msra.mxu0 %v3506
    %3685 = vmatprep.subr.mxu0 0.0
    %3686 = vmatpush1.msra.mxu0 %v3509
    %3687 = vmatprep.subr.mxu0 0.0
    %3688 = vmatpush1.msra.mxu0 %v3512
    %3689 = vmatprep.subr.mxu0 0.0
    %3690 = vmatpush1.msra.mxu0 %v3515
    %3691 = vmatprep.subr.mxu0 0.0
    %3692 = vmatpush1.msra.mxu0 %v3518
    %3693 = vmatprep.subr.mxu0 0.0
    %3694 = vmatpush1.msra.mxu0 %v3521
    %3695 = vmatprep.subr.mxu0 0.0
    %3696 = vmatpush1.msra.mxu0 %v3524
    %3697 = vmatprep.subr.mxu0 0.0
    %3698 = vmatpush1.msra.mxu0 %v3527
    %3699 = vmatprep.subr.mxu0 0.0
    %3700 = vmatpush1.msra.mxu0 %v3530
    %3701 = vmatprep.subr.mxu0 0.0
    %3702 = vmatpush1.msra.mxu0 %v3533
    %3703 = vmatprep.subr.mxu0 0.0
    %3704 = vmatpush1.msra.mxu0 %v3536
    %3705 = vmatprep.subr.mxu0 0.0
    %3706 = vmatpush1.msra.mxu0 %v3539
    %3707 = vmatprep.subr.mxu0 0.0
    %3708 = vmatpush1.msra.mxu0 %v3542
    %3709 = vmatprep.subr.mxu0 0.0
    %3710 = vmatpush1.msra.mxu0 %v3574
    %3711 = vmatprep.mubr.f32.mxu0 %v3565
    %3712 = vmatmul.mubr.f32.gmra.mrb[0].mxu0 %v3448
    %v3713 = vpop.f32.mrb[0].mxu0
    %v3714 = vadd.f32 %v3559, %v3713
    %v3715 = vpop.f32.mrb[0].mxu0
    %3716 = vdwg.mxu0
    %v3717 = vld [vmem:[#allocation9] sm:$0xff]
    %v3718 = vld [vmem:[#allocation9 + $0x8] sm:$0xff]
    %v3719 = vld [vmem:[#allocation9 + $0x10] sm:$0xff]
    %v3720 = vld [vmem:[#allocation9 + $0x18] sm:$0xff]
    %v3721 = vld [vmem:[#allocation9 + $0x20] sm:$0xff]
    %v3722 = vld [vmem:[#allocation9 + $0x28] sm:$0xff]
    %v3723 = vld [vmem:[#allocation9 + $0x30] sm:$0xff]
    %v3724 = vld [vmem:[#allocation9 + $0x38] sm:$0xff]
    %v3725 = vld [vmem:[#allocation9 + $0x40] sm:$0xff]
    %v3726 = vld [vmem:[#allocation9 + $0x48] sm:$0xff]
    %v3727 = vld [vmem:[#allocation9 + $0x50] sm:$0xff]
    %v3728 = vld [vmem:[#allocation9 + $0x58] sm:$0xff]
    %v3729 = vld [vmem:[#allocation9 + $0x60] sm:$0xff]
    %v3730 = vld [vmem:[#allocation9 + $0x68] sm:$0xff]
    %v3731 = vld [vmem:[#allocation9 + $0x70] sm:$0xff]
    %v3732 = vld [vmem:[#allocation9 + $0x78] sm:$0xff]
    %v3733 = vld [vmem:[#allocation9 + $0x80] sm:$0xff]
    %v3734 = vld [vmem:[#allocation9 + $0x88] sm:$0xff]
    %v3735 = vld [vmem:[#allocation9 + $0x90] sm:$0xff]
    %v3736 = vld [vmem:[#allocation9 + $0x98] sm:$0xff]
    %v3737 = vld [vmem:[#allocation9 + $0xa0] sm:$0xff]
    %v3738 = vld [vmem:[#allocation9 + $0xa8] sm:$0xff]
    %v3739 = vld [vmem:[#allocation9 + $0xb0] sm:$0xff]
    %v3740 = vld [vmem:[#allocation9 + $0xb8] sm:$0xff]
    %v3741 = vld [vmem:[#allocation9 + $0xc0] sm:$0xff]
    %v3742 = vld [vmem:[#allocation9 + $0xc8] sm:$0xff]
    %v3743 = vld [vmem:[#allocation9 + $0xd0] sm:$0xff]
    %v3744 = vld [vmem:[#allocation9 + $0xd8] sm:$0xff]
    %v3745 = vld [vmem:[#allocation9 + $0xe0] sm:$0xff]
    %v3746 = vld [vmem:[#allocation9 + $0xe8] sm:$0xff]
    %v3747 = vld [vmem:[#allocation9 + $0xf0] sm:$0xff]
    %v3748 = vld [vmem:[#allocation9 + $0xf8] sm:$0xff]
    %v3749 = vld [vmem:[#allocation9 + $0x100] sm:$0xff]
    %v3750 = vld [vmem:[#allocation9 + $0x108] sm:$0xff]
    %v3751 = vld [vmem:[#allocation9 + $0x110] sm:$0xff]
    %v3752 = vld [vmem:[#allocation9 + $0x118] sm:$0xff]
    %v3753 = vld [vmem:[#allocation9 + $0x120] sm:$0xff]
    %v3754 = vld [vmem:[#allocation9 + $0x128] sm:$0xff]
    %v3755 = vld [vmem:[#allocation9 + $0x130] sm:$0xff]
    %v3756 = vld [vmem:[#allocation9 + $0x138] sm:$0xff]
    %v3757 = vld [vmem:[#allocation9 + $0x140] sm:$0xff]
    %v3758 = vld [vmem:[#allocation9 + $0x148] sm:$0xff]
    %v3759 = vld [vmem:[#allocation9 + $0x150] sm:$0xff]
    %v3760 = vld [vmem:[#allocation9 + $0x158] sm:$0xff]
    %v3761 = vld [vmem:[#allocation9 + $0x160] sm:$0xff]
    %v3762 = vld [vmem:[#allocation9 + $0x168] sm:$0xff]
    %v3763 = vld [vmem:[#allocation9 + $0x170] sm:$0xff]
    %v3764 = vld [vmem:[#allocation9 + $0x178] sm:$0xff]
    %v3765 = vld [vmem:[#allocation9 + $0x180] sm:$0xff]
    %v3766 = vld [vmem:[#allocation9 + $0x188] sm:$0xff]
    %v3767 = vld [vmem:[#allocation9 + $0x190] sm:$0xff]
    %v3768 = vld [vmem:[#allocation9 + $0x198] sm:$0xff]
    %v3769 = vld [vmem:[#allocation9 + $0x1a0] sm:$0xff]
    %v3770 = vld [vmem:[#allocation9 + $0x1a8] sm:$0xff]
    %v3771 = vld [vmem:[#allocation9 + $0x1b0] sm:$0xff]
    %v3772 = vld [vmem:[#allocation9 + $0x1b8] sm:$0xff]
    %v3773 = vld [vmem:[#allocation9 + $0x1c0] sm:$0xff]
    %v3774 = vld [vmem:[#allocation9 + $0x1c8] sm:$0xff]
    %v3775 = vld [vmem:[#allocation9 + $0x1d0] sm:$0xff]
    %v3776 = vld [vmem:[#allocation9 + $0x1d8] sm:$0xff]
    %v3777 = vld [vmem:[#allocation9 + $0x1e0] sm:$0xff]
    %v3778 = vld [vmem:[#allocation9 + $0x1e8] sm:$0xff]
    %v3779 = vld [vmem:[#allocation9 + $0x1f0] sm:$0xff]
    %v3780 = vld [vmem:[#allocation9 + $0x1f8] sm:$0xff]
    %v3781 = vld [vmem:[#allocation9 + $0x200] sm:$0xff]
    %v3782 = vld [vmem:[#allocation9 + $0x208] sm:$0xff]
    %v3783 = vld [vmem:[#allocation9 + $0x210] sm:$0xff]
    %v3784 = vld [vmem:[#allocation9 + $0x218] sm:$0xff]
    %v3785 = vld [vmem:[#allocation9 + $0x220] sm:$0xff]
    %v3786 = vld [vmem:[#allocation9 + $0x228] sm:$0xff]
    %v3787 = vld [vmem:[#allocation9 + $0x230] sm:$0xff]
    %v3788 = vld [vmem:[#allocation9 + $0x238] sm:$0xff]
    %v3789 = vld [vmem:[#allocation9 + $0x240] sm:$0xff]
    %v3790 = vld [vmem:[#allocation9 + $0x248] sm:$0xff]
    %v3791 = vld [vmem:[#allocation9 + $0x250] sm:$0xff]
    %v3792 = vld [vmem:[#allocation9 + $0x258] sm:$0xff]
    %v3793 = vld [vmem:[#allocation9 + $0x260] sm:$0xff]
    %v3794 = vld [vmem:[#allocation9 + $0x268] sm:$0xff]
    %v3795 = vld [vmem:[#allocation9 + $0x270] sm:$0xff]
    %v3796 = vld [vmem:[#allocation9 + $0x278] sm:$0xff]
    %v3797 = vld [vmem:[#allocation9 + $0x280] sm:$0xff]
    %v3798 = vld [vmem:[#allocation9 + $0x288] sm:$0xff]
    %v3799 = vld [vmem:[#allocation9 + $0x290] sm:$0xff]
    %v3800 = vld [vmem:[#allocation9 + $0x298] sm:$0xff]
    %v3801 = vld [vmem:[#allocation9 + $0x2a0] sm:$0xff]
    %v3802 = vld [vmem:[#allocation9 + $0x2a8] sm:$0xff]
    %v3803 = vld [vmem:[#allocation9 + $0x2b0] sm:$0xff]
    %v3804 = vld [vmem:[#allocation9 + $0x2b8] sm:$0xff]
    %v3805 = vld [vmem:[#allocation9 + $0x2c0] sm:$0xff]
    %v3806 = vld [vmem:[#allocation9 + $0x2c8] sm:$0xff]
    %v3807 = vld [vmem:[#allocation9 + $0x2d0] sm:$0xff]
    %v3808 = vld [vmem:[#allocation9 + $0x2d8] sm:$0xff]
    %v3809 = vld [vmem:[#allocation9 + $0x2e0] sm:$0xff]
    %v3810 = vld [vmem:[#allocation9 + $0x2e8] sm:$0xff]
    %v3811 = vld [vmem:[#allocation9 + $0x2f0] sm:$0xff]
    %v3812 = vld [vmem:[#allocation9 + $0x2f8] sm:$0xff]
    %v3813 = vld [vmem:[#allocation9 + $0x300] sm:$0xff]
    %v3814 = vld [vmem:[#allocation9 + $0x308] sm:$0xff]
    %v3815 = vld [vmem:[#allocation9 + $0x310] sm:$0xff]
    %v3816 = vld [vmem:[#allocation9 + $0x318] sm:$0xff]
    %v3817 = vld [vmem:[#allocation9 + $0x320] sm:$0xff]
    %v3818 = vld [vmem:[#allocation9 + $0x328] sm:$0xff]
    %v3819 = vld [vmem:[#allocation9 + $0x330] sm:$0xff]
    %v3820 = vld [vmem:[#allocation9 + $0x338] sm:$0xff]
    %v3821 = vld [vmem:[#allocation9 + $0x340] sm:$0xff]
    %v3822 = vld [vmem:[#allocation9 + $0x348] sm:$0xff]
    %v3823 = vld [vmem:[#allocation9 + $0x350] sm:$0xff]
    %v3824 = vld [vmem:[#allocation9 + $0x358] sm:$0xff]
    %v3825 = vld [vmem:[#allocation9 + $0x360] sm:$0xff]
    %v3826 = vld [vmem:[#allocation9 + $0x368] sm:$0xff]
    %v3827 = vld [vmem:[#allocation9 + $0x370] sm:$0xff]
    %v3828 = vld [vmem:[#allocation9 + $0x378] sm:$0xff]
    %v3829 = vld [vmem:[#allocation9 + $0x380] sm:$0xff]
    %v3830 = vld [vmem:[#allocation9 + $0x388] sm:$0xff]
    %v3831 = vld [vmem:[#allocation9 + $0x390] sm:$0xff]
    %v3832 = vld [vmem:[#allocation9 + $0x398] sm:$0xff]
    %v3833 = vld [vmem:[#allocation9 + $0x3a0] sm:$0xff]
    %v3834 = vld [vmem:[#allocation9 + $0x3a8] sm:$0xff]
    %v3835 = vld [vmem:[#allocation9 + $0x3b0] sm:$0xff]
    %v3836 = vld [vmem:[#allocation9 + $0x3b8] sm:$0xff]
    %vm3837 = vcmask 523264
    %v3839 = vsel %vm3837, %v3714, 0
    %3841 = vmatprep.subr.mxu0 %v3718
    %3842 = vmatpush1.msra.mxu0 %v3717
    %3843 = vmatprep.subr.mxu0 %v3721
    %3844 = vmatpush1.msra.mxu0 %v3720
    %3845 = vmatprep.subr.mxu0 %v3724
    %3846 = vmatpush1.msra.mxu0 %v3723
    %3847 = vmatprep.subr.mxu0 %v3727
    %3848 = vmatpush1.msra.mxu0 %v3726
    %3849 = vmatprep.subr.mxu0 %v3730
    %3850 = vmatpush1.msra.mxu0 %v3729
    %3851 = vmatprep.subr.mxu0 %v3733
    %3852 = vmatpush1.msra.mxu0 %v3732
    %3853 = vmatprep.subr.mxu0 %v3736
    %3854 = vmatpush1.msra.mxu0 %v3735
    %3855 = vmatprep.subr.mxu0 %v3739
    %3856 = vmatpush1.msra.mxu0 %v3738
    %3857 = vmatprep.subr.mxu0 %v3742
    %3858 = vmatpush1.msra.mxu0 %v3741
    %3859 = vmatprep.subr.mxu0 %v3745
    %3860 = vmatpush1.msra.mxu0 %v3744
    %3861 = vmatprep.subr.mxu0 %v3748
    %3862 = vmatpush1.msra.mxu0 %v3747
    %3863 = vmatprep.subr.mxu0 %v3751
    %3864 = vmatpush1.msra.mxu0 %v3750
    %3865 = vmatprep.subr.mxu0 %v3754
    %3866 = vmatpush1.msra.mxu0 %v3753
    %3867 = vmatprep.subr.mxu0 %v3757
    %3868 = vmatpush1.msra.mxu0 %v3756
    %3869 = vmatprep.subr.mxu0 %v3760
    %3870 = vmatpush1.msra.mxu0 %v3759
    %3871 = vmatprep.subr.mxu0 %v3763
    %3872 = vmatpush1.msra.mxu0 %v3762
    %3873 = vmatprep.subr.mxu0 %v3766
    %3874 = vmatpush1.msra.mxu0 %v3765
    %3875 = vmatprep.subr.mxu0 %v3769
    %3876 = vmatpush1.msra.mxu0 %v3768
    %3877 = vmatprep.subr.mxu0 %v3772
    %3878 = vmatpush1.msra.mxu0 %v3771
    %3879 = vmatprep.subr.mxu0 %v3775
    %3880 = vmatpush1.msra.mxu0 %v3774
    %3881 = vmatprep.subr.mxu0 %v3778
    %3882 = vmatpush1.msra.mxu0 %v3777
    %3883 = vmatprep.subr.mxu0 %v3781
    %3884 = vmatpush1.msra.mxu0 %v3780
    %3885 = vmatprep.subr.mxu0 %v3784
    %3886 = vmatpush1.msra.mxu0 %v3783
    %3887 = vmatprep.subr.mxu0 %v3787
    %3888 = vmatpush1.msra.mxu0 %v3786
    %3889 = vmatprep.subr.mxu0 %v3790
    %3890 = vmatpush1.msra.mxu0 %v3789
    %3891 = vmatprep.subr.mxu0 %v3793
    %3892 = vmatpush1.msra.mxu0 %v3792
    %3893 = vmatprep.subr.mxu0 %v3796
    %3894 = vmatpush1.msra.mxu0 %v3795
    %3895 = vmatprep.subr.mxu0 %v3799
    %3896 = vmatpush1.msra.mxu0 %v3798
    %3897 = vmatprep.subr.mxu0 %v3802
    %3898 = vmatpush1.msra.mxu0 %v3801
    %3899 = vmatprep.subr.mxu0 %v3805
    %3900 = vmatpush1.msra.mxu0 %v3804
    %3901 = vmatprep.subr.mxu0 %v3808
    %3902 = vmatpush1.msra.mxu0 %v3807
    %3903 = vmatprep.subr.mxu0 %v3811
    %3904 = vmatpush1.msra.mxu0 %v3810
    %3905 = vmatprep.mubr.f32.mxu0 %v3645
    %3906 = vmatmul.mubr.f32.gmra.mrb[0].mxu0 %v3643
    %v3907 = vpop.f32.mrb[0].mxu0
    %v3908 = vadd.f32 0.0, %v3907
    %v3909 = vpop.f32.mrb[0].mxu0
    %v3910 = vadd.f32 0.0, %v3909
    %3911 = vdwg.mxu0
    %3912 = vmatprep.subr.mxu0 %v3814
    %3913 = vmatpush1.msra.mxu0 %v3813
    %3914 = vmatprep.subr.mxu0 %v3817
    %3915 = vmatpush1.msra.mxu0 %v3816
    %3916 = vmatprep.subr.mxu0 %v3820
    %3917 = vmatpush1.msra.mxu0 %v3819
    %3918 = vmatprep.subr.mxu0 %v3823
    %3919 = vmatpush1.msra.mxu0 %v3822
    %3920 = vmatprep.subr.mxu0 %v3826
    %3921 = vmatpush1.msra.mxu0 %v3825
    %3922 = vmatprep.subr.mxu0 %v3829
    %3923 = vmatpush1.msra.mxu0 %v3828
    %3924 = vmatprep.subr.mxu0 %v3832
    %3925 = vmatpush1.msra.mxu0 %v3831
    %3926 = vmatprep.subr.mxu0 %v3835
    %3927 = vmatpush1.msra.mxu0 %v3834
    %3928 = vmatprep.subr.mxu0 0.0
    %3929 = vmatpush1.msra.mxu0 0.0
    %3930 = vmatprep.subr.mxu0 0.0
    %3931 = vmatpush1.msra.mxu0 0.0
    %3932 = vmatprep.subr.mxu0 0.0
    %3933 = vmatpush1.msra.mxu0 0.0
    %3934 = vmatprep.subr.mxu0 0.0
    %3935 = vmatpush1.msra.mxu0 0.0
    %3936 = vmatprep.subr.mxu0 0.0
    %3937 = vmatpush1.msra.mxu0 0.0
    %3938 = vmatprep.subr.mxu0 0.0
    %3939 = vmatpush1.msra.mxu0 0.0
    %3940 = vmatprep.subr.mxu0 0.0
    %3941 = vmatpush1.msra.mxu0 0.0
    %3942 = vmatprep.subr.mxu0 0.0
    %3943 = vmatpush1.msra.mxu0 0.0
    %3944 = vmatprep.subr.mxu0 0.0
    %3945 = vmatpush1.msra.mxu0 0.0
    %3946 = vmatprep.subr.mxu0 0.0
    %3947 = vmatpush1.msra.mxu0 0.0
    %3948 = vmatprep.subr.mxu0 0.0
    %3949 = vmatpush1.msra.mxu0 0.0
    %3950 = vmatprep.subr.mxu0 0.0
    %3951 = vmatpush1.msra.mxu0 0.0
    %3952 = vmatprep.subr.mxu0 0.0
    %3953 = vmatpush1.msra.mxu0 0.0
    %3954 = vmatprep.subr.mxu0 0.0
    %3955 = vmatpush1.msra.mxu0 0.0
    %3956 = vmatprep.subr.mxu0 0.0
    %3957 = vmatpush1.msra.mxu0 0.0
    %3958 = vmatprep.subr.mxu0 0.0
    %3959 = vmatpush1.msra.mxu0 0.0
    %3960 = vmatprep.subr.mxu0 0.0
    %3961 = vmatpush1.msra.mxu0 0.0
    %3962 = vmatprep.subr.mxu0 0.0
    %3963 = vmatpush1.msra.mxu0 0.0
    %3964 = vmatprep.subr.mxu0 0.0
    %3965 = vmatpush1.msra.mxu0 0.0
    %3966 = vmatprep.subr.mxu0 0.0
    %3967 = vmatpush1.msra.mxu0 0.0
    %3968 = vmatprep.subr.mxu0 0.0
    %3969 = vmatpush1.msra.mxu0 0.0
    %3970 = vmatprep.subr.mxu0 0.0
    %3971 = vmatpush1.msra.mxu0 0.0
    %3972 = vmatprep.subr.mxu0 0.0
    %3973 = vmatpush1.msra.mxu0 0.0
    %3974 = vmatprep.subr.mxu0 0.0
    %3975 = vmatpush1.msra.mxu0 0.0
    %3976 = vmatprep.mubr.f32.mxu0 0.0
    %3977 = vmatmul.mubr.f32.gmra.mrb[0].mxu0 %v3839
    %v3978 = vpop.f32.mrb[0].mxu0
    %v3979 = vadd.f32 %v3908, %v3978
    %v3980 = vpop.f32.mrb[0].mxu0
    %v3981 = vadd.f32 %v3910, %v3980
    %3982 = vdwg.mxu0
    %3983 = vmatprep.subr.mxu0 0.0
    %3984 = vmatpush1.msra.mxu0 %v3719
    %3985 = vmatprep.subr.mxu0 0.0
    %3986 = vmatpush1.msra.mxu0 %v3722
    %3987 = vmatprep.subr.mxu0 0.0
    %3988 = vmatpush1.msra.mxu0 %v3725
    %3989 = vmatprep.subr.mxu0 0.0
    %3990 = vmatpush1.msra.mxu0 %v3728
    %3991 = vmatprep.subr.mxu0 0.0
    %3992 = vmatpush1.msra.mxu0 %v3731
    %3993 = vmatprep.subr.mxu0 0.0
    %3994 = vmatpush1.msra.mxu0 %v3734
    %3995 = vmatprep.subr.mxu0 0.0
    %3996 = vmatpush1.msra.mxu0 %v3737
    %3997 = vmatprep.subr.mxu0 0.0
    %3998 = vmatpush1.msra.mxu0 %v3740
    %3999 = vmatprep.subr.mxu0 0.0
    %4000 = vmatpush1.msra.mxu0 %v3743
    %4001 = vmatprep.subr.mxu0 0.0
    %4002 = vmatpush1.msra.mxu0 %v3746
    %4003 = vmatprep.subr.mxu0 0.0
    %4004 = vmatpush1.msra.mxu0 %v3749
    %4005 = vmatprep.subr.mxu0 0.0
    %4006 = vmatpush1.msra.mxu0 %v3752
    %4007 = vmatprep.subr.mxu0 0.0
    %4008 = vmatpush1.msra.mxu0 %v3755
    %4009 = vmatprep.subr.mxu0 0.0
    %4010 = vmatpush1.msra.mxu0 %v3758
    %4011 = vmatprep.subr.mxu0 0.0
    %4012 = vmatpush1.msra.mxu0 %v3761
    %4013 = vmatprep.subr.mxu0 0.0
    %4014 = vmatpush1.msra.mxu0 %v3764
    %4015 = vmatprep.subr.mxu0 0.0
    %4016 = vmatpush1.msra.mxu0 %v3767
    %4017 = vmatprep.subr.mxu0 0.0
    %4018 = vmatpush1.msra.mxu0 %v3770
    %4019 = vmatprep.subr.mxu0 0.0
    %4020 = vmatpush1.msra.mxu0 %v3773
    %4021 = vmatprep.subr.mxu0 0.0
    %4022 = vmatpush1.msra.mxu0 %v3776
    %4023 = vmatprep.subr.mxu0 0.0
    %4024 = vmatpush1.msra.mxu0 %v3779
    %4025 = vmatprep.subr.mxu0 0.0
    %4026 = vmatpush1.msra.mxu0 %v3782
    %4027 = vmatprep.subr.mxu0 0.0
    %4028 = vmatpush1.msra.mxu0 %v3785
    %4029 = vmatprep.subr.mxu0 0.0
    %4030 = vmatpush1.msra.mxu0 %v3788
    %4031 = vmatprep.subr.mxu0 0.0
    %4032 = vmatpush1.msra.mxu0 %v3791
    %4033 = vmatprep.subr.mxu0 0.0
    %4034 = vmatpush1.msra.mxu0 %v3794
    %4035 = vmatprep.subr.mxu0 0.0
    %4036 = vmatpush1.msra.mxu0 %v3797
    %4037 = vmatprep.subr.mxu0 0.0
    %4038 = vmatpush1.msra.mxu0 %v3800
    %4039 = vmatprep.subr.mxu0 0.0
    %4040 = vmatpush1.msra.mxu0 %v3803
    %4041 = vmatprep.subr.mxu0 0.0
    %4042 = vmatpush1.msra.mxu0 %v3806
    %4043 = vmatprep.subr.mxu0 0.0
    %4044 = vmatpush1.msra.mxu0 %v3809
    %4045 = vmatprep.subr.mxu0 0.0
    %4046 = vmatpush1.msra.mxu0 %v3812
    %4047 = vmatprep.mubr.f32.mxu0 %v3645
    %4048 = vmatmul.mubr.f32.gmra.mrb[0].mxu0 %v3643
    %v4049 = vpop.f32.mrb[0].mxu0
    %v4050 = vadd.f32 0.0, %v4049
    %v4051 = vpop.f32.mrb[0].mxu0
    %4052 = vdwg.mxu0
    %4053 = vmatprep.subr.mxu0 0.0
    %4054 = vmatpush1.msra.mxu0 %v3815
    %4055 = vmatprep.subr.mxu0 0.0
    %4056 = vmatpush1.msra.mxu0 %v3818
    %4057 = vmatprep.subr.mxu0 0.0
    %4058 = vmatpush1.msra.mxu0 %v3821
    %4059 = vmatprep.subr.mxu0 0.0
    %4060 = vmatpush1.msra.mxu0 %v3824
    %4061 = vmatprep.subr.mxu0 0.0
    %4062 = vmatpush1.msra.mxu0 %v3827
    %4063 = vmatprep.subr.mxu0 0.0
    %4064 = vmatpush1.msra.mxu0 %v3830
    %4065 = vmatprep.subr.mxu0 0.0
    %4066 = vmatpush1.msra.mxu0 %v3833
    %4067 = vmatprep.subr.mxu0 0.0
    %4068 = vmatpush1.msra.mxu0 %v3836
    %4069 = vmatprep.subr.mxu0 0.0
    %4070 = vmatpush1.msra.mxu0 0.0
    %4071 = vmatprep.subr.mxu0 0.0
    %4072 = vmatpush1.msra.mxu0 0.0
    %4073 = vmatprep.subr.mxu0 0.0
    %4074 = vmatpush1.msra.mxu0 0.0
    %4075 = vmatprep.subr.mxu0 0.0
    %4076 = vmatpush1.msra.mxu0 0.0
    %4077 = vmatprep.subr.mxu0 0.0
    %4078 = vmatpush1.msra.mxu0 0.0
    %4079 = vmatprep.subr.mxu0 0.0
    %4080 = vmatpush1.msra.mxu0 0.0
    %4081 = vmatprep.subr.mxu0 0.0
    %4082 = vmatpush1.msra.mxu0 0.0
    %4083 = vmatprep.subr.mxu0 0.0
    %4084 = vmatpush1.msra.mxu0 0.0
    %4085 = vmatprep.subr.mxu0 0.0
    %4086 = vmatpush1.msra.mxu0 0.0
    %4087 = vmatprep.subr.mxu0 0.0
    %4088 = vmatpush1.msra.mxu0 0.0
    %4089 = vmatprep.subr.mxu0 0.0
    %4090 = vmatpush1.msra.mxu0 0.0
    %4091 = vmatprep.subr.mxu0 0.0
    %4092 = vmatpush1.msra.mxu0 0.0
    %4093 = vmatprep.subr.mxu0 0.0
    %4094 = vmatpush1.msra.mxu0 0.0
    %4095 = vmatprep.subr.mxu0 0.0
    %4096 = vmatpush1.msra.mxu0 0.0
    %4097 = vmatprep.subr.mxu0 0.0
    %4098 = vmatpush1.msra.mxu0 0.0
    %4099 = vmatprep.subr.mxu0 0.0
    %4100 = vmatpush1.msra.mxu0 0.0
    %4101 = vmatprep.subr.mxu0 0.0
    %4102 = vmatpush1.msra.mxu0 0.0
    %4103 = vmatprep.subr.mxu0 0.0
    %4104 = vmatpush1.msra.mxu0 0.0
    %4105 = vmatprep.subr.mxu0 0.0
    %4106 = vmatpush1.msra.mxu0 0.0
    %4107 = vmatprep.subr.mxu0 0.0
    %4108 = vmatpush1.msra.mxu0 0.0
    %4109 = vmatprep.subr.mxu0 0.0
    %4110 = vmatpush1.msra.mxu0 0.0
    %4111 = vmatprep.subr.mxu0 0.0
    %4112 = vmatpush1.msra.mxu0 0.0
    %4113 = vmatprep.subr.mxu0 0.0
    %4114 = vmatpush1.msra.mxu0 0.0
    %4115 = vmatprep.subr.mxu0 0.0
    %4116 = vmatpush1.msra.mxu0 0.0
    %4117 = vmatprep.mubr.f32.mxu0 0.0
    %4118 = vmatmul.mubr.f32.gmra.mrb[0].mxu0 %v3839
    %v4119 = vpop.f32.mrb[0].mxu0
    %v4120 = vadd.f32 %v4050, %v4119
    %v4121 = vpop.f32.mrb[0].mxu0
    %4122 = vdwg.mxu0
    %4125 = vrot.lane.b32.xlu0 %v3979, 48
    %v4126 = vpop.permute.xlu0 %4125
    %4127 = vrot.lane.b32.xlu0 %v3981, 48
    %v4128 = vpop.permute.xlu0 %4127
    %vm4129 = vcmask 392192
    %v4130 = vsel %vm4129, %v4126, %v4128
    %v4132 = vmax.f32 %v3979, %v4130
    %4134 = vrot.lane.b32.xlu0 %v4120, 48
    %v4135 = vpop.permute.xlu0 %4134
    %v4136 = vsel %vm4129, %v4128, %v4135
    %v4138 = vmax.f32 %v3981, %v4136
    %4140 = vrot.lane.b32.xlu0 %v4138, 96
    %v4141 = vpop.permute.xlu0 %4140
    %v4143 = vmax.f32 %v4132, %v4141
    %v4144 = vmax.f32 %v4143, 0.0
    %v4145 = vld [vmem:[#allocation10] sm:$0xff]
    %v4146 = vld [vmem:[#allocation10 + $0x8] sm:$0xff]
    %v4147 = vld [vmem:[#allocation10 + $0x10] sm:$0xff]
    %v4148 = vld [vmem:[#allocation10 + $0x18] sm:$0xff]
    %v4149 = vld [vmem:[#allocation10 + $0x20] sm:$0xff]
    %v4150 = vld [vmem:[#allocation10 + $0x28] sm:$0xff]
    %v4151 = vld [vmem:[#allocation10 + $0x30] sm:$0xff]
    %v4152 = vld [vmem:[#allocation10 + $0x38] sm:$0xff]
    %v4153 = vld [vmem:[#allocation10 + $0x40] sm:$0xff]
    %v4154 = vld [vmem:[#allocation10 + $0x48] sm:$0xff]
    %v4155 = vld [vmem:[#allocation10 + $0x50] sm:$0xff]
    %v4156 = vld [vmem:[#allocation10 + $0x58] sm:$0xff]
    %v4157 = vld [vmem:[#allocation10 + $0x60] sm:$0xff]
    %v4158 = vld [vmem:[#allocation10 + $0x68] sm:$0xff]
    %v4159 = vld [vmem:[#allocation10 + $0x70] sm:$0xff]
    %v4160 = vld [vmem:[#allocation10 + $0x78] sm:$0xff]
    %v4161 = vld [vmem:[#allocation10 + $0x80] sm:$0xff]
    %v4162 = vld [vmem:[#allocation10 + $0x88] sm:$0xff]
    %v4163 = vld [vmem:[#allocation10 + $0x90] sm:$0xff]
    %v4164 = vld [vmem:[#allocation10 + $0x98] sm:$0xff]
    %v4165 = vld [vmem:[#allocation12] sm:$0x3]
    %v4167 = vlaneseq
    %v4168 = vshrl.u32 %v4167, 7
    %v4169 = vsub.s32 0, %v4168
    %v4170 = vrot.slane %v4165, %v4169
    %v4171 = vlaneseq
    %v4172 = vshrl.u32 %v4171, 7
    %v4173 = vsub.s32 1, %v4172
    %v4174 = vrot.slane %v4165, %v4173
    %vm4177 = vcmask 654336
    %v4179 = vsel %vm4177, %v4144, 0
    %4181 = vmatprep.subr.mxu0 %v4146
    %4182 = vmatpush1.msra.mxu0 %v4145
    %4183 = vmatprep.subr.mxu0 %v4148
    %4184 = vmatpush1.msra.mxu0 %v4147
    %4185 = vmatprep.subr.mxu0 %v4150
    %4186 = vmatpush1.msra.mxu0 %v4149
    %4187 = vmatprep.subr.mxu0 %v4152
    %4188 = vmatpush1.msra.mxu0 %v4151
    %4189 = vmatprep.subr.mxu0 %v4154
    %4190 = vmatpush1.msra.mxu0 %v4153
    %4191 = vmatprep.subr.mxu0 %v4156
    %4192 = vmatpush1.msra.mxu0 %v4155
    %4193 = vmatprep.subr.mxu0 %v4158
    %4194 = vmatpush1.msra.mxu0 %v4157
    %4195 = vmatprep.subr.mxu0 %v4160
    %4196 = vmatpush1.msra.mxu0 %v4159
    %4197 = vmatprep.subr.mxu0 %v4162
    %4198 = vmatpush1.msra.mxu0 %v4161
    %4199 = vmatprep.subr.mxu0 %v4164
    %4200 = vmatpush1.msra.mxu0 %v4163
    %4201 = vmatprep.subr.mxu0 0.0
    %4202 = vmatpush1.msra.mxu0 0.0
    %4203 = vmatprep.subr.mxu0 0.0
    %4204 = vmatpush1.msra.mxu0 0.0
    %4205 = vmatprep.subr.mxu0 0.0
    %4206 = vmatpush1.msra.mxu0 0.0
    %4207 = vmatprep.subr.mxu0 0.0
    %4208 = vmatpush1.msra.mxu0 0.0
    %4209 = vmatprep.subr.mxu0 0.0
    %4210 = vmatpush1.msra.mxu0 0.0
    %4211 = vmatprep.subr.mxu0 0.0
    %4212 = vmatpush1.msra.mxu0 0.0
    %4213 = vmatprep.subr.mxu0 0.0
    %4214 = vmatpush1.msra.mxu0 0.0
    %4215 = vmatprep.subr.mxu0 0.0
    %4216 = vmatpush1.msra.mxu0 0.0
    %4217 = vmatprep.subr.mxu0 0.0
    %4218 = vmatpush1.msra.mxu0 0.0
    %4219 = vmatprep.subr.mxu0 0.0
    %4220 = vmatpush1.msra.mxu0 0.0
    %4221 = vmatprep.subr.mxu0 0.0
    %4222 = vmatpush1.msra.mxu0 0.0
    %4223 = vmatprep.subr.mxu0 0.0
    %4224 = vmatpush1.msra.mxu0 0.0
    %4225 = vmatprep.subr.mxu0 0.0
    %4226 = vmatpush1.msra.mxu0 0.0
    %4227 = vmatprep.subr.mxu0 0.0
    %4228 = vmatpush1.msra.mxu0 0.0
    %4229 = vmatprep.subr.mxu0 0.0
    %4230 = vmatpush1.msra.mxu0 0.0
    %4231 = vmatprep.subr.mxu0 0.0
    %4232 = vmatpush1.msra.mxu0 0.0
    %4233 = vmatprep.subr.mxu0 0.0
    %4234 = vmatpush1.msra.mxu0 0.0
    %4235 = vmatprep.subr.mxu0 0.0
    %4236 = vmatpush1.msra.mxu0 0.0
    %4237 = vmatprep.subr.mxu0 0.0
    %4238 = vmatpush1.msra.mxu0 0.0
    %4239 = vmatprep.subr.mxu0 0.0
    %4240 = vmatpush1.msra.mxu0 0.0
    %4241 = vmatprep.subr.mxu0 0.0
    %4242 = vmatpush1.msra.mxu0 0.0
    %4243 = vmatprep.subr.mxu0 0.0
    %4244 = vmatpush1.msra.mxu0 0.0
    %4245 = vmatprep.mubr.f32.mxu0 0.0
    %4246 = vmatmul.mubr.f32.gmra.mrb[0].mxu0 %v4179
    %v4247 = vpop.f32.mrb[0].mxu0
    %v4248 = vadd.f32 %v4170, %v4247
    %v4249 = vpop.f32.mrb[0].mxu0
    %v4250 = vadd.f32 %v4174, %v4249
    %4251 = vdwg.mxu0
    %v4252 = vmax.f32 %v4248, 0.0
    %v4253 = vmax.f32 %v4250, 0.0
    %v4254 = vld [vmem:[%s9] sm:$0xff]
    %v4255 = vld [vmem:[%s9 + $0x8] sm:$0xff]
    %v4256 = vld [vmem:[%s9 + $0x10] sm:$0xff]
    %v4257 = vld [vmem:[%s9 + $0x18] sm:$0xff]
    %v4258 = vld [vmem:[%s9 + $0x20] sm:$0xff]
    %v4259 = vld [vmem:[%s9 + $0x28] sm:$0xff]
    %v4260 = vld [vmem:[%s9 + $0x30] sm:$0xff]
    %v4261 = vld [vmem:[%s9 + $0x38] sm:$0xff]
    %v4262 = vld [vmem:[%s9 + $0x40] sm:$0xff]
    %v4263 = vld [vmem:[%s9 + $0x48] sm:$0xff]
    %v4264 = vld [vmem:[%s9 + $0x50] sm:$0xff]
    %v4265 = vld [vmem:[%s9 + $0x58] sm:$0xff]
    %v4266 = vld [vmem:[%s9 + $0x60] sm:$0xff]
    %v4267 = vld [vmem:[%s9 + $0x68] sm:$0xff]
    %v4268 = vld [vmem:[%s9 + $0x70] sm:$0xff]
    %v4269 = vld [vmem:[%s9 + $0x78] sm:$0xff]
    %v4270 = vld [vmem:[%s9 + $0x80] sm:$0xff]
    %v4271 = vld [vmem:[%s9 + $0x88] sm:$0xff]
    %v4272 = vld [vmem:[%s9 + $0x90] sm:$0xff]
    %v4273 = vld [vmem:[%s9 + $0x98] sm:$0xff]
    %v4274 = vld [vmem:[%s9 + $0xa0] sm:$0xff]
    %v4275 = vld [vmem:[%s9 + $0xa8] sm:$0xff]
    %v4276 = vld [vmem:[%s9 + $0xb0] sm:$0xff]
    %v4277 = vld [vmem:[%s9 + $0xb8] sm:$0xff]
    %v4278 = vld [vmem:[%s9 + $0xc0] sm:$0xff]
    %v4279 = vld [vmem:[#allocation13] sm:$0x1]
    %v4281 = vlaneseq
    %v4282 = vshrl.u32 %v4281, 7
    %v4283 = vsub.s32 0, %v4282
    %v4284 = vrot.slane %v4279, %v4283
    %vm4286 = vcmask 588800
    %v4288 = vsel %vm4286, %v4253, 0
    %4290 = vmatprep.subr.mxu0 0.0
    %4291 = vmatpush1.msra.mxu0 %v4254
    %4292 = vmatprep.subr.mxu0 0.0
    %4293 = vmatpush1.msra.mxu0 %v4255
    %4294 = vmatprep.subr.mxu0 0.0
    %4295 = vmatpush1.msra.mxu0 %v4256
    %4296 = vmatprep.subr.mxu0 0.0
    %4297 = vmatpush1.msra.mxu0 %v4257
    %4298 = vmatprep.subr.mxu0 0.0
    %4299 = vmatpush1.msra.mxu0 %v4258
    %4300 = vmatprep.subr.mxu0 0.0
    %4301 = vmatpush1.msra.mxu0 %v4259
    %4302 = vmatprep.subr.mxu0 0.0
    %4303 = vmatpush1.msra.mxu0 %v4260
    %4304 = vmatprep.subr.mxu0 0.0
    %4305 = vmatpush1.msra.mxu0 %v4261
    %4306 = vmatprep.subr.mxu0 0.0
    %4307 = vmatpush1.msra.mxu0 %v4262
    %4308 = vmatprep.subr.mxu0 0.0
    %4309 = vmatpush1.msra.mxu0 %v4263
    %4310 = vmatprep.subr.mxu0 0.0
    %4311 = vmatpush1.msra.mxu0 %v4264
    %4312 = vmatprep.subr.mxu0 0.0
    %4313 = vmatpush1.msra.mxu0 %v4265
    %4314 = vmatprep.subr.mxu0 0.0
    %4315 = vmatpush1.msra.mxu0 %v4266
    %4316 = vmatprep.subr.mxu0 0.0
    %4317 = vmatpush1.msra.mxu0 %v4267
    %4318 = vmatprep.subr.mxu0 0.0
    %4319 = vmatpush1.msra.mxu0 %v4268
    %4320 = vmatprep.subr.mxu0 0.0
    %4321 = vmatpush1.msra.mxu0 %v4269
    %4322 = vmatprep.subr.mxu0 0.0
    %4323 = vmatpush1.msra.mxu0 %v4270
    %4324 = vmatprep.subr.mxu0 0.0
    %4325 = vmatpush1.msra.mxu0 %v4271
    %4326 = vmatprep.subr.mxu0 0.0
    %4327 = vmatpush1.msra.mxu0 %v4272
    %4328 = vmatprep.subr.mxu0 0.0
    %4329 = vmatpush1.msra.mxu0 %v4273
    %4330 = vmatprep.subr.mxu0 0.0
    %4331 = vmatpush1.msra.mxu0 %v4274
    %4332 = vmatprep.subr.mxu0 0.0
    %4333 = vmatpush1.msra.mxu0 %v4275
    %4334 = vmatprep.subr.mxu0 0.0
    %4335 = vmatpush1.msra.mxu0 %v4276
    %4336 = vmatprep.subr.mxu0 0.0
    %4337 = vmatpush1.msra.mxu0 %v4277
    %4338 = vmatprep.subr.mxu0 0.0
    %4339 = vmatpush1.msra.mxu0 %v4278
    %4340 = vmatprep.subr.mxu0 0.0
    %4341 = vmatpush1.msra.mxu0 0.0
    %4342 = vmatprep.subr.mxu0 0.0
    %4343 = vmatpush1.msra.mxu0 0.0
    %4344 = vmatprep.subr.mxu0 0.0
    %4345 = vmatpush1.msra.mxu0 0.0
    %4346 = vmatprep.subr.mxu0 0.0
    %4347 = vmatpush1.msra.mxu0 0.0
    %4348 = vmatprep.subr.mxu0 0.0
    %4349 = vmatpush1.msra.mxu0 0.0
    %4350 = vmatprep.subr.mxu0 0.0
    %4351 = vmatpush1.msra.mxu0 0.0
    %4352 = vmatprep.subr.mxu0 0.0
    %4353 = vmatpush1.msra.mxu0 0.0
    %4354 = vmatprep.mubr.f32.mxu0 %v4288
    %4355 = vmatmul.mubr.f32.gmra.mrb[0].mxu0 %v4252
    %v4356 = vpop.f32.mrb[0].mxu0
    %v4357 = vadd.f32 %v4284, %v4356
    %v4358 = vpop.f32.mrb[0].mxu0
    %4359 = vdwg.mxu0
    %vm4360 = vcmask 80896
    %v4361 = vsel %vm4360, %v4357, -inf
    %4362 = vmax.xlane.f32.xlu0 %v4361
    %v4363 = vpop.xlane.xlu0 %4362
    %v4364 = vsub.f32 %v4357, %v4363
    %v4365 = vmul.f32 %v4364, 1.442695
    %v4366 = vpow.pop %v4365
    %v4367 = vsel %vm4360, %v4366, 0.0
    %4368 = vadd.xlane.f32.xlu0 %v4367
    %v4369 = vpop.xlane.xlu0 %4368
    %v4370 = vlog2.pop %v4369
    %v4371 = vmul.f32 %v4370, 0.6931472
    %v4372 = vsub.f32 %v4364, %v4371
    %vm4373 = vcmask 162896
    %v4374 = vsel %vm4373, %v4357, -inf
    %4375 = vmax.xlane.f32.xlu0 %v4374
    %v4376 = vpop.xlane.xlu0 %4375
    %v4377 = vsub.f32 %v4357, %v4376
    %v4378 = vmul.f32 %v4377, 1.442695
    %v4379 = vpow.pop %v4378
    %4381 = vrot.lane.b32.xlu0 %v4379, 118
    %v4382 = vpop.permute.xlu0 %4381
    %v4384 = vsel %vm4360, %v4382, 0.0
    %4385 = vadd.xlane.f32.xlu0 %v4384
    %v4386 = vpop.xlane.xlu0 %4385
    %v4387 = vlog2.pop %v4386
    %v4388 = vmul.f32 %v4387, 0.6931472
    %v4389 = vsub.f32 %v4377, %v4388
    %vm4390 = vcmask 244896
    %v4391 = vsel %vm4390, %v4357, -inf
    %4392 = vmax.xlane.f32.xlu0 %v4391
    %v4393 = vpop.xlane.xlu0 %4392
    %v4394 = vsub.f32 %v4357, %v4393
    %v4395 = vmul.f32 %v4394, 1.442695
    %v4396 = vpow.pop %v4395
    %4398 = vrot.lane.b32.xlu0 %v4396, 108
    %v4399 = vpop.permute.xlu0 %4398
    %v4401 = vsel %vm4360, %v4399, 0.0
    %4402 = vadd.xlane.f32.xlu0 %v4401
    %v4403 = vpop.xlane.xlu0 %4402
    %v4404 = vlog2.pop %v4403
    %v4405 = vmul.f32 %v4404, 0.6931472
    %v4406 = vsub.f32 %v4394, %v4405
    %vm4407 = vcmask 326896
    %v4408 = vsel %vm4407, %v4357, -inf
    %4409 = vmax.xlane.f32.xlu0 %v4408
    %v4410 = vpop.xlane.xlu0 %4409
    %v4411 = vsub.f32 %v4357, %v4410
    %v4412 = vmul.f32 %v4411, 1.442695
    %v4413 = vpow.pop %v4412
    %4415 = vrot.lane.b32.xlu0 %v4413, 98
    %v4416 = vpop.permute.xlu0 %4415
    %v4418 = vsel %vm4360, %v4416, 0.0
    %4419 = vadd.xlane.f32.xlu0 %v4418
    %v4420 = vpop.xlane.xlu0 %4419
    %v4421 = vlog2.pop %v4420
    %v4422 = vmul.f32 %v4421, 0.6931472
    %v4423 = vsub.f32 %v4411, %v4422
    %v4424 = vsel %vm4360, %v4372, %v4389
    %vm4425 = vcmask 162816
    %v4426 = vsel %vm4425, %v4424, %v4406
    %vm4427 = vcmask 244736
    %v4428 = vsel %vm4427, %v4426, %v4423
    %vm4429 = vcmask 326656
    %4430 = vst.msk [vmem:[%s11] sm:$0xff] %vm4429, %v4428
    // Predicated region
    $region78: #{mnist_forward.1} parent=1 // pred_check
      _
    $region79: #{mnist_forward.1} parent=1 // pred_check_branch
      %4432 = sbr.rel (0) target = $region81
    $region80: #{mnist_forward.1} parent=1 // pred_region
      _
    $region81: #{mnist_forward.1} parent=1 // pred_fallthru
      _
    // Predicated region
    $region82: #{mnist_forward.1} parent=1 // pred_check
      _
    $region83: #{mnist_forward.1} parent=1 // pred_check_branch
      %4434 = sbr.rel (0) target = $region85
    $region84: #{mnist_forward.1} parent=1 // pred_region
      _
    $region85: #{mnist_forward.1} parent=1 // pred_fallthru
      _
    %4435 = vsyncpa [#allocation3], 1
    %4436 = vsyncpa [#allocation5], 1
    %4437 = vsyncpa [#allocation8], 1
    %4438 = vsyncpa [#allocation11], 1
    %4439 = vsyncpa [#allocation14], 1

</llo_original>
